<compile_context>
chip_gen: v7x
topology: tpu7x:2x2x1
jax: 0.10.0
libtpu: 0.0.40
codegen_flags: <defaults>
</compile_context>

<pallas_src>
import jax
import jax.numpy as jnp
from jax.experimental import pallas as pl
from jax.experimental.pallas import tpu as pltpu


# --------------------------------------------------------------------------- #
# Kernels
# --------------------------------------------------------------------------- #
def _deconv2x2_relu_kernel(xm_ref, xh_ref, w_ref, b_ref, out_ref):
    """Polyphase ConvTranspose2d(k=4, s=2, p=1) + ReLU for one (batch, row-tile).

    xm_ref : (1, TH, W+2, Cin)   rows [t*TH, t*TH+TH) of the 1-padded input
    xh_ref : (1, 2,  W+2, Cin)   2-row halo just below the tile
    w_ref  : (4, 4*Cin, Cmid)    per-phase weights, 2x2 taps folded into contraction
    b_ref  : (1, Cmid)
    out_ref: (1, TH*W, 4*Cmid)   phase-packed, pixel-major output slab
    """
    TH = xm_ref.shape[1]
    W = xm_ref.shape[2] - 2
    cin = xm_ref.shape[3]

    # Tile rows + halo rows of the padded input.
    xw = jnp.concatenate([xm_ref[0], xh_ref[0]], axis=0)            # (TH+2, W+2, Cin)

    # The 4 phases together read a 3x3 tap neighbourhood; build the 9 shifted
    # views once (im2col in VMEM) and reuse them across phases.
    taps = [[xw[r:r + TH, c:c + W, :].reshape(TH * W, cin) for c in range(3)]
            for r in range(3)]

    outs = []
    for p in range(4):                                              # phase (ph, pw)
        ph, pw = divmod(p, 2)
        patch = jnp.concatenate(
            [taps[ph + dh][pw + dw] for dh in range(2) for dw in range(2)],
            axis=-1)                                                # (TH*W, 4*Cin)
        acc = jnp.dot(patch, w_ref[p], preferred_element_type=jnp.float32)
        outs.append(jnp.maximum(acc + b_ref[...], 0.0))             # bias + ReLU
    # Single contiguous store per tile, no in-kernel relayout reshape.
    out_ref[0] = jnp.concatenate(outs, axis=-1).astype(out_ref.dtype)


def _conv3x3_bn_relu_kernel(am_ref, ah_ref, bm_ref, bh_ref,
                            w1_ref, w2_ref, bias_ref, out_ref):
    """3x3 conv (s=1, p=1) over concat([a, b], channels) + folded BN + ReLU.

    am/ah : (1, TH, Wo+2, Cmid) / (1, 2, Wo+2, Cmid)  deconv branch (padded)
    bm/bh : same shapes                                skip branch (padded)
    w1/w2 : (9*Cmid, Cout)  BN-folded weights for each branch (taps folded)
    bias  : (1, Cout)       BN-folded bias
    out   : (1, TH*Wo, Cout)
    """
    TH = am_ref.shape[1]
    Wo = am_ref.shape[2] - 2
    c = am_ref.shape[3]

    def im2col(m_ref, h_ref):
        xw = jnp.concatenate([m_ref[0], h_ref[0]], axis=0)          # (TH+2, Wo+2, C)
        cols = [xw[r:r + TH, s:s + Wo, :].reshape(TH * Wo, c)
                for r in range(3) for s in range(3)]
        return jnp.concatenate(cols, axis=-1)                       # (TH*Wo, 9*C)

    # torch.cat along channels == sum of two matmuls with split weights.
    acc = jnp.dot(im2col(am_ref, ah_ref), w1_ref[...],
                  preferred_element_type=jnp.float32)
    acc = acc + jnp.dot(im2col(bm_ref, bh_ref), w2_ref[...],
                        preferred_element_type=jnp.float32)
    acc = jnp.maximum(acc + bias_ref[...], 0.0)                     # folded BN + ReLU
    out_ref[0] = acc.astype(out_ref.dtype)


# --------------------------------------------------------------------------- #
# Wrapper
# --------------------------------------------------------------------------- #
def _row_tile(n_rows, max_tile=8):
    """Largest multiple of 8 that divides n_rows (<= max_tile); else full extent.

    Production note: sweep max_tile upward to fill VMEM (bigger tiles amortize the
    ~0.35us/step grid overhead); 8 is plenty for the small self-test shapes.
    """
    d = max_tile - max_tile % 8
    while d >= 8:
        if n_rows % d == 0:
            return d
        d -= 8
    return n_rows


def up_forward(x1_nchw, x2_nchw, params, *, bn_eps=1e-5):
    """Forward pass of `up` (NCHW in/out, matching the PyTorch module).

    x1_nchw: (N, Cin, H, W)     -> ConvTranspose2d(4,2,1)+ReLU -> (N, Cmid, 2H, 2W)
    x2_nchw: (N, Cmid, 2H, 2W)     skip connection
    returns: (N, Cout, 2H, 2W)
    """
    # TODO(synk): BatchNorm2d is applied in inference form (running stats folded
    # into the conv weight/bias); training-mode batch statistics are not computed.
    w_dec = params["deconv_w"]           # (Cin, Cmid, 4, 4)  PyTorch layout
    b_dec = params["deconv_b"]           # (Cmid,)
    w_conv = params["conv_w"]            # (Cout, 2*Cmid, 3, 3)
    b_conv = params["conv_b"]            # (Cout,)

    N, Cin, H, W = x1_nchw.shape
    Cmid = w_dec.shape[1]
    Cout = w_conv.shape[0]
    Ho, Wo = 2 * H, 2 * W
    assert x2_nchw.shape == (N, Cmid, Ho, Wo)
    assert H % 2 == 0, "row-tiling halo assumes an even number of rows"

    dt = x1_nchw.dtype
    cparams = pltpu.CompilerParams(
        dimension_semantics=("parallel", "parallel"),
        vmem_limit_bytes=64 * 1024 * 1024,
    )

    # ------------- stage 1: polyphase ConvTranspose2d + ReLU ------------------
    x1 = jnp.transpose(x1_nchw, (0, 2, 3, 1))                       # NHWC
    xpad = jnp.pad(x1, ((0, 0), (1, 1), (1, 1), (0, 0)))            # (N, H+2, W+2, Cin)

    # Flipped kernel wf[kh, kw, ci, co]; phase (ph, pw) uses taps kh=2dh+ph, kw=2dw+pw.
    wf = jnp.transpose(jnp.flip(w_dec, axis=(2, 3)), (2, 3, 0, 1))  # (4,4,Cin,Cmid)
    w_phase = jnp.stack(
        [wf[ph::2, pw::2].reshape(4 * Cin, Cmid)
         for ph in range(2) for pw in range(2)], axis=0)            # (4, 4*Cin, Cmid)
    b_dec2 = b_dec.reshape(1, Cmid).astype(jnp.float32)

    TH = _row_tile(H)
    nT = H // TH
    Wp = W + 2

    y_packed = pl.pallas_call(
        _deconv2x2_relu_kernel,
        out_shape=jax.ShapeDtypeStruct((N, H * W, 4 * Cmid), dt),
        grid_spec=pltpu.PrefetchScalarGridSpec(
            num_scalar_prefetch=0,
            grid=(N, nT),
            in_specs=[
                pl.BlockSpec((1, TH, Wp, Cin), lambda n, t: (n, t, 0, 0)),
                pl.BlockSpec((1, 2, Wp, Cin),
                             lambda n, t: (n, t * (TH // 2) + TH // 2, 0, 0)),
                pl.BlockSpec((4, 4 * Cin, Cmid), lambda n, t: (0, 0, 0)),
                pl.BlockSpec((1, Cmid), lambda n, t: (0, 0)),
            ],
            out_specs=pl.BlockSpec((1, TH * W, 4 * Cmid), lambda n, t: (n, t, 0)),
        ),
        compiler_params=cparams,
    )(xpad, xpad, w_phase, b_dec2)

    # Phase-packed (N, H*W, [ph, pw, c]) -> spatial NHWC (N, 2H, 2W, Cmid).
    x1_up = (y_packed.reshape(N, H, W, 2, 2, Cmid)
             .transpose(0, 1, 3, 2, 4, 5)
             .reshape(N, Ho, Wo, Cmid))

    # ------------- stage 2: 3x3 conv + folded BatchNorm + ReLU ----------------
    x2 = jnp.transpose(x2_nchw, (0, 2, 3, 1))                       # NHWC skip
    a_pad = jnp.pad(x1_up, ((0, 0), (1, 1), (1, 1), (0, 0)))        # (N, Ho+2, Wo+2, Cmid)
    s_pad = jnp.pad(x2, ((0, 0), (1, 1), (1, 1), (0, 0)))

    scale = params["bn_gamma"] * jax.lax.rsqrt(params["bn_var"] + bn_eps)   # (Cout,)
    w_eff = w_conv * scale[:, None, None, None]
    bias_eff = (params["bn_beta"] + scale * (b_conv - params["bn_mean"]))
    bias_eff = bias_eff.reshape(1, Cout).astype(jnp.float32)

    w_t = jnp.transpose(w_eff, (2, 3, 1, 0))                        # (3,3,2*Cmid,Cout)
    w1 = w_t[:, :, :Cmid, :].reshape(9 * Cmid, Cout)                # deconv branch
    w2 = w_t[:, :, Cmid:, :].reshape(9 * Cmid, Cout)                # skip branch

    TH2 = _row_tile(Ho)
    nT2 = Ho // TH2
    Wop = Wo + 2

    out_flat = pl.pallas_call(
        _conv3x3_bn_relu_kernel,
        out_shape=jax.ShapeDtypeStruct((N, Ho * Wo, Cout), dt),
        grid_spec=pltpu.PrefetchScalarGridSpec(
            num_scalar_prefetch=0,
            grid=(N, nT2),
            in_specs=[
                pl.BlockSpec((1, TH2, Wop, Cmid), lambda n, t: (n, t, 0, 0)),
                pl.BlockSpec((1, 2, Wop, Cmid),
                             lambda n, t: (n, t * (TH2 // 2) + TH2 // 2, 0, 0)),
                pl.BlockSpec((1, TH2, Wop, Cmid), lambda n, t: (n, t, 0, 0)),
                pl.BlockSpec((1, 2, Wop, Cmid),
                             lambda n, t: (n, t * (TH2 // 2) + TH2 // 2, 0, 0)),
                pl.BlockSpec((9 * Cmid, Cout), lambda n, t: (0, 0)),
                pl.BlockSpec((9 * Cmid, Cout), lambda n, t: (0, 0)),
                pl.BlockSpec((1, Cout), lambda n, t: (0, 0)),
            ],
            out_specs=pl.BlockSpec((1, TH2 * Wo, Cout), lambda n, t: (n, t, 0)),
        ),
        compiler_params=cparams,
    )(a_pad, a_pad, s_pad, s_pad, w1, w2, bias_eff)

    out = out_flat.reshape(N, Ho, Wo, Cout)
    return jnp.transpose(out, (0, 3, 1, 2))                         # NCHW


# --------------------------------------------------------------------------- #
# Pure-JAX reference (independent of the kernel formulation)
# --------------------------------------------------------------------------- #
def _reference_up(x1, x2, params, *, bn_eps=1e-5):
    w_dec = params["deconv_w"]
    K = w_dec.shape[2]
    rhs = jnp.transpose(jnp.flip(w_dec, (2, 3)), (1, 0, 2, 3))      # OIHW
    y = jax.lax.conv_general_dilated(
        x1, rhs, window_strides=(1, 1),
        padding=[(K - 2, K - 2)] * 2, lhs_dilation=(2, 2),
        dimension_numbers=("NCHW", "OIHW", "NCHW"))
    y = jnp.maximum(y + params["deconv_b"][None, :, None, None], 0.0)
    xc = jnp.concatenate([y, x2], axis=1)
    z = jax.lax.conv_general_dilated(
        xc, params["conv_w"], window_strides=(1, 1), padding=[(1, 1)] * 2,
        dimension_numbers=("NCHW", "OIHW", "NCHW"))
    z = z + params["conv_b"][None, :, None, None]
    scale = params["bn_gamma"] / jnp.sqrt(params["bn_var"] + bn_eps)
    z = (scale[None, :, None, None] * (z - params["bn_mean"][None, :, None, None])
         + params["bn_beta"][None, :, None, None])
    return jnp.maximum(z, 0.0)


if __name__ == "__main__":
    key = jax.random.PRNGKey(0)
    N, Cin, H, W = 2, 4, 16, 16
    Cmid, Cout = 8, 8

    ks = jax.random.split(key, 10)
    x1 = jax.random.normal(ks[0], (N, Cin, H, W), jnp.float32)
    x2 = jax.random.normal(ks[1], (N, Cmid, 2 * H, 2 * W), jnp.float32)

    bd = 1.0 / float(Cin * 4 * 4) ** 0.5
    bc = 1.0 / float(2 * Cmid * 3 * 3) ** 0.5
    params = dict(
        deconv_w=jax.random.uniform(ks[2], (Cin, Cmid, 4, 4), jnp.float32, -bd, bd),
        deconv_b=jax.random.uniform(ks[3], (Cmid,), jnp.float32, -bd, bd),
        conv_w=jax.random.uniform(ks[4], (Cout, 2 * Cmid, 3, 3), jnp.float32, -bc, bc),
        conv_b=jax.random.uniform(ks[5], (Cout,), jnp.float32, -bc, bc),
        bn_gamma=jax.random.uniform(ks[6], (Cout,), jnp.float32, 0.5, 1.5),
        bn_beta=jax.random.uniform(ks[7], (Cout,), jnp.float32, -0.5, 0.5),
        bn_mean=0.1 * jax.random.normal(ks[8], (Cout,), jnp.float32),
        bn_var=jax.random.uniform(ks[9], (Cout,), jnp.float32, 0.5, 1.5),
    )

    out = jax.jit(up_forward)(x1, x2, params)
    out = jax.block_until_ready(out)

    ref = _reference_up(x1, x2, params)
    assert out.shape == (N, Cout, 2 * H, 2 * W), out.shape
    assert jnp.allclose(out, ref, atol=1e-3, rtol=1e-3), \
        float(jnp.max(jnp.abs(out - ref)))

    print("KERNEL_OK")
</pallas_src>

<mosaic_0001>
module attributes {stable_mosaic.version = 11 : i64} {
  func.func @_deconv2x2_relu_kernel(%arg0: i32, %arg1: i32, %arg2: memref<1x8x18x4xf32, #tpu.memory_space<vmem>>, %arg3: memref<1x2x18x4xf32, #tpu.memory_space<vmem>>, %arg4: memref<4x16x8xf32, #tpu.memory_space<vmem>>, %arg5: memref<1x8xf32, #tpu.memory_space<vmem>>, %arg6: memref<1x128x32xf32, #tpu.memory_space<vmem>>) attributes {dimension_semantics = [#tpu.dimension_semantics<parallel>, #tpu.dimension_semantics<parallel>], iteration_bounds = array<i64: 2, 2>, scalar_prefetch = 0 : i64, scratch_operands = 0 : i64, tpu.core_type = #tpu.core_type<tc>, window_params = [{transform_indices = @transform_0, window_bounds = array<i64: 1, 8, 18, 4>}, {transform_indices = @transform_1, window_bounds = array<i64: 1, 2, 18, 4>}, {pipeline_mode = #tpu.pipeline_mode<synchronous>, transform_indices = @transform_2, window_bounds = array<i64: 4, 16, 8>}, {pipeline_mode = #tpu.pipeline_mode<synchronous>, transform_indices = @transform_3, window_bounds = array<i64: 1, 8>}, {transform_indices = @transform_4, window_bounds = array<i64: 1, 128, 32>}]} {
    %c0 = arith.constant 0 : index
    %c0_0 = arith.constant 0 : index
    %c0_1 = arith.constant 0 : index
    %c0_2 = arith.constant 0 : index
    %0 = vector.load %arg2[%c0, %c0_0, %c0_1, %c0_2] : memref<1x8x18x4xf32, #tpu.memory_space<vmem>>, vector<1x8x18x4xf32>
    %1 = vector.shape_cast %0 : vector<1x8x18x4xf32> to vector<8x18x4xf32>
    %c0_3 = arith.constant 0 : index
    %c0_4 = arith.constant 0 : index
    %c0_5 = arith.constant 0 : index
    %c0_6 = arith.constant 0 : index
    %2 = vector.load %arg3[%c0_3, %c0_4, %c0_5, %c0_6] : memref<1x2x18x4xf32, #tpu.memory_space<vmem>>, vector<1x2x18x4xf32>
    %3 = vector.shape_cast %2 : vector<1x2x18x4xf32> to vector<2x18x4xf32>
    %4 = tpu.concatenate %1, %3 in 0 : vector<8x18x4xf32>, vector<2x18x4xf32> -> vector<10x18x4xf32>
    %5 = vector.extract_strided_slice %4 {offsets = [0, 0, 0], sizes = [8, 16, 4], strides = [1, 1, 1]} : vector<10x18x4xf32> to vector<8x16x4xf32>
    %6 = vector.shape_cast %5 : vector<8x16x4xf32> to vector<128x4xf32>
    %7 = vector.extract_strided_slice %4 {offsets = [0, 1, 0], sizes = [8, 16, 4], strides = [1, 1, 1]} : vector<10x18x4xf32> to vector<8x16x4xf32>
    %8 = vector.shape_cast %7 : vector<8x16x4xf32> to vector<128x4xf32>
    %9 = vector.extract_strided_slice %4 {offsets = [0, 2, 0], sizes = [8, 16, 4], strides = [1, 1, 1]} : vector<10x18x4xf32> to vector<8x16x4xf32>
    %10 = vector.shape_cast %9 : vector<8x16x4xf32> to vector<128x4xf32>
    %11 = vector.extract_strided_slice %4 {offsets = [1, 0, 0], sizes = [8, 16, 4], strides = [1, 1, 1]} : vector<10x18x4xf32> to vector<8x16x4xf32>
    %12 = vector.shape_cast %11 : vector<8x16x4xf32> to vector<128x4xf32>
    %13 = vector.extract_strided_slice %4 {offsets = [1, 1, 0], sizes = [8, 16, 4], strides = [1, 1, 1]} : vector<10x18x4xf32> to vector<8x16x4xf32>
    %14 = vector.shape_cast %13 : vector<8x16x4xf32> to vector<128x4xf32>
    %15 = vector.extract_strided_slice %4 {offsets = [1, 2, 0], sizes = [8, 16, 4], strides = [1, 1, 1]} : vector<10x18x4xf32> to vector<8x16x4xf32>
    %16 = vector.shape_cast %15 : vector<8x16x4xf32> to vector<128x4xf32>
    %17 = vector.extract_strided_slice %4 {offsets = [2, 0, 0], sizes = [8, 16, 4], strides = [1, 1, 1]} : vector<10x18x4xf32> to vector<8x16x4xf32>
    %18 = vector.shape_cast %17 : vector<8x16x4xf32> to vector<128x4xf32>
    %19 = vector.extract_strided_slice %4 {offsets = [2, 1, 0], sizes = [8, 16, 4], strides = [1, 1, 1]} : vector<10x18x4xf32> to vector<8x16x4xf32>
    %20 = vector.shape_cast %19 : vector<8x16x4xf32> to vector<128x4xf32>
    %21 = vector.extract_strided_slice %4 {offsets = [2, 2, 0], sizes = [8, 16, 4], strides = [1, 1, 1]} : vector<10x18x4xf32> to vector<8x16x4xf32>
    %22 = vector.shape_cast %21 : vector<8x16x4xf32> to vector<128x4xf32>
    %23 = tpu.concatenate %6, %8, %12, %14 in 1 : vector<128x4xf32>, vector<128x4xf32>, vector<128x4xf32>, vector<128x4xf32> -> vector<128x16xf32>
    %c0_7 = arith.constant 0 : index
    %c0_8 = arith.constant 0 : index
    %c0_9 = arith.constant 0 : index
    %24 = vector.load %arg4[%c0_7, %c0_8, %c0_9] : memref<4x16x8xf32, #tpu.memory_space<vmem>>, vector<1x16x8xf32>
    %25 = vector.shape_cast %24 : vector<1x16x8xf32> to vector<16x8xf32>
    %cst = arith.constant dense<0.000000e+00> : vector<128x8xf32>
    %26 = tpu.matmul %23, %25, %cst {dimension_numbers = #tpu.dot_dimension_numbers<[1], [0], [0], [1], [0, 0, 1, 1], [], []>} : vector<128x16xf32>, vector<16x8xf32>, vector<128x8xf32> -> vector<128x8xf32>
    %c0_10 = arith.constant 0 : index
    %c0_11 = arith.constant 0 : index
    %27 = vector.load %arg5[%c0_10, %c0_11] : memref<1x8xf32, #tpu.memory_space<vmem>>, vector<1x8xf32>
    %28 = vector.broadcast %27 : vector<1x8xf32> to vector<128x8xf32>
    %29 = arith.addf %26, %28 : vector<128x8xf32>
    %cst_12 = arith.constant 0.000000e+00 : f32
    %30 = vector.broadcast %cst_12 : f32 to vector<128x8xf32>
    %31 = arith.maximumf %29, %30 : vector<128x8xf32>
    %32 = tpu.concatenate %8, %10, %14, %16 in 1 : vector<128x4xf32>, vector<128x4xf32>, vector<128x4xf32>, vector<128x4xf32> -> vector<128x16xf32>
    %c1 = arith.constant 1 : index
    %c0_13 = arith.constant 0 : index
    %c0_14 = arith.constant 0 : index
    %33 = vector.load %arg4[%c1, %c0_13, %c0_14] : memref<4x16x8xf32, #tpu.memory_space<vmem>>, vector<1x16x8xf32>
    %34 = vector.shape_cast %33 : vector<1x16x8xf32> to vector<16x8xf32>
    %cst_15 = arith.constant dense<0.000000e+00> : vector<128x8xf32>
    %35 = tpu.matmul %32, %34, %cst_15 {dimension_numbers = #tpu.dot_dimension_numbers<[1], [0], [0], [1], [0, 0, 1, 1], [], []>} : vector<128x16xf32>, vector<16x8xf32>, vector<128x8xf32> -> vector<128x8xf32>
    %c0_16 = arith.constant 0 : index
    %c0_17 = arith.constant 0 : index
    %36 = vector.load %arg5[%c0_16, %c0_17] : memref<1x8xf32, #tpu.memory_space<vmem>>, vector<1x8xf32>
    %37 = vector.broadcast %36 : vector<1x8xf32> to vector<128x8xf32>
    %38 = arith.addf %35, %37 : vector<128x8xf32>
    %cst_18 = arith.constant 0.000000e+00 : f32
    %39 = vector.broadcast %cst_18 : f32 to vector<128x8xf32>
    %40 = arith.maximumf %38, %39 : vector<128x8xf32>
    %41 = tpu.concatenate %12, %14, %18, %20 in 1 : vector<128x4xf32>, vector<128x4xf32>, vector<128x4xf32>, vector<128x4xf32> -> vector<128x16xf32>
    %c2 = arith.constant 2 : index
    %c0_19 = arith.constant 0 : index
    %c0_20 = arith.constant 0 : index
    %42 = vector.load %arg4[%c2, %c0_19, %c0_20] : memref<4x16x8xf32, #tpu.memory_space<vmem>>, vector<1x16x8xf32>
    %43 = vector.shape_cast %42 : vector<1x16x8xf32> to vector<16x8xf32>
    %cst_21 = arith.constant dense<0.000000e+00> : vector<128x8xf32>
    %44 = tpu.matmul %41, %43, %cst_21 {dimension_numbers = #tpu.dot_dimension_numbers<[1], [0], [0], [1], [0, 0, 1, 1], [], []>} : vector<128x16xf32>, vector<16x8xf32>, vector<128x8xf32> -> vector<128x8xf32>
    %c0_22 = arith.constant 0 : index
    %c0_23 = arith.constant 0 : index
    %45 = vector.load %arg5[%c0_22, %c0_23] : memref<1x8xf32, #tpu.memory_space<vmem>>, vector<1x8xf32>
    %46 = vector.broadcast %45 : vector<1x8xf32> to vector<128x8xf32>
    %47 = arith.addf %44, %46 : vector<128x8xf32>
    %cst_24 = arith.constant 0.000000e+00 : f32
    %48 = vector.broadcast %cst_24 : f32 to vector<128x8xf32>
    %49 = arith.maximumf %47, %48 : vector<128x8xf32>
    %50 = tpu.concatenate %14, %16, %20, %22 in 1 : vector<128x4xf32>, vector<128x4xf32>, vector<128x4xf32>, vector<128x4xf32> -> vector<128x16xf32>
    %c3 = arith.constant 3 : index
    %c0_25 = arith.constant 0 : index
    %c0_26 = arith.constant 0 : index
    %51 = vector.load %arg4[%c3, %c0_25, %c0_26] : memref<4x16x8xf32, #tpu.memory_space<vmem>>, vector<1x16x8xf32>
    %52 = vector.shape_cast %51 : vector<1x16x8xf32> to vector<16x8xf32>
    %cst_27 = arith.constant dense<0.000000e+00> : vector<128x8xf32>
    %53 = tpu.matmul %50, %52, %cst_27 {dimension_numbers = #tpu.dot_dimension_numbers<[1], [0], [0], [1], [0, 0, 1, 1], [], []>} : vector<128x16xf32>, vector<16x8xf32>, vector<128x8xf32> -> vector<128x8xf32>
    %c0_28 = arith.constant 0 : index
    %c0_29 = arith.constant 0 : index
    %54 = vector.load %arg5[%c0_28, %c0_29] : memref<1x8xf32, #tpu.memory_space<vmem>>, vector<1x8xf32>
    %55 = vector.broadcast %54 : vector<1x8xf32> to vector<128x8xf32>
    %56 = arith.addf %53, %55 : vector<128x8xf32>
    %cst_30 = arith.constant 0.000000e+00 : f32
    %57 = vector.broadcast %cst_30 : f32 to vector<128x8xf32>
    %58 = arith.maximumf %56, %57 : vector<128x8xf32>
    %59 = tpu.concatenate %31, %40, %49, %58 in 1 : vector<128x8xf32>, vector<128x8xf32>, vector<128x8xf32>, vector<128x8xf32> -> vector<128x32xf32>
    %c0_31 = arith.constant 0 : index
    %c0_32 = arith.constant 0 : index
    %c0_33 = arith.constant 0 : index
    %60 = vector.load %arg6[%c0_31, %c0_32, %c0_33] : memref<1x128x32xf32, #tpu.memory_space<vmem>>, vector<1x128x32xf32>
    %61 = vector.shape_cast %60 : vector<1x128x32xf32> to vector<128x32xf32>
    %62 = vector.shape_cast %59 : vector<128x32xf32> to vector<1x128x32xf32>
    tpu.vector_store %arg6[%c0_31, %c0_32, %c0_33], %62 {strides = array<i32>} : memref<1x128x32xf32, #tpu.memory_space<vmem>>, vector<1x128x32xf32>,
    return
  }
  func.func @transform_0(%arg0: i32, %arg1: i32) -> (i32, i32, i32, i32) {
    %c0_i32 = arith.constant 0 : i32
    %c0_i32_0 = arith.constant 0 : i32
    %c0_i32_1 = arith.constant 0 : i32
    return %arg0, %arg1, %c0_i32, %c0_i32_0 : i32, i32, i32, i32
  }
  func.func @transform_1(%arg0: i32, %arg1: i32) -> (i32, i32, i32, i32) {
    %c4_i32 = arith.constant 4 : i32
    %0 = arith.muli %arg1, %c4_i32 : i32
    %c4_i32_0 = arith.constant 4 : i32
    %1 = arith.addi %0, %c4_i32_0 : i32
    %c0_i32 = arith.constant 0 : i32
    %c0_i32_1 = arith.constant 0 : i32
    %c0_i32_2 = arith.constant 0 : i32
    return %arg0, %1, %c0_i32, %c0_i32_1 : i32, i32, i32, i32
  }
  func.func @transform_2(%arg0: i32, %arg1: i32) -> (i32, i32, i32) {
    %c0_i32 = arith.constant 0 : i32
    %c0_i32_0 = arith.constant 0 : i32
    %c0_i32_1 = arith.constant 0 : i32
    %c0_i32_2 = arith.constant 0 : i32
    return %c0_i32, %c0_i32_0, %c0_i32_1 : i32, i32, i32
  }
  func.func @transform_3(%arg0: i32, %arg1: i32) -> (i32, i32) {
    %c0_i32 = arith.constant 0 : i32
    %c0_i32_0 = arith.constant 0 : i32
    %c0_i32_1 = arith.constant 0 : i32
    return %c0_i32, %c0_i32_0 : i32, i32
  }
  func.func @transform_4(%arg0: i32, %arg1: i32) -> (i32, i32, i32) {
    %c0_i32 = arith.constant 0 : i32
    %c0_i32_0 = arith.constant 0 : i32
    return %arg0, %arg1, %c0_i32 : i32, i32, i32
  }
}

module attributes {stable_mosaic.version = 11 : i64} {
  func.func @_conv3x3_bn_relu_kernel(%arg0: i32, %arg1: i32, %arg2: memref<1x8x34x8xf32, #tpu.memory_space<vmem>>, %arg3: memref<1x2x34x8xf32, #tpu.memory_space<vmem>>, %arg4: memref<1x8x34x8xf32, #tpu.memory_space<vmem>>, %arg5: memref<1x2x34x8xf32, #tpu.memory_space<vmem>>, %arg6: memref<72x8xf32, #tpu.memory_space<vmem>>, %arg7: memref<72x8xf32, #tpu.memory_space<vmem>>, %arg8: memref<1x8xf32, #tpu.memory_space<vmem>>, %arg9: memref<1x256x8xf32, #tpu.memory_space<vmem>>) attributes {dimension_semantics = [#tpu.dimension_semantics<parallel>, #tpu.dimension_semantics<parallel>], iteration_bounds = array<i64: 2, 4>, scalar_prefetch = 0 : i64, scratch_operands = 0 : i64, tpu.core_type = #tpu.core_type<tc>, window_params = [{transform_indices = @transform_0, window_bounds = array<i64: 1, 8, 34, 8>}, {transform_indices = @transform_1, window_bounds = array<i64: 1, 2, 34, 8>}, {transform_indices = @transform_2, window_bounds = array<i64: 1, 8, 34, 8>}, {transform_indices = @transform_3, window_bounds = array<i64: 1, 2, 34, 8>}, {pipeline_mode = #tpu.pipeline_mode<synchronous>, transform_indices = @transform_4, window_bounds = array<i64: 72, 8>}, {pipeline_mode = #tpu.pipeline_mode<synchronous>, transform_indices = @transform_5, window_bounds = array<i64: 72, 8>}, {pipeline_mode = #tpu.pipeline_mode<synchronous>, transform_indices = @transform_6, window_bounds = array<i64: 1, 8>}, {transform_indices = @transform_7, window_bounds = array<i64: 1, 256, 8>}]} {
    %c0 = arith.constant 0 : index
    %c0_0 = arith.constant 0 : index
    %c0_1 = arith.constant 0 : index
    %c0_2 = arith.constant 0 : index
    %0 = vector.load %arg2[%c0, %c0_0, %c0_1, %c0_2] : memref<1x8x34x8xf32, #tpu.memory_space<vmem>>, vector<1x8x34x8xf32>
    %1 = vector.shape_cast %0 : vector<1x8x34x8xf32> to vector<8x34x8xf32>
    %c0_3 = arith.constant 0 : index
    %c0_4 = arith.constant 0 : index
    %c0_5 = arith.constant 0 : index
    %c0_6 = arith.constant 0 : index
    %2 = vector.load %arg3[%c0_3, %c0_4, %c0_5, %c0_6] : memref<1x2x34x8xf32, #tpu.memory_space<vmem>>, vector<1x2x34x8xf32>
    %3 = vector.shape_cast %2 : vector<1x2x34x8xf32> to vector<2x34x8xf32>
    %4 = tpu.concatenate %1, %3 in 0 : vector<8x34x8xf32>, vector<2x34x8xf32> -> vector<10x34x8xf32>
    %5 = vector.extract_strided_slice %4 {offsets = [0, 0, 0], sizes = [8, 32, 8], strides = [1, 1, 1]} : vector<10x34x8xf32> to vector<8x32x8xf32>
    %6 = vector.shape_cast %5 : vector<8x32x8xf32> to vector<256x8xf32>
    %7 = vector.extract_strided_slice %4 {offsets = [0, 1, 0], sizes = [8, 32, 8], strides = [1, 1, 1]} : vector<10x34x8xf32> to vector<8x32x8xf32>
    %8 = vector.shape_cast %7 : vector<8x32x8xf32> to vector<256x8xf32>
    %9 = vector.extract_strided_slice %4 {offsets = [0, 2, 0], sizes = [8, 32, 8], strides = [1, 1, 1]} : vector<10x34x8xf32> to vector<8x32x8xf32>
    %10 = vector.shape_cast %9 : vector<8x32x8xf32> to vector<256x8xf32>
    %11 = vector.extract_strided_slice %4 {offsets = [1, 0, 0], sizes = [8, 32, 8], strides = [1, 1, 1]} : vector<10x34x8xf32> to vector<8x32x8xf32>
    %12 = vector.shape_cast %11 : vector<8x32x8xf32> to vector<256x8xf32>
    %13 = vector.extract_strided_slice %4 {offsets = [1, 1, 0], sizes = [8, 32, 8], strides = [1, 1, 1]} : vector<10x34x8xf32> to vector<8x32x8xf32>
    %14 = vector.shape_cast %13 : vector<8x32x8xf32> to vector<256x8xf32>
    %15 = vector.extract_strided_slice %4 {offsets = [1, 2, 0], sizes = [8, 32, 8], strides = [1, 1, 1]} : vector<10x34x8xf32> to vector<8x32x8xf32>
    %16 = vector.shape_cast %15 : vector<8x32x8xf32> to vector<256x8xf32>
    %17 = vector.extract_strided_slice %4 {offsets = [2, 0, 0], sizes = [8, 32, 8], strides = [1, 1, 1]} : vector<10x34x8xf32> to vector<8x32x8xf32>
    %18 = vector.shape_cast %17 : vector<8x32x8xf32> to vector<256x8xf32>
    %19 = vector.extract_strided_slice %4 {offsets = [2, 1, 0], sizes = [8, 32, 8], strides = [1, 1, 1]} : vector<10x34x8xf32> to vector<8x32x8xf32>
    %20 = vector.shape_cast %19 : vector<8x32x8xf32> to vector<256x8xf32>
    %21 = vector.extract_strided_slice %4 {offsets = [2, 2, 0], sizes = [8, 32, 8], strides = [1, 1, 1]} : vector<10x34x8xf32> to vector<8x32x8xf32>
    %22 = vector.shape_cast %21 : vector<8x32x8xf32> to vector<256x8xf32>
    %23 = tpu.concatenate %6, %8, %10, %12, %14, %16, %18, %20, %22 in 1 : vector<256x8xf32>, vector<256x8xf32>, vector<256x8xf32>, vector<256x8xf32>, vector<256x8xf32>, vector<256x8xf32>, vector<256x8xf32>, vector<256x8xf32>, vector<256x8xf32> -> vector<256x72xf32>
    %c0_7 = arith.constant 0 : index
    %c0_8 = arith.constant 0 : index
    %24 = vector.load %arg6[%c0_7, %c0_8] : memref<72x8xf32, #tpu.memory_space<vmem>>, vector<72x8xf32>
    %cst = arith.constant dense<0.000000e+00> : vector<256x8xf32>
    %25 = tpu.matmul %23, %24, %cst {dimension_numbers = #tpu.dot_dimension_numbers<[1], [0], [0], [1], [0, 0, 1, 1], [], []>} : vector<256x72xf32>, vector<72x8xf32>, vector<256x8xf32> -> vector<256x8xf32>
    %c0_9 = arith.constant 0 : index
    %c0_10 = arith.constant 0 : index
    %c0_11 = arith.constant 0 : index
    %c0_12 = arith.constant 0 : index
    %26 = vector.load %arg4[%c0_9, %c0_10, %c0_11, %c0_12] : memref<1x8x34x8xf32, #tpu.memory_space<vmem>>, vector<1x8x34x8xf32>
    %27 = vector.shape_cast %26 : vector<1x8x34x8xf32> to vector<8x34x8xf32>
    %c0_13 = arith.constant 0 : index
    %c0_14 = arith.constant 0 : index
    %c0_15 = arith.constant 0 : index
    %c0_16 = arith.constant 0 : index
    %28 = vector.load %arg5[%c0_13, %c0_14, %c0_15, %c0_16] : memref<1x2x34x8xf32, #tpu.memory_space<vmem>>, vector<1x2x34x8xf32>
    %29 = vector.shape_cast %28 : vector<1x2x34x8xf32> to vector<2x34x8xf32>
    %30 = tpu.concatenate %27, %29 in 0 : vector<8x34x8xf32>, vector<2x34x8xf32> -> vector<10x34x8xf32>
    %31 = vector.extract_strided_slice %30 {offsets = [0, 0, 0], sizes = [8, 32, 8], strides = [1, 1, 1]} : vector<10x34x8xf32> to vector<8x32x8xf32>
    %32 = vector.shape_cast %31 : vector<8x32x8xf32> to vector<256x8xf32>
    %33 = vector.extract_strided_slice %30 {offsets = [0, 1, 0], sizes = [8, 32, 8], strides = [1, 1, 1]} : vector<10x34x8xf32> to vector<8x32x8xf32>
    %34 = vector.shape_cast %33 : vector<8x32x8xf32> to vector<256x8xf32>
    %35 = vector.extract_strided_slice %30 {offsets = [0, 2, 0], sizes = [8, 32, 8], strides = [1, 1, 1]} : vector<10x34x8xf32> to vector<8x32x8xf32>
    %36 = vector.shape_cast %35 : vector<8x32x8xf32> to vector<256x8xf32>
    %37 = vector.extract_strided_slice %30 {offsets = [1, 0, 0], sizes = [8, 32, 8], strides = [1, 1, 1]} : vector<10x34x8xf32> to vector<8x32x8xf32>
    %38 = vector.shape_cast %37 : vector<8x32x8xf32> to vector<256x8xf32>
    %39 = vector.extract_strided_slice %30 {offsets = [1, 1, 0], sizes = [8, 32, 8], strides = [1, 1, 1]} : vector<10x34x8xf32> to vector<8x32x8xf32>
    %40 = vector.shape_cast %39 : vector<8x32x8xf32> to vector<256x8xf32>
    %41 = vector.extract_strided_slice %30 {offsets = [1, 2, 0], sizes = [8, 32, 8], strides = [1, 1, 1]} : vector<10x34x8xf32> to vector<8x32x8xf32>
    %42 = vector.shape_cast %41 : vector<8x32x8xf32> to vector<256x8xf32>
    %43 = vector.extract_strided_slice %30 {offsets = [2, 0, 0], sizes = [8, 32, 8], strides = [1, 1, 1]} : vector<10x34x8xf32> to vector<8x32x8xf32>
    %44 = vector.shape_cast %43 : vector<8x32x8xf32> to vector<256x8xf32>
    %45 = vector.extract_strided_slice %30 {offsets = [2, 1, 0], sizes = [8, 32, 8], strides = [1, 1, 1]} : vector<10x34x8xf32> to vector<8x32x8xf32>
    %46 = vector.shape_cast %45 : vector<8x32x8xf32> to vector<256x8xf32>
    %47 = vector.extract_strided_slice %30 {offsets = [2, 2, 0], sizes = [8, 32, 8], strides = [1, 1, 1]} : vector<10x34x8xf32> to vector<8x32x8xf32>
    %48 = vector.shape_cast %47 : vector<8x32x8xf32> to vector<256x8xf32>
    %49 = tpu.concatenate %32, %34, %36, %38, %40, %42, %44, %46, %48 in 1 : vector<256x8xf32>, vector<256x8xf32>, vector<256x8xf32>, vector<256x8xf32>, vector<256x8xf32>, vector<256x8xf32>, vector<256x8xf32>, vector<256x8xf32>, vector<256x8xf32> -> vector<256x72xf32>
    %c0_17 = arith.constant 0 : index
    %c0_18 = arith.constant 0 : index
    %50 = vector.load %arg7[%c0_17, %c0_18] : memref<72x8xf32, #tpu.memory_space<vmem>>, vector<72x8xf32>
    %cst_19 = arith.constant dense<0.000000e+00> : vector<256x8xf32>
    %51 = tpu.matmul %49, %50, %cst_19 {dimension_numbers = #tpu.dot_dimension_numbers<[1], [0], [0], [1], [0, 0, 1, 1], [], []>} : vector<256x72xf32>, vector<72x8xf32>, vector<256x8xf32> -> vector<256x8xf32>
    %52 = arith.addf %25, %51 : vector<256x8xf32>
    %c0_20 = arith.constant 0 : index
    %c0_21 = arith.constant 0 : index
    %53 = vector.load %arg8[%c0_20, %c0_21] : memref<1x8xf32, #tpu.memory_space<vmem>>, vector<1x8xf32>
    %54 = vector.broadcast %53 : vector<1x8xf32> to vector<256x8xf32>
    %55 = arith.addf %52, %54 : vector<256x8xf32>
    %cst_22 = arith.constant 0.000000e+00 : f32
    %56 = vector.broadcast %cst_22 : f32 to vector<256x8xf32>
    %57 = arith.maximumf %55, %56 : vector<256x8xf32>
    %c0_23 = arith.constant 0 : index
    %c0_24 = arith.constant 0 : index
    %c0_25 = arith.constant 0 : index
    %58 = vector.load %arg9[%c0_23, %c0_24, %c0_25] : memref<1x256x8xf32, #tpu.memory_space<vmem>>, vector<1x256x8xf32>
    %59 = vector.shape_cast %58 : vector<1x256x8xf32> to vector<256x8xf32>
    %60 = vector.shape_cast %57 : vector<256x8xf32> to vector<1x256x8xf32>
    tpu.vector_store %arg9[%c0_23, %c0_24, %c0_25], %60 {strides = array<i32>} : memref<1x256x8xf32, #tpu.memory_space<vmem>>, vector<1x256x8xf32>,
    return
  }
  func.func @transform_0(%arg0: i32, %arg1: i32) -> (i32, i32, i32, i32) {
    %c0_i32 = arith.constant 0 : i32
    %c0_i32_0 = arith.constant 0 : i32
    %c0_i32_1 = arith.constant 0 : i32
    return %arg0, %arg1, %c0_i32, %c0_i32_0 : i32, i32, i32, i32
  }
  func.func @transform_1(%arg0: i32, %arg1: i32) -> (i32, i32, i32, i32) {
    %c4_i32 = arith.constant 4 : i32
    %0 = arith.muli %arg1, %c4_i32 : i32
    %c4_i32_0 = arith.constant 4 : i32
    %1 = arith.addi %0, %c4_i32_0 : i32
    %c0_i32 = arith.constant 0 : i32
    %c0_i32_1 = arith.constant 0 : i32
    %c0_i32_2 = arith.constant 0 : i32
    return %arg0, %1, %c0_i32, %c0_i32_1 : i32, i32, i32, i32
  }
  func.func @transform_2(%arg0: i32, %arg1: i32) -> (i32, i32, i32, i32) {
    %c0_i32 = arith.constant 0 : i32
    %c0_i32_0 = arith.constant 0 : i32
    %c0_i32_1 = arith.constant 0 : i32
    return %arg0, %arg1, %c0_i32, %c0_i32_0 : i32, i32, i32, i32
  }
  func.func @transform_3(%arg0: i32, %arg1: i32) -> (i32, i32, i32, i32) {
    %c4_i32 = arith.constant 4 : i32
    %0 = arith.muli %arg1, %c4_i32 : i32
    %c4_i32_0 = arith.constant 4 : i32
    %1 = arith.addi %0, %c4_i32_0 : i32
    %c0_i32 = arith.constant 0 : i32
    %c0_i32_1 = arith.constant 0 : i32
    %c0_i32_2 = arith.constant 0 : i32
    return %arg0, %1, %c0_i32, %c0_i32_1 : i32, i32, i32, i32
  }
  func.func @transform_4(%arg0: i32, %arg1: i32) -> (i32, i32) {
    %c0_i32 = arith.constant 0 : i32
    %c0_i32_0 = arith.constant 0 : i32
    %c0_i32_1 = arith.constant 0 : i32
    return %c0_i32, %c0_i32_0 : i32, i32
  }
  func.func @transform_5(%arg0: i32, %arg1: i32) -> (i32, i32) {
    %c0_i32 = arith.constant 0 : i32
    %c0_i32_0 = arith.constant 0 : i32
    %c0_i32_1 = arith.constant 0 : i32
    return %c0_i32, %c0_i32_0 : i32, i32
  }
  func.func @transform_6(%arg0: i32, %arg1: i32) -> (i32, i32) {
    %c0_i32 = arith.constant 0 : i32
    %c0_i32_0 = arith.constant 0 : i32
    %c0_i32_1 = arith.constant 0 : i32
    return %c0_i32, %c0_i32_0 : i32, i32
  }
  func.func @transform_7(%arg0: i32, %arg1: i32) -> (i32, i32, i32) {
    %c0_i32 = arith.constant 0 : i32
    %c0_i32_0 = arith.constant 0 : i32
    return %arg0, %arg1, %c0_i32 : i32, i32, i32
  }
}

</mosaic_0001>

<llo_original>
// kernel: up_forward.2
$region0: #{up_forward.2}
  #allocation0 [shape = 'u32[]', space=smem, size = 0x4, offset = 0x4, fixed_abs, tag = 'smem constant byte address 0x4 - core index']
  #allocation1 [shape = 'u32[144,128]{1,0:T(1,128)}', space=vmem, size = 0x12000, scoped, tag = 'internal scratch']
  %s0 = inlined_call_operand.hbm [shape: f32[2,18,18,4], index: 0, kind: input, shape index: {}, may-alias: {0,1}]
  %s1 = inlined_call_operand.hbm [shape: f32[2,18,18,4], index: 1, kind: input, shape index: {}, may-alias: {0,1}]
  %s2 = inlined_call_operand.hbm [shape: f32[4,16,8], index: 2, kind: input, shape index: {}]
  %s3 = inlined_call_operand.hbm [shape: f32[1,8], index: 3, kind: input, shape index: {}]
  %s4 = inlined_call_operand.hbm [shape: f32[2,256,32], index: 4, kind: output, shape index: {}]
  %s5 = sld [smem:[#allocation0]]
  $region65: #{up_forward.2} parent=0
    _
  %s7 = ssub.s32 1, %s5
  %s8 = scalar_select 0, %s7, %s5
  $region1: #{up_forward.2} parent=0
    #allocation2 [shape = 'u8[196608]{0}', space=vmem, size = 0x30000, scoped, tag = 'input window, operand 0']
    #allocation3 [shape = 's32[2]{0}', space=sflag, size = 0x8, scoped, tag = 'scoped memory for up_forward.2']
    #allocation4 [shape = 's32[2]{0}', space=sflag, size = 0x8, scoped, tag = 'scoped memory for up_forward.2']
    #allocation5 [shape = 'u8[49152]{0}', space=vmem, size = 0xc000, scoped, tag = 'input window, operand 1']
    #allocation6 [shape = 's32[2]{0}', space=sflag, size = 0x8, scoped, tag = 'scoped memory for up_forward.2']
    #allocation7 [shape = 'u8[32768]{0}', space=vmem, size = 0x8000, scoped, tag = 'input window, operand 2, single buffered']
    #allocation8 [shape = 'u8[512]{0}', space=vmem, size = 0x400, scoped, tag = 'input window, operand 3, single buffered']
    #allocation9 [shape = 's32[1]{0}', space=sflag, size = 0x4, scoped, tag = 'scoped memory for up_forward.2']
    #allocation10 [shape = 'u8[131072]{0}', space=vmem, size = 0x20000, scoped, tag = 'output window, operand 0']
    %9 = vsyncpa [#allocation3], 0
    %s10 = scalar_lea.sflag [#allocation3], 1
    %11 = vsyncpa %s10, 0
    %12 = vsyncpa [#allocation6], 0
    %s13 = scalar_lea.sflag [#allocation6], 1
    %14 = vsyncpa %s13, 0
    %15 = vsyncpa [#allocation9], 0
    %16 = vsyncpa [#allocation4], 0
    %s17 = scalar_lea.sflag [#allocation4], 1
    %18 = vsyncpa %s17, 0
    loop: start=0, step=1, limit=6
    $region2: #{up_forward.2} parent=1 // loop_pre_header
      _
    $region3: #{up_forward.2} parent=1 // loop_header
      %s20 = sphi 0, %s24
      %p21 = scmp.ge.s32.totalorder %s20, 6
      %s27 = sphi 0, %s39
      %s28 = sphi 0, %s35
      %s29 = sphi 0, %s27
      %s30 = sphi 0, %s28
      %s31 = sphi 0, %s29
      %s32 = sphi 0, %s30
      %s44 = sphi 0, %s46
      %s47 = sphi 0, %s44
      %s48 = sphi 0, %s47
      %s64 = sphi 0, %s48
      %s76 = sphi 0, %s78
      %s79 = sphi 0, %s76
      %s80 = sphi 0, %s79
      %s96 = sphi 0, %s80
      %s100 = sphi 0, %s100
      %s102 = sphi 0, %s100
      %s103 = sphi 0, %s102
      %s117 = sphi 0, %s103
      %s121 = sphi 0, %s121
      %s123 = sphi 0, %s121
      %s124 = sphi 0, %s123
      %s138 = sphi 0, %s124
      %s146 = sphi 0, %s148
      %s149 = sphi 0, %s146
      %s150 = sphi 0, %s149
      %s166 = sphi 0, %s150
    $region4: #{up_forward.2} parent=1 // loop_header_branch
      %23 = sbr.rel (%p21) target = $region8
    $region5: #{up_forward.2} parent=1 // loop_body
      %s25 = ssub.s32 %s20, 1
      %s26 = ssub.s32 %s20, 2
      %s33 = sadd.s32 1, %s28
      %p34 = scmp.ge.s32.totalorder %s33, 2
      %s35 = scalar_select %p34, 0, %s33
      %s36 = sadd.s32 1, %s27
      %s37 = scalar_select %p34, %s36, %s27
      %p38 = scmp.ge.s32.totalorder %s37, 2
      %s39 = scalar_select %p38, 0, %s37
      %s40 = ssub.s32 %s27, %s39
      %s41 = ssub.s32 %s28, %s35
      %s42 = sor.u32 %s40, %s41
      %p43 = scmp.eq.s32.totalorder %s42, 0
      %s45 = sadd.s32 %s44, 1
      %s46 = scalar_select %p43, %s44, %s45
      %p49 = pneg %p43
      %p50 = scmp.eq.s32.totalorder %s20, 3
      %p51 = por %p49, %p50
      %p52 = scmp.ne.s32.totalorder %s44, %s47
      %p53 = scmp.eq.s32.totalorder %s20, 0
      %p54 = por %p52, %p53
      %p55 = scmp.ne.s32.totalorder %s44, %s47
      %p56 = scmp.eq.s32.totalorder %s25, 3
      %p57 = por %p55, %p56
      %p58 = scmp.ne.s32.totalorder %s47, %s48
      %p59 = scmp.eq.s32.totalorder %s25, 0
      %p60 = por %p58, %p59
      %p61 = scmp.ne.s32.totalorder %s47, %s48
      %p62 = scmp.eq.s32.totalorder %s26, 3
      %p63 = por %p61, %p62
      %p65 = scmp.ne.s32.totalorder %s48, %s64
      %p66 = scmp.eq.s32.totalorder %s26, 0
      %p67 = por %p65, %p66
      %s68 = smul.u32 %s28, 4
      %s69 = sadd.s32 %s68, 4
      %s70 = smul.u32 %s35, 4
      %s71 = sadd.s32 %s70, 4
      %s72 = ssub.s32 %s27, %s39
      %s73 = ssub.s32 %s69, %s71
      %s74 = sor.u32 %s72, %s73
      %p75 = scmp.eq.s32.totalorder %s74, 0
      %s77 = sadd.s32 %s76, 1
      %s78 = scalar_select %p75, %s76, %s77
      %p81 = pneg %p75
      %p82 = scmp.eq.s32.totalorder %s20, 3
      %p83 = por %p81, %p82
      %p84 = scmp.ne.s32.totalorder %s76, %s79
      %p85 = scmp.eq.s32.totalorder %s20, 0
      %p86 = por %p84, %p85
      %p87 = scmp.ne.s32.totalorder %s76, %s79
      %p88 = scmp.eq.s32.totalorder %s25, 3
      %p89 = por %p87, %p88
      %p90 = scmp.ne.s32.totalorder %s79, %s80
      %p91 = scmp.eq.s32.totalorder %s25, 0
      %p92 = por %p90, %p91
      %p93 = scmp.ne.s32.totalorder %s79, %s80
      %p94 = scmp.eq.s32.totalorder %s26, 3
      %p95 = por %p93, %p94
      %p97 = scmp.ne.s32.totalorder %s80, %s96
      %p98 = scmp.eq.s32.totalorder %s26, 0
      %p99 = por %p97, %p98
      %s101 = sadd.s32 %s100, 1
      %p104 = scmp.eq.s32.totalorder %s20, 3
      %p105 = scmp.ne.s32.totalorder %s100, %s102
      %p106 = scmp.eq.s32.totalorder %s20, 0
      %p107 = por %p105, %p106
      %p108 = scmp.ne.s32.totalorder %s100, %s102
      %p109 = scmp.eq.s32.totalorder %s25, 3
      %p110 = por %p108, %p109
      %p111 = scmp.ne.s32.totalorder %s102, %s103
      %p112 = scmp.eq.s32.totalorder %s25, 0
      %p113 = por %p111, %p112
      %p114 = scmp.ne.s32.totalorder %s102, %s103
      %p115 = scmp.eq.s32.totalorder %s26, 3
      %p116 = por %p114, %p115
      %p118 = scmp.ne.s32.totalorder %s103, %s117
      %p119 = scmp.eq.s32.totalorder %s26, 0
      %p120 = por %p118, %p119
      %s122 = sadd.s32 %s121, 1
      %p125 = scmp.eq.s32.totalorder %s20, 3
      %p126 = scmp.ne.s32.totalorder %s121, %s123
      %p127 = scmp.eq.s32.totalorder %s20, 0
      %p128 = por %p126, %p127
      %p129 = scmp.ne.s32.totalorder %s121, %s123
      %p130 = scmp.eq.s32.totalorder %s25, 3
      %p131 = por %p129, %p130
      %p132 = scmp.ne.s32.totalorder %s123, %s124
      %p133 = scmp.eq.s32.totalorder %s25, 0
      %p134 = por %p132, %p133
      %p135 = scmp.ne.s32.totalorder %s123, %s124
      %p136 = scmp.eq.s32.totalorder %s26, 3
      %p137 = por %p135, %p136
      %p139 = scmp.ne.s32.totalorder %s124, %s138
      %p140 = scmp.eq.s32.totalorder %s26, 0
      %p141 = por %p139, %p140
      %s142 = ssub.s32 %s27, %s39
      %s143 = ssub.s32 %s28, %s35
      %s144 = sor.u32 %s142, %s143
      %p145 = scmp.eq.s32.totalorder %s144, 0
      %s147 = sadd.s32 %s146, 1
      %s148 = scalar_select %p145, %s146, %s147
      %p151 = pneg %p145
      %p152 = scmp.eq.s32.totalorder %s20, 3
      %p153 = por %p151, %p152
      %p154 = scmp.ne.s32.totalorder %s146, %s149
      %p155 = scmp.eq.s32.totalorder %s20, 0
      %p156 = por %p154, %p155
      %p157 = scmp.ne.s32.totalorder %s146, %s149
      %p158 = scmp.eq.s32.totalorder %s25, 3
      %p159 = por %p157, %p158
      %p160 = scmp.ne.s32.totalorder %s149, %s150
      %p161 = scmp.eq.s32.totalorder %s25, 0
      %p162 = por %p160, %p161
      %p163 = scmp.ne.s32.totalorder %s149, %s150
      %p164 = scmp.eq.s32.totalorder %s26, 3
      %p165 = por %p163, %p164
      %p167 = scmp.ne.s32.totalorder %s150, %s166
      %p168 = scmp.eq.s32.totalorder %s26, 0
      %p169 = por %p167, %p168
      %p170 = scmp.le.s32.totalorder 1, %s20
      %p171 = scmp.lt.s32.totalorder %s20, 5
      %p172 = pnand %p170, %p171
      %p173 = pneg %p172
      // Predicated region
      $region9: #{up_forward.2} parent=5 // pred_check
        _
      $region10: #{up_forward.2} parent=5 // pred_check_branch
        %175 = sbr.rel (%p172) target = $region12
      $region11: #{up_forward.2} parent=5 // pred_region
        %s176 = ssub.s32 %s20, 1
        // Predicated region
        $region13: #{up_forward.2} parent=11 // pred_check
          %p177 = pneg %p113
        $region14: #{up_forward.2} parent=11 // pred_check_branch
          %179 = sbr.rel (%p177) target = $region16
        $region15: #{up_forward.2} parent=11 // pred_region
          %s181 = ssub.s32 1024, 1024
          %182 = vsyncadd [#allocation6], %s181
          %s183 = sshll.u32 [#allocation7], 4
          %s184 = int_to_ptr.vmem [resolvable:$true] %s183
          %189 = dma.hbm_to_vmem [thread:$0]  %s2, 1024, %s184, [#allocation6], 128, 128, 8
        $region16: #{up_forward.2} parent=11 // pred_fallthru
          _
        // Predicated region
        $region17: #{up_forward.2} parent=11 // pred_check
          %p190 = pneg %p134
        $region18: #{up_forward.2} parent=11 // pred_check_branch
          %192 = sbr.rel (%p190) target = $region20
        $region19: #{up_forward.2} parent=11 // pred_region
          %s194 = ssub.s32 16, 16
          %195 = vsyncadd [#allocation9], %s194
          %s197 = sshll.u32 [#allocation8], 4
          %s198 = int_to_ptr.vmem [resolvable:$true] %s197
          %200 = dma.hbm_to_vmem [thread:$0]  %s3, 16, %s198, [#allocation9]
        $region20: #{up_forward.2} parent=11 // pred_fallthru
          _
      $region12: #{up_forward.2} parent=5 // pred_fallthru
        _
      %p201 = scmp.lt.s32.totalorder %s20, 4
      // Predicated region
      $region21: #{up_forward.2} parent=5 // pred_check
        %p202 = pneg %p201
      $region22: #{up_forward.2} parent=5 // pred_check_branch
        %204 = sbr.rel (%p202) target = $region24
      $region23: #{up_forward.2} parent=5 // pred_region
        // Predicated region
        $region25: #{up_forward.2} parent=23 // pred_check
          %p205 = pneg %p54
        $region26: #{up_forward.2} parent=23 // pred_check_branch
          %207 = sbr.rel (%p205) target = $region28
        $region27: #{up_forward.2} parent=23 // pred_region
          %s208 = sand.u32 %s44, 1
          %s209 = scalar_lea.sflag [#allocation3], %s208
          %s210 = sand.u32 %s44, 1
          %s211 = smul.addr %s210, 192
          %s212 = scalar_lea.vmem [#allocation2], %s211
          %s213 = smul.u32 8, %s28
          %s214 = ssub.s32 18, %s213
          %p215 = scmp.lt.s32.totalorder %s214, 8
          %s216 = scalar_select %p215, %s214, 8
          %s217 = smul.u32 128, %s216
          %s218 = smul.u32 %s217, 3
          %s220 = ssub.s32 3072, %s218
          %221 = vsyncadd %s209, %s220
          %p222 = scmp.ne.s32.totalorder 0, %s218
          %s223 = smul.addr %s213, 3
          %s224 = smul.addr %s27, 54
          %s225 = sadd.s32 %s223, %s224
          %s226 = smul.addr %s225, 128
          %s227 = scalar_lea.hbm %s0, %s226
          %s228 = smul.u32 %s216, 3
          %s229 = smul.u32 8, %s228
          %s230 = sshll.u32 %s212, 4
          %s231 = int_to_ptr.vmem [resolvable:$true] %s230
          %s232 = sshll.u32 %s229, 4
          %236 = dma.hbm_to_vmem [thread:$0]  (%p222), %s227, %s232, %s231, %s209, 128, 128, 8
        $region28: #{up_forward.2} parent=23 // pred_fallthru
          _
        // Predicated region
        $region29: #{up_forward.2} parent=23 // pred_check
          %p237 = pneg %p86
        $region30: #{up_forward.2} parent=23 // pred_check_branch
          %239 = sbr.rel (%p237) target = $region32
        $region31: #{up_forward.2} parent=23 // pred_region
          %s240 = sand.u32 %s20, 1
          %s241 = scalar_lea.sflag [#allocation6], %s240
          %s242 = sand.u32 %s76, 1
          %s243 = smul.addr %s242, 48
          %s244 = scalar_lea.vmem [#allocation5], %s243
          %s245 = smul.u32 %s28, 4
          %s246 = sadd.s32 %s245, 4
          %s247 = smul.u32 2, %s246
          %s249 = ssub.s32 768, 768
          %250 = vsyncadd %s241, %s249
          %s251 = smul.addr %s247, 3
          %s252 = smul.addr %s27, 54
          %s253 = sadd.s32 %s251, %s252
          %s254 = smul.addr %s253, 128
          %s255 = scalar_lea.hbm %s1, %s254
          %s256 = sshll.u32 %s244, 4
          %s257 = int_to_ptr.vmem [resolvable:$true] %s256
          %262 = dma.hbm_to_vmem [thread:$0]  %s255, 768, %s257, %s241, 128, 128, 8
        $region32: #{up_forward.2} parent=23 // pred_fallthru
          _
      $region24: #{up_forward.2} parent=5 // pred_fallthru
        _
      %p263 = scmp.le.s32.totalorder 1, %s20
      %p264 = scmp.lt.s32.totalorder %s20, 5
      %p265 = pnand %p263, %p264
      %p266 = pneg %p265
      // Predicated region
      $region33: #{up_forward.2} parent=5 // pred_check
        _
      $region34: #{up_forward.2} parent=5 // pred_check_branch
        %268 = sbr.rel (%p265) target = $region36
      $region35: #{up_forward.2} parent=5 // pred_region
        %s269 = ssub.s32 %s20, 1
        %s270 = sand.u32 %s47, 1
        %s271 = scalar_lea.sflag [#allocation3], %s270
        %s272 = sand.u32 %s47, 1
        %s273 = smul.addr %s272, 192
        %s274 = scalar_lea.vmem [#allocation2], %s273
        // Predicated region
        $region37: #{up_forward.2} parent=35 // pred_check
          %p275 = pneg %p60
        $region38: #{up_forward.2} parent=35 // pred_check_branch
          %277 = sbr.rel (%p275) target = $region40
        $region39: #{up_forward.2} parent=35 // pred_region
          %278 = dma.done %s271, 3072
        $region40: #{up_forward.2} parent=35 // pred_fallthru
          _
        %s279 = sand.u32 %s25, 1
        %s280 = scalar_lea.sflag [#allocation6], %s279
        %s281 = sand.u32 %s79, 1
        %s282 = smul.addr %s281, 48
        %s283 = scalar_lea.vmem [#allocation5], %s282
        // Predicated region
        $region41: #{up_forward.2} parent=35 // pred_check
          %p284 = pneg %p92
        $region42: #{up_forward.2} parent=35 // pred_check_branch
          %286 = sbr.rel (%p284) target = $region44
        $region43: #{up_forward.2} parent=35 // pred_region
          %287 = dma.done %s280, 768
        $region44: #{up_forward.2} parent=35 // pred_fallthru
          _
        // Predicated region
        $region45: #{up_forward.2} parent=35 // pred_check
          %p288 = pneg %p113
        $region46: #{up_forward.2} parent=35 // pred_check_branch
          %290 = sbr.rel (%p288) target = $region48
        $region47: #{up_forward.2} parent=35 // pred_region
          %291 = dma.done [#allocation6], 1024
        $region48: #{up_forward.2} parent=35 // pred_fallthru
          _
        // Predicated region
        $region49: #{up_forward.2} parent=35 // pred_check
          %p292 = pneg %p134
        $region50: #{up_forward.2} parent=35 // pred_check_branch
          %294 = sbr.rel (%p292) target = $region52
        $region51: #{up_forward.2} parent=35 // pred_region
          %295 = dma.done [#allocation9], 16
        $region52: #{up_forward.2} parent=35 // pred_fallthru
          _
        %s296 = sand.u32 %s47, 1
        %s297 = scalar_lea.sflag [#allocation3], %s296
        %s298 = sand.u32 %s47, 1
        %s299 = smul.addr %s298, 192
        %s300 = scalar_lea.vmem [#allocation2], %s299
        %p301 = pneg %p60
        %p302 = pneg %p57
        %s303 = sand.u32 %s25, 1
        %s304 = scalar_lea.sflag [#allocation6], %s303
        %s305 = sand.u32 %s79, 1
        %s306 = smul.addr %s305, 48
        %s307 = scalar_lea.vmem [#allocation5], %s306
        %p308 = pneg %p92
        %p309 = pneg %p89
        %p310 = pneg %p113
        %p311 = pneg %p110
        %p312 = pneg %p134
        %p313 = pneg %p131
        %p314 = pneg %p162
        %p315 = pneg %p159
        %s316 = sand.u32 %s149, 1
        %s317 = scalar_lea.sflag [#allocation4], %s316
        %s318 = sand.u32 %s149, 1
        %s319 = smul.addr %s318, 128
        %s320 = scalar_lea.vmem [#allocation10], %s319
        %s321 = smul.u32 8, %s30
        %s322 = ssub.s32 18, %s321
        %p323 = scmp.lt.s32.totalorder %s322, 8
        %s324 = scalar_select %p323, %s322, 8
        %s325 = smul.u32 128, %s324
        %s326 = smul.u32 %s325, 3
        %s327 = smul.u32 %s30, 4
        %s328 = sadd.s32 %s327, 4
        %s329 = smul.u32 2, %s328
        %s330 = smul.u32 16, %s30
        %v331 = vld [vmem:[%s274] sm:$0xff]
        %v332 = vld [vmem:[%s274 + $0x8] sm:$0xff]
        %v333 = vld [vmem:[%s274 + $0x10] sm:$0x3]
        %v334 = vld [vmem:[%s274 + $0x18] sm:$0xff]
        %v335 = vld [vmem:[%s274 + $0x20] sm:$0xff]
        %v336 = vld [vmem:[%s274 + $0x28] sm:$0x3]
        %v337 = vld [vmem:[%s274 + $0x30] sm:$0xff]
        %v338 = vld [vmem:[%s274 + $0x38] sm:$0xff]
        %v339 = vld [vmem:[%s274 + $0x40] sm:$0x3]
        %v340 = vld [vmem:[%s274 + $0x48] sm:$0xff]
        %v341 = vld [vmem:[%s274 + $0x50] sm:$0xff]
        %v342 = vld [vmem:[%s274 + $0x58] sm:$0x3]
        %v343 = vld [vmem:[%s274 + $0x60] sm:$0xff]
        %v344 = vld [vmem:[%s274 + $0x68] sm:$0xff]
        %v345 = vld [vmem:[%s274 + $0x70] sm:$0x3]
        %v346 = vld [vmem:[%s274 + $0x78] sm:$0xff]
        %v347 = vld [vmem:[%s274 + $0x80] sm:$0xff]
        %v348 = vld [vmem:[%s274 + $0x88] sm:$0x3]
        %v349 = vld [vmem:[%s274 + $0x90] sm:$0xff]
        %v350 = vld [vmem:[%s274 + $0x98] sm:$0xff]
        %v351 = vld [vmem:[%s274 + $0xa0] sm:$0x3]
        %v352 = vld [vmem:[%s274 + $0xa8] sm:$0xff]
        %v353 = vld [vmem:[%s274 + $0xb0] sm:$0xff]
        %v354 = vld [vmem:[%s274 + $0xb8] sm:$0x3]
        %v355 = vld [vmem:[%s283] sm:$0xff]
        %v356 = vld [vmem:[%s283 + $0x8] sm:$0xff]
        %v357 = vld [vmem:[%s283 + $0x10] sm:$0x3]
        %v358 = vld [vmem:[%s283 + $0x18] sm:$0xff]
        %v359 = vld [vmem:[%s283 + $0x20] sm:$0xff]
        %v360 = vld [vmem:[%s283 + $0x28] sm:$0x3]
        %vm385 = vcmask 1046528
        %v386 = vrot.slane %v331, 1
        %v387 = vrot.slane %v332, 1
        %v388 = vsel %vm385, %v386, %v387
        %v389 = vrot.slane %v333, 1
        %v390 = vsel %vm385, %v387, %v389
        %v391 = vrot.slane %v334, 1
        %v392 = vrot.slane %v335, 1
        %v393 = vsel %vm385, %v391, %v392
        %v394 = vrot.slane %v336, 1
        %v395 = vsel %vm385, %v392, %v394
        %v396 = vrot.slane %v337, 1
        %v397 = vrot.slane %v338, 1
        %v398 = vsel %vm385, %v396, %v397
        %v399 = vrot.slane %v339, 1
        %v400 = vsel %vm385, %v397, %v399
        %v401 = vrot.slane %v340, 1
        %v402 = vrot.slane %v341, 1
        %v403 = vsel %vm385, %v401, %v402
        %v404 = vrot.slane %v342, 1
        %v405 = vsel %vm385, %v402, %v404
        %v406 = vrot.slane %v343, 1
        %v407 = vrot.slane %v344, 1
        %v408 = vsel %vm385, %v406, %v407
        %v409 = vrot.slane %v345, 1
        %v410 = vsel %vm385, %v407, %v409
        %v411 = vrot.slane %v346, 1
        %v412 = vrot.slane %v347, 1
        %v413 = vsel %vm385, %v411, %v412
        %v414 = vrot.slane %v348, 1
        %v415 = vsel %vm385, %v412, %v414
        %v416 = vrot.slane %v349, 1
        %v417 = vrot.slane %v350, 1
        %v418 = vsel %vm385, %v416, %v417
        %v419 = vrot.slane %v351, 1
        %v420 = vsel %vm385, %v417, %v419
        %v421 = vrot.slane %v352, 1
        %v422 = vrot.slane %v353, 1
        %v423 = vsel %vm385, %v421, %v422
        %v424 = vrot.slane %v354, 1
        %v425 = vsel %vm385, %v422, %v424
        %vm442 = vcmask 1045504
        %v443 = vrot.slane %v331, 2
        %v444 = vrot.slane %v332, 2
        %v445 = vsel %vm442, %v443, %v444
        %v446 = vrot.slane %v333, 2
        %v447 = vsel %vm442, %v444, %v446
        %v448 = vrot.slane %v334, 2
        %v449 = vrot.slane %v335, 2
        %v450 = vsel %vm442, %v448, %v449
        %v451 = vrot.slane %v336, 2
        %v452 = vsel %vm442, %v449, %v451
        %v453 = vrot.slane %v337, 2
        %v454 = vrot.slane %v338, 2
        %v455 = vsel %vm442, %v453, %v454
        %v456 = vrot.slane %v339, 2
        %v457 = vsel %vm442, %v454, %v456
        %v458 = vrot.slane %v340, 2
        %v459 = vrot.slane %v341, 2
        %v460 = vsel %vm442, %v458, %v459
        %v461 = vrot.slane %v342, 2
        %v462 = vsel %vm442, %v459, %v461
        %v463 = vrot.slane %v343, 2
        %v464 = vrot.slane %v344, 2
        %v465 = vsel %vm442, %v463, %v464
        %v466 = vrot.slane %v345, 2
        %v467 = vsel %vm442, %v464, %v466
        %v468 = vrot.slane %v346, 2
        %v469 = vrot.slane %v347, 2
        %v470 = vsel %vm442, %v468, %v469
        %v471 = vrot.slane %v348, 2
        %v472 = vsel %vm442, %v469, %v471
        %v473 = vrot.slane %v349, 2
        %v474 = vrot.slane %v350, 2
        %v475 = vsel %vm442, %v473, %v474
        %v476 = vrot.slane %v351, 2
        %v477 = vsel %vm442, %v474, %v476
        %v478 = vrot.slane %v352, 2
        %v479 = vrot.slane %v353, 2
        %v480 = vsel %vm442, %v478, %v479
        %v481 = vrot.slane %v354, 2
        %v482 = vsel %vm442, %v479, %v481
        %v486 = vrot.slane %v355, 1
        %v487 = vrot.slane %v356, 1
        %v488 = vsel %vm385, %v486, %v487
        %v489 = vrot.slane %v357, 1
        %v490 = vsel %vm385, %v487, %v489
        %v493 = vrot.slane %v355, 2
        %v494 = vrot.slane %v356, 2
        %v495 = vsel %vm442, %v493, %v494
        %v496 = vrot.slane %v357, 2
        %v497 = vsel %vm442, %v494, %v496
        %v501 = vrot.slane %v358, 1
        %v502 = vrot.slane %v359, 1
        %v503 = vsel %vm385, %v501, %v502
        %v504 = vrot.slane %v360, 1
        %v505 = vsel %vm385, %v502, %v504
        %v506 = vrot.slane %v358, 2
        %v507 = vrot.slane %v359, 2
        %v508 = vsel %vm442, %v506, %v507
        %v509 = vrot.slane %v360, 2
        %v510 = vsel %vm442, %v507, %v509
        %511 = vrot.lane.b32.xlu0 %v388, 4
        %v512 = vpop.permute.xlu0 %511
        %513 = vrot.lane.b32.xlu0 %v390, 4
        %v514 = vpop.permute.xlu0 %513
        %515 = vrot.lane.b32.xlu0 %v393, 4
        %v516 = vpop.permute.xlu0 %515
        %517 = vrot.lane.b32.xlu0 %v395, 4
        %v518 = vpop.permute.xlu0 %517
        %519 = vrot.lane.b32.xlu0 %v398, 4
        %v520 = vpop.permute.xlu0 %519
        %521 = vrot.lane.b32.xlu0 %v400, 4
        %v522 = vpop.permute.xlu0 %521
        %523 = vrot.lane.b32.xlu0 %v403, 4
        %v524 = vpop.permute.xlu0 %523
        %525 = vrot.lane.b32.xlu0 %v405, 4
        %v526 = vpop.permute.xlu0 %525
        %527 = vrot.lane.b32.xlu0 %v408, 4
        %v528 = vpop.permute.xlu0 %527
        %529 = vrot.lane.b32.xlu0 %v410, 4
        %v530 = vpop.permute.xlu0 %529
        %531 = vrot.lane.b32.xlu0 %v413, 4
        %v532 = vpop.permute.xlu0 %531
        %533 = vrot.lane.b32.xlu0 %v415, 4
        %v534 = vpop.permute.xlu0 %533
        %535 = vrot.lane.b32.xlu0 %v418, 4
        %v536 = vpop.permute.xlu0 %535
        %537 = vrot.lane.b32.xlu0 %v420, 4
        %v538 = vpop.permute.xlu0 %537
        %539 = vrot.lane.b32.xlu0 %v423, 4
        %v540 = vpop.permute.xlu0 %539
        %541 = vrot.lane.b32.xlu0 %v425, 4
        %v542 = vpop.permute.xlu0 %541
        %559 = vrot.lane.b32.xlu0 %v334, 8
        %v560 = vpop.permute.xlu0 %559
        %561 = vrot.lane.b32.xlu0 %v335, 8
        %v562 = vpop.permute.xlu0 %561
        %563 = vrot.lane.b32.xlu0 %v337, 8
        %v564 = vpop.permute.xlu0 %563
        %565 = vrot.lane.b32.xlu0 %v338, 8
        %v566 = vpop.permute.xlu0 %565
        %567 = vrot.lane.b32.xlu0 %v340, 8
        %v568 = vpop.permute.xlu0 %567
        %569 = vrot.lane.b32.xlu0 %v341, 8
        %v570 = vpop.permute.xlu0 %569
        %571 = vrot.lane.b32.xlu0 %v343, 8
        %v572 = vpop.permute.xlu0 %571
        %573 = vrot.lane.b32.xlu0 %v344, 8
        %v574 = vpop.permute.xlu0 %573
        %575 = vrot.lane.b32.xlu0 %v346, 8
        %v576 = vpop.permute.xlu0 %575
        %577 = vrot.lane.b32.xlu0 %v347, 8
        %v578 = vpop.permute.xlu0 %577
        %579 = vrot.lane.b32.xlu0 %v349, 8
        %v580 = vpop.permute.xlu0 %579
        %581 = vrot.lane.b32.xlu0 %v350, 8
        %v582 = vpop.permute.xlu0 %581
        %583 = vrot.lane.b32.xlu0 %v352, 8
        %v584 = vpop.permute.xlu0 %583
        %585 = vrot.lane.b32.xlu0 %v353, 8
        %v586 = vpop.permute.xlu0 %585
        %587 = vrot.lane.b32.xlu0 %v355, 8
        %v588 = vpop.permute.xlu0 %587
        %589 = vrot.lane.b32.xlu0 %v356, 8
        %v590 = vpop.permute.xlu0 %589
        %607 = vrot.lane.b32.xlu0 %v393, 12
        %v608 = vpop.permute.xlu0 %607
        %609 = vrot.lane.b32.xlu0 %v395, 12
        %v610 = vpop.permute.xlu0 %609
        %611 = vrot.lane.b32.xlu0 %v398, 12
        %v612 = vpop.permute.xlu0 %611
        %613 = vrot.lane.b32.xlu0 %v400, 12
        %v614 = vpop.permute.xlu0 %613
        %615 = vrot.lane.b32.xlu0 %v403, 12
        %v616 = vpop.permute.xlu0 %615
        %617 = vrot.lane.b32.xlu0 %v405, 12
        %v618 = vpop.permute.xlu0 %617
        %619 = vrot.lane.b32.xlu0 %v408, 12
        %v620 = vpop.permute.xlu0 %619
        %621 = vrot.lane.b32.xlu0 %v410, 12
        %v622 = vpop.permute.xlu0 %621
        %623 = vrot.lane.b32.xlu0 %v413, 12
        %v624 = vpop.permute.xlu0 %623
        %625 = vrot.lane.b32.xlu0 %v415, 12
        %v626 = vpop.permute.xlu0 %625
        %627 = vrot.lane.b32.xlu0 %v418, 12
        %v628 = vpop.permute.xlu0 %627
        %629 = vrot.lane.b32.xlu0 %v420, 12
        %v630 = vpop.permute.xlu0 %629
        %631 = vrot.lane.b32.xlu0 %v423, 12
        %v632 = vpop.permute.xlu0 %631
        %633 = vrot.lane.b32.xlu0 %v425, 12
        %v634 = vpop.permute.xlu0 %633
        %635 = vrot.lane.b32.xlu0 %v488, 12
        %v636 = vpop.permute.xlu0 %635
        %637 = vrot.lane.b32.xlu0 %v490, 12
        %v638 = vpop.permute.xlu0 %637
        %vm655 = vcmask 31744
        %v656 = vsel %vm655, %v331, %v512
        %v657 = vsel %vm655, %v332, %v514
        %v658 = vsel %vm655, %v334, %v516
        %v659 = vsel %vm655, %v335, %v518
        %v660 = vsel %vm655, %v337, %v520
        %v661 = vsel %vm655, %v338, %v522
        %v662 = vsel %vm655, %v340, %v524
        %v663 = vsel %vm655, %v341, %v526
        %v664 = vsel %vm655, %v343, %v528
        %v665 = vsel %vm655, %v344, %v530
        %v666 = vsel %vm655, %v346, %v532
        %v667 = vsel %vm655, %v347, %v534
        %v668 = vsel %vm655, %v349, %v536
        %v669 = vsel %vm655, %v350, %v538
        %v670 = vsel %vm655, %v352, %v540
        %v671 = vsel %vm655, %v353, %v542
        %vm672 = vcmask 64512
        %v673 = vsel %vm672, %v656, %v560
        %v674 = vsel %vm672, %v657, %v562
        %v675 = vsel %vm672, %v658, %v564
        %v676 = vsel %vm672, %v659, %v566
        %v677 = vsel %vm672, %v660, %v568
        %v678 = vsel %vm672, %v661, %v570
        %v679 = vsel %vm672, %v662, %v572
        %v680 = vsel %vm672, %v663, %v574
        %v681 = vsel %vm672, %v664, %v576
        %v682 = vsel %vm672, %v665, %v578
        %v683 = vsel %vm672, %v666, %v580
        %v684 = vsel %vm672, %v667, %v582
        %v685 = vsel %vm672, %v668, %v584
        %v686 = vsel %vm672, %v669, %v586
        %v687 = vsel %vm672, %v670, %v588
        %v688 = vsel %vm672, %v671, %v590
        %vm689 = vcmask 97280
        %v690 = vsel %vm689, %v673, %v608
        %v691 = vsel %vm689, %v674, %v610
        %v692 = vsel %vm689, %v675, %v612
        %v693 = vsel %vm689, %v676, %v614
        %v694 = vsel %vm689, %v677, %v616
        %v695 = vsel %vm689, %v678, %v618
        %v696 = vsel %vm689, %v679, %v620
        %v697 = vsel %vm689, %v680, %v622
        %v698 = vsel %vm689, %v681, %v624
        %v699 = vsel %vm689, %v682, %v626
        %v700 = vsel %vm689, %v683, %v628
        %v701 = vsel %vm689, %v684, %v630
        %v702 = vsel %vm689, %v685, %v632
        %v703 = vsel %vm689, %v686, %v634
        %v704 = vsel %vm689, %v687, %v636
        %v705 = vsel %vm689, %v688, %v638
        %v706 = vld [vmem:[#allocation7] sm:$0xff]
        %v707 = vld [vmem:[#allocation7 + $0x8] sm:$0xff]
        %v708 = vld [vmem:[#allocation8] sm:$0x1]
        %v710 = vlaneseq
        %v711 = vshrl.u32 %v710, 7
        %v712 = vsub.s32 0, %v711
        %v713 = vrot.slane %v708, %v712
        %vm715 = vcmask 130048
        %v717 = vsel %vm715, %v690, 0
        %v720 = vsel %vm715, %v691, 0
        %v723 = vsel %vm715, %v692, 0
        %v726 = vsel %vm715, %v693, 0
        %v729 = vsel %vm715, %v694, 0
        %v732 = vsel %vm715, %v695, 0
        %v735 = vsel %vm715, %v696, 0
        %v738 = vsel %vm715, %v697, 0
        %v741 = vsel %vm715, %v698, 0
        %v744 = vsel %vm715, %v699, 0
        %v747 = vsel %vm715, %v700, 0
        %v750 = vsel %vm715, %v701, 0
        %v753 = vsel %vm715, %v702, 0
        %v756 = vsel %vm715, %v703, 0
        %v759 = vsel %vm715, %v704, 0
        %v762 = vsel %vm715, %v705, 0
        %764 = vmatprep.subr.mxu0 0.0
        %765 = vmatpush1.msra.mxu0 %v706
        %766 = vmatprep.subr.mxu0 0.0
        %767 = vmatpush1.msra.mxu0 %v707
        %768 = vmatprep.subr.mxu0 0.0
        %769 = vmatpush1.msra.mxu0 0.0
        %770 = vmatprep.subr.mxu0 0.0
        %771 = vmatpush1.msra.mxu0 0.0
        %772 = vmatprep.subr.mxu0 0.0
        %773 = vmatpush1.msra.mxu0 0.0
        %774 = vmatprep.subr.mxu0 0.0
        %775 = vmatpush1.msra.mxu0 0.0
        %776 = vmatprep.subr.mxu0 0.0
        %777 = vmatpush1.msra.mxu0 0.0
        %778 = vmatprep.subr.mxu0 0.0
        %779 = vmatpush1.msra.mxu0 0.0
        %780 = vmatprep.subr.mxu0 0.0
        %781 = vmatpush1.msra.mxu0 0.0
        %782 = vmatprep.subr.mxu0 0.0
        %783 = vmatpush1.msra.mxu0 0.0
        %784 = vmatprep.subr.mxu0 0.0
        %785 = vmatpush1.msra.mxu0 0.0
        %786 = vmatprep.subr.mxu0 0.0
        %787 = vmatpush1.msra.mxu0 0.0
        %788 = vmatprep.subr.mxu0 0.0
        %789 = vmatpush1.msra.mxu0 0.0
        %790 = vmatprep.subr.mxu0 0.0
        %791 = vmatpush1.msra.mxu0 0.0
        %792 = vmatprep.subr.mxu0 0.0
        %793 = vmatpush1.msra.mxu0 0.0
        %794 = vmatprep.subr.mxu0 0.0
        %795 = vmatpush1.msra.mxu0 0.0
        %796 = vmatprep.subr.mxu0 0.0
        %797 = vmatpush1.msra.mxu0 0.0
        %798 = vmatprep.subr.mxu0 0.0
        %799 = vmatpush1.msra.mxu0 0.0
        %800 = vmatprep.subr.mxu0 0.0
        %801 = vmatpush1.msra.mxu0 0.0
        %802 = vmatprep.subr.mxu0 0.0
        %803 = vmatpush1.msra.mxu0 0.0
        %804 = vmatprep.subr.mxu0 0.0
        %805 = vmatpush1.msra.mxu0 0.0
        %806 = vmatprep.subr.mxu0 0.0
        %807 = vmatpush1.msra.mxu0 0.0
        %808 = vmatprep.subr.mxu0 0.0
        %809 = vmatpush1.msra.mxu0 0.0
        %810 = vmatprep.subr.mxu0 0.0
        %811 = vmatpush1.msra.mxu0 0.0
        %812 = vmatprep.subr.mxu0 0.0
        %813 = vmatpush1.msra.mxu0 0.0
        %814 = vmatprep.subr.mxu0 0.0
        %815 = vmatpush1.msra.mxu0 0.0
        %816 = vmatprep.subr.mxu0 0.0
        %817 = vmatpush1.msra.mxu0 0.0
        %818 = vmatprep.subr.mxu0 0.0
        %819 = vmatpush1.msra.mxu0 0.0
        %820 = vmatprep.subr.mxu0 0.0
        %821 = vmatpush1.msra.mxu0 0.0
        %822 = vmatprep.subr.mxu0 0.0
        %823 = vmatpush1.msra.mxu0 0.0
        %824 = vmatprep.subr.mxu0 0.0
        %825 = vmatpush1.msra.mxu0 0.0
        %826 = vmatprep.subr.mxu0 0.0
        %827 = vmatpush1.msra.mxu0 0.0
        %828 = vmatprep.mubr.f32.mxu0 0.0
        %829 = vmatmul.mubr.f32.gmra.mrb[0].mxu0 %v717
        %v830 = vpop.f32.mrb[0].mxu0
        %v831 = vadd.f32 %v713, %v830
        %v832 = vpop.f32.mrb[0].mxu0
        %833 = vmatprep.mubr.f32.mxu0 0.0
        %834 = vmatmul.mubr.f32.gmra.mrb[0].mxu0 %v720
        %v835 = vpop.f32.mrb[0].mxu0
        %v836 = vadd.f32 %v713, %v835
        %v837 = vpop.f32.mrb[0].mxu0
        %838 = vmatprep.mubr.f32.mxu0 0.0
        %839 = vmatmul.mubr.f32.gmra.mrb[0].mxu0 %v723
        %v840 = vpop.f32.mrb[0].mxu0
        %v841 = vadd.f32 %v713, %v840
        %v842 = vpop.f32.mrb[0].mxu0
        %843 = vmatprep.mubr.f32.mxu0 0.0
        %844 = vmatmul.mubr.f32.gmra.mrb[0].mxu0 %v726
        %v845 = vpop.f32.mrb[0].mxu0
        %v846 = vadd.f32 %v713, %v845
        %v847 = vpop.f32.mrb[0].mxu0
        %848 = vmatprep.mubr.f32.mxu0 0.0
        %849 = vmatmul.mubr.f32.gmra.mrb[0].mxu0 %v729
        %v850 = vpop.f32.mrb[0].mxu0
        %v851 = vadd.f32 %v713, %v850
        %v852 = vpop.f32.mrb[0].mxu0
        %853 = vmatprep.mubr.f32.mxu0 0.0
        %854 = vmatmul.mubr.f32.gmra.mrb[0].mxu0 %v732
        %v855 = vpop.f32.mrb[0].mxu0
        %v856 = vadd.f32 %v713, %v855
        %v857 = vpop.f32.mrb[0].mxu0
        %858 = vmatprep.mubr.f32.mxu0 0.0
        %859 = vmatmul.mubr.f32.gmra.mrb[0].mxu0 %v735
        %v860 = vpop.f32.mrb[0].mxu0
        %v861 = vadd.f32 %v713, %v860
        %v862 = vpop.f32.mrb[0].mxu0
        %863 = vmatprep.mubr.f32.mxu0 0.0
        %864 = vmatmul.mubr.f32.gmra.mrb[0].mxu0 %v738
        %v865 = vpop.f32.mrb[0].mxu0
        %v866 = vadd.f32 %v713, %v865
        %v867 = vpop.f32.mrb[0].mxu0
        %868 = vmatprep.mubr.f32.mxu0 0.0
        %869 = vmatmul.mubr.f32.gmra.mrb[0].mxu0 %v741
        %v870 = vpop.f32.mrb[0].mxu0
        %v871 = vadd.f32 %v713, %v870
        %v872 = vpop.f32.mrb[0].mxu0
        %873 = vmatprep.mubr.f32.mxu0 0.0
        %874 = vmatmul.mubr.f32.gmra.mrb[0].mxu0 %v744
        %v875 = vpop.f32.mrb[0].mxu0
        %v876 = vadd.f32 %v713, %v875
        %v877 = vpop.f32.mrb[0].mxu0
        %878 = vmatprep.mubr.f32.mxu0 0.0
        %879 = vmatmul.mubr.f32.gmra.mrb[0].mxu0 %v747
        %v880 = vpop.f32.mrb[0].mxu0
        %v881 = vadd.f32 %v713, %v880
        %v882 = vpop.f32.mrb[0].mxu0
        %883 = vmatprep.mubr.f32.mxu0 0.0
        %884 = vmatmul.mubr.f32.gmra.mrb[0].mxu0 %v750
        %v885 = vpop.f32.mrb[0].mxu0
        %v886 = vadd.f32 %v713, %v885
        %v887 = vpop.f32.mrb[0].mxu0
        %888 = vmatprep.mubr.f32.mxu0 0.0
        %889 = vmatmul.mubr.f32.gmra.mrb[0].mxu0 %v753
        %v890 = vpop.f32.mrb[0].mxu0
        %v891 = vadd.f32 %v713, %v890
        %v892 = vpop.f32.mrb[0].mxu0
        %893 = vmatprep.mubr.f32.mxu0 0.0
        %894 = vmatmul.mubr.f32.gmra.mrb[0].mxu0 %v756
        %v895 = vpop.f32.mrb[0].mxu0
        %v896 = vadd.f32 %v713, %v895
        %v897 = vpop.f32.mrb[0].mxu0
        %898 = vmatprep.mubr.f32.mxu0 0.0
        %899 = vmatmul.mubr.f32.gmra.mrb[0].mxu0 %v759
        %v900 = vpop.f32.mrb[0].mxu0
        %v901 = vadd.f32 %v713, %v900
        %v902 = vpop.f32.mrb[0].mxu0
        %903 = vmatprep.mubr.f32.mxu0 0.0
        %904 = vmatmul.mubr.f32.gmra.mrb[0].mxu0 %v762
        %v905 = vpop.f32.mrb[0].mxu0
        %v906 = vadd.f32 %v713, %v905
        %v907 = vpop.f32.mrb[0].mxu0
        %908 = vdwg.mxu0
        %v909 = vmax.f32 %v831, 0.0
        %v910 = vmax.f32 %v836, 0.0
        %v911 = vmax.f32 %v841, 0.0
        %v912 = vmax.f32 %v846, 0.0
        %v913 = vmax.f32 %v851, 0.0
        %v914 = vmax.f32 %v856, 0.0
        %v915 = vmax.f32 %v861, 0.0
        %v916 = vmax.f32 %v866, 0.0
        %v917 = vmax.f32 %v871, 0.0
        %v918 = vmax.f32 %v876, 0.0
        %v919 = vmax.f32 %v881, 0.0
        %v920 = vmax.f32 %v886, 0.0
        %v921 = vmax.f32 %v891, 0.0
        %v922 = vmax.f32 %v896, 0.0
        %v923 = vmax.f32 %v901, 0.0
        %v924 = vmax.f32 %v906, 0.0
        %925 = vrot.lane.b32.xlu0 %v445, 4
        %v926 = vpop.permute.xlu0 %925
        %927 = vrot.lane.b32.xlu0 %v447, 4
        %v928 = vpop.permute.xlu0 %927
        %929 = vrot.lane.b32.xlu0 %v450, 4
        %v930 = vpop.permute.xlu0 %929
        %931 = vrot.lane.b32.xlu0 %v452, 4
        %v932 = vpop.permute.xlu0 %931
        %933 = vrot.lane.b32.xlu0 %v455, 4
        %v934 = vpop.permute.xlu0 %933
        %935 = vrot.lane.b32.xlu0 %v457, 4
        %v936 = vpop.permute.xlu0 %935
        %937 = vrot.lane.b32.xlu0 %v460, 4
        %v938 = vpop.permute.xlu0 %937
        %939 = vrot.lane.b32.xlu0 %v462, 4
        %v940 = vpop.permute.xlu0 %939
        %941 = vrot.lane.b32.xlu0 %v465, 4
        %v942 = vpop.permute.xlu0 %941
        %943 = vrot.lane.b32.xlu0 %v467, 4
        %v944 = vpop.permute.xlu0 %943
        %945 = vrot.lane.b32.xlu0 %v470, 4
        %v946 = vpop.permute.xlu0 %945
        %947 = vrot.lane.b32.xlu0 %v472, 4
        %v948 = vpop.permute.xlu0 %947
        %949 = vrot.lane.b32.xlu0 %v475, 4
        %v950 = vpop.permute.xlu0 %949
        %951 = vrot.lane.b32.xlu0 %v477, 4
        %v952 = vpop.permute.xlu0 %951
        %953 = vrot.lane.b32.xlu0 %v480, 4
        %v954 = vpop.permute.xlu0 %953
        %955 = vrot.lane.b32.xlu0 %v482, 4
        %v956 = vpop.permute.xlu0 %955
        %973 = vrot.lane.b32.xlu0 %v393, 8
        %v974 = vpop.permute.xlu0 %973
        %975 = vrot.lane.b32.xlu0 %v395, 8
        %v976 = vpop.permute.xlu0 %975
        %977 = vrot.lane.b32.xlu0 %v398, 8
        %v978 = vpop.permute.xlu0 %977
        %979 = vrot.lane.b32.xlu0 %v400, 8
        %v980 = vpop.permute.xlu0 %979
        %981 = vrot.lane.b32.xlu0 %v403, 8
        %v982 = vpop.permute.xlu0 %981
        %983 = vrot.lane.b32.xlu0 %v405, 8
        %v984 = vpop.permute.xlu0 %983
        %985 = vrot.lane.b32.xlu0 %v408, 8
        %v986 = vpop.permute.xlu0 %985
        %987 = vrot.lane.b32.xlu0 %v410, 8
        %v988 = vpop.permute.xlu0 %987
        %989 = vrot.lane.b32.xlu0 %v413, 8
        %v990 = vpop.permute.xlu0 %989
        %991 = vrot.lane.b32.xlu0 %v415, 8
        %v992 = vpop.permute.xlu0 %991
        %993 = vrot.lane.b32.xlu0 %v418, 8
        %v994 = vpop.permute.xlu0 %993
        %995 = vrot.lane.b32.xlu0 %v420, 8
        %v996 = vpop.permute.xlu0 %995
        %997 = vrot.lane.b32.xlu0 %v423, 8
        %v998 = vpop.permute.xlu0 %997
        %999 = vrot.lane.b32.xlu0 %v425, 8
        %v1000 = vpop.permute.xlu0 %999
        %1001 = vrot.lane.b32.xlu0 %v488, 8
        %v1002 = vpop.permute.xlu0 %1001
        %1003 = vrot.lane.b32.xlu0 %v490, 8
        %v1004 = vpop.permute.xlu0 %1003
        %1021 = vrot.lane.b32.xlu0 %v450, 12
        %v1022 = vpop.permute.xlu0 %1021
        %1023 = vrot.lane.b32.xlu0 %v452, 12
        %v1024 = vpop.permute.xlu0 %1023
        %1025 = vrot.lane.b32.xlu0 %v455, 12
        %v1026 = vpop.permute.xlu0 %1025
        %1027 = vrot.lane.b32.xlu0 %v457, 12
        %v1028 = vpop.permute.xlu0 %1027
        %1029 = vrot.lane.b32.xlu0 %v460, 12
        %v1030 = vpop.permute.xlu0 %1029
        %1031 = vrot.lane.b32.xlu0 %v462, 12
        %v1032 = vpop.permute.xlu0 %1031
        %1033 = vrot.lane.b32.xlu0 %v465, 12
        %v1034 = vpop.permute.xlu0 %1033
        %1035 = vrot.lane.b32.xlu0 %v467, 12
        %v1036 = vpop.permute.xlu0 %1035
        %1037 = vrot.lane.b32.xlu0 %v470, 12
        %v1038 = vpop.permute.xlu0 %1037
        %1039 = vrot.lane.b32.xlu0 %v472, 12
        %v1040 = vpop.permute.xlu0 %1039
        %1041 = vrot.lane.b32.xlu0 %v475, 12
        %v1042 = vpop.permute.xlu0 %1041
        %1043 = vrot.lane.b32.xlu0 %v477, 12
        %v1044 = vpop.permute.xlu0 %1043
        %1045 = vrot.lane.b32.xlu0 %v480, 12
        %v1046 = vpop.permute.xlu0 %1045
        %1047 = vrot.lane.b32.xlu0 %v482, 12
        %v1048 = vpop.permute.xlu0 %1047
        %1049 = vrot.lane.b32.xlu0 %v495, 12
        %v1050 = vpop.permute.xlu0 %1049
        %1051 = vrot.lane.b32.xlu0 %v497, 12
        %v1052 = vpop.permute.xlu0 %1051
        %v1069 = vsel %vm655, %v388, %v926
        %v1070 = vsel %vm655, %v390, %v928
        %v1071 = vsel %vm655, %v393, %v930
        %v1072 = vsel %vm655, %v395, %v932
        %v1073 = vsel %vm655, %v398, %v934
        %v1074 = vsel %vm655, %v400, %v936
        %v1075 = vsel %vm655, %v403, %v938
        %v1076 = vsel %vm655, %v405, %v940
        %v1077 = vsel %vm655, %v408, %v942
        %v1078 = vsel %vm655, %v410, %v944
        %v1079 = vsel %vm655, %v413, %v946
        %v1080 = vsel %vm655, %v415, %v948
        %v1081 = vsel %vm655, %v418, %v950
        %v1082 = vsel %vm655, %v420, %v952
        %v1083 = vsel %vm655, %v423, %v954
        %v1084 = vsel %vm655, %v425, %v956
        %v1085 = vsel %vm672, %v1069, %v974
        %v1086 = vsel %vm672, %v1070, %v976
        %v1087 = vsel %vm672, %v1071, %v978
        %v1088 = vsel %vm672, %v1072, %v980
        %v1089 = vsel %vm672, %v1073, %v982
        %v1090 = vsel %vm672, %v1074, %v984
        %v1091 = vsel %vm672, %v1075, %v986
        %v1092 = vsel %vm672, %v1076, %v988
        %v1093 = vsel %vm672, %v1077, %v990
        %v1094 = vsel %vm672, %v1078, %v992
        %v1095 = vsel %vm672, %v1079, %v994
        %v1096 = vsel %vm672, %v1080, %v996
        %v1097 = vsel %vm672, %v1081, %v998
        %v1098 = vsel %vm672, %v1082, %v1000
        %v1099 = vsel %vm672, %v1083, %v1002
        %v1100 = vsel %vm672, %v1084, %v1004
        %v1101 = vsel %vm689, %v1085, %v1022
        %v1102 = vsel %vm689, %v1086, %v1024
        %v1103 = vsel %vm689, %v1087, %v1026
        %v1104 = vsel %vm689, %v1088, %v1028
        %v1105 = vsel %vm689, %v1089, %v1030
        %v1106 = vsel %vm689, %v1090, %v1032
        %v1107 = vsel %vm689, %v1091, %v1034
        %v1108 = vsel %vm689, %v1092, %v1036
        %v1109 = vsel %vm689, %v1093, %v1038
        %v1110 = vsel %vm689, %v1094, %v1040
        %v1111 = vsel %vm689, %v1095, %v1042
        %v1112 = vsel %vm689, %v1096, %v1044
        %v1113 = vsel %vm689, %v1097, %v1046
        %v1114 = vsel %vm689, %v1098, %v1048
        %v1115 = vsel %vm689, %v1099, %v1050
        %v1116 = vsel %vm689, %v1100, %v1052
        %s1117 = scalar_lea.vmem [#allocation7], 16
        %v1118 = vld [vmem:[%s1117] sm:$0xff]
        %v1119 = vld [vmem:[%s1117 + $0x8] sm:$0xff]
        %v1121 = vsel %vm715, %v1101, 0
        %v1124 = vsel %vm715, %v1102, 0
        %v1127 = vsel %vm715, %v1103, 0
        %v1130 = vsel %vm715, %v1104, 0
        %v1133 = vsel %vm715, %v1105, 0
        %v1136 = vsel %vm715, %v1106, 0
        %v1139 = vsel %vm715, %v1107, 0
        %v1142 = vsel %vm715, %v1108, 0
        %v1145 = vsel %vm715, %v1109, 0
        %v1148 = vsel %vm715, %v1110, 0
        %v1151 = vsel %vm715, %v1111, 0
        %v1154 = vsel %vm715, %v1112, 0
        %v1157 = vsel %vm715, %v1113, 0
        %v1160 = vsel %vm715, %v1114, 0
        %v1163 = vsel %vm715, %v1115, 0
        %v1166 = vsel %vm715, %v1116, 0
        %1168 = vmatprep.subr.mxu0 0.0
        %1169 = vmatpush1.msra.mxu0 %v1118
        %1170 = vmatprep.subr.mxu0 0.0
        %1171 = vmatpush1.msra.mxu0 %v1119
        %1172 = vmatprep.subr.mxu0 0.0
        %1173 = vmatpush1.msra.mxu0 0.0
        %1174 = vmatprep.subr.mxu0 0.0
        %1175 = vmatpush1.msra.mxu0 0.0
        %1176 = vmatprep.subr.mxu0 0.0
        %1177 = vmatpush1.msra.mxu0 0.0
        %1178 = vmatprep.subr.mxu0 0.0
        %1179 = vmatpush1.msra.mxu0 0.0
        %1180 = vmatprep.subr.mxu0 0.0
        %1181 = vmatpush1.msra.mxu0 0.0
        %1182 = vmatprep.subr.mxu0 0.0
        %1183 = vmatpush1.msra.mxu0 0.0
        %1184 = vmatprep.subr.mxu0 0.0
        %1185 = vmatpush1.msra.mxu0 0.0
        %1186 = vmatprep.subr.mxu0 0.0
        %1187 = vmatpush1.msra.mxu0 0.0
        %1188 = vmatprep.subr.mxu0 0.0
        %1189 = vmatpush1.msra.mxu0 0.0
        %1190 = vmatprep.subr.mxu0 0.0
        %1191 = vmatpush1.msra.mxu0 0.0
        %1192 = vmatprep.subr.mxu0 0.0
        %1193 = vmatpush1.msra.mxu0 0.0
        %1194 = vmatprep.subr.mxu0 0.0
        %1195 = vmatpush1.msra.mxu0 0.0
        %1196 = vmatprep.subr.mxu0 0.0
        %1197 = vmatpush1.msra.mxu0 0.0
        %1198 = vmatprep.subr.mxu0 0.0
        %1199 = vmatpush1.msra.mxu0 0.0
        %1200 = vmatprep.subr.mxu0 0.0
        %1201 = vmatpush1.msra.mxu0 0.0
        %1202 = vmatprep.subr.mxu0 0.0
        %1203 = vmatpush1.msra.mxu0 0.0
        %1204 = vmatprep.subr.mxu0 0.0
        %1205 = vmatpush1.msra.mxu0 0.0
        %1206 = vmatprep.subr.mxu0 0.0
        %1207 = vmatpush1.msra.mxu0 0.0
        %1208 = vmatprep.subr.mxu0 0.0
        %1209 = vmatpush1.msra.mxu0 0.0
        %1210 = vmatprep.subr.mxu0 0.0
        %1211 = vmatpush1.msra.mxu0 0.0
        %1212 = vmatprep.subr.mxu0 0.0
        %1213 = vmatpush1.msra.mxu0 0.0
        %1214 = vmatprep.subr.mxu0 0.0
        %1215 = vmatpush1.msra.mxu0 0.0
        %1216 = vmatprep.subr.mxu0 0.0
        %1217 = vmatpush1.msra.mxu0 0.0
        %1218 = vmatprep.subr.mxu0 0.0
        %1219 = vmatpush1.msra.mxu0 0.0
        %1220 = vmatprep.subr.mxu0 0.0
        %1221 = vmatpush1.msra.mxu0 0.0
        %1222 = vmatprep.subr.mxu0 0.0
        %1223 = vmatpush1.msra.mxu0 0.0
        %1224 = vmatprep.subr.mxu0 0.0
        %1225 = vmatpush1.msra.mxu0 0.0
        %1226 = vmatprep.subr.mxu0 0.0
        %1227 = vmatpush1.msra.mxu0 0.0
        %1228 = vmatprep.subr.mxu0 0.0
        %1229 = vmatpush1.msra.mxu0 0.0
        %1230 = vmatprep.subr.mxu0 0.0
        %1231 = vmatpush1.msra.mxu0 0.0
        %1232 = vmatprep.mubr.f32.mxu0 0.0
        %1233 = vmatmul.mubr.f32.gmra.mrb[0].mxu0 %v1121
        %v1234 = vpop.f32.mrb[0].mxu0
        %v1235 = vadd.f32 %v713, %v1234
        %v1236 = vpop.f32.mrb[0].mxu0
        %1237 = vmatprep.mubr.f32.mxu0 0.0
        %1238 = vmatmul.mubr.f32.gmra.mrb[0].mxu0 %v1124
        %v1239 = vpop.f32.mrb[0].mxu0
        %v1240 = vadd.f32 %v713, %v1239
        %v1241 = vpop.f32.mrb[0].mxu0
        %1242 = vmatprep.mubr.f32.mxu0 0.0
        %1243 = vmatmul.mubr.f32.gmra.mrb[0].mxu0 %v1127
        %v1244 = vpop.f32.mrb[0].mxu0
        %v1245 = vadd.f32 %v713, %v1244
        %v1246 = vpop.f32.mrb[0].mxu0
        %1247 = vmatprep.mubr.f32.mxu0 0.0
        %1248 = vmatmul.mubr.f32.gmra.mrb[0].mxu0 %v1130
        %v1249 = vpop.f32.mrb[0].mxu0
        %v1250 = vadd.f32 %v713, %v1249
        %v1251 = vpop.f32.mrb[0].mxu0
        %1252 = vmatprep.mubr.f32.mxu0 0.0
        %1253 = vmatmul.mubr.f32.gmra.mrb[0].mxu0 %v1133
        %v1254 = vpop.f32.mrb[0].mxu0
        %v1255 = vadd.f32 %v713, %v1254
        %v1256 = vpop.f32.mrb[0].mxu0
        %1257 = vmatprep.mubr.f32.mxu0 0.0
        %1258 = vmatmul.mubr.f32.gmra.mrb[0].mxu0 %v1136
        %v1259 = vpop.f32.mrb[0].mxu0
        %v1260 = vadd.f32 %v713, %v1259
        %v1261 = vpop.f32.mrb[0].mxu0
        %1262 = vmatprep.mubr.f32.mxu0 0.0
        %1263 = vmatmul.mubr.f32.gmra.mrb[0].mxu0 %v1139
        %v1264 = vpop.f32.mrb[0].mxu0
        %v1265 = vadd.f32 %v713, %v1264
        %v1266 = vpop.f32.mrb[0].mxu0
        %1267 = vmatprep.mubr.f32.mxu0 0.0
        %1268 = vmatmul.mubr.f32.gmra.mrb[0].mxu0 %v1142
        %v1269 = vpop.f32.mrb[0].mxu0
        %v1270 = vadd.f32 %v713, %v1269
        %v1271 = vpop.f32.mrb[0].mxu0
        %1272 = vmatprep.mubr.f32.mxu0 0.0
        %1273 = vmatmul.mubr.f32.gmra.mrb[0].mxu0 %v1145
        %v1274 = vpop.f32.mrb[0].mxu0
        %v1275 = vadd.f32 %v713, %v1274
        %v1276 = vpop.f32.mrb[0].mxu0
        %1277 = vmatprep.mubr.f32.mxu0 0.0
        %1278 = vmatmul.mubr.f32.gmra.mrb[0].mxu0 %v1148
        %v1279 = vpop.f32.mrb[0].mxu0
        %v1280 = vadd.f32 %v713, %v1279
        %v1281 = vpop.f32.mrb[0].mxu0
        %1282 = vmatprep.mubr.f32.mxu0 0.0
        %1283 = vmatmul.mubr.f32.gmra.mrb[0].mxu0 %v1151
        %v1284 = vpop.f32.mrb[0].mxu0
        %v1285 = vadd.f32 %v713, %v1284
        %v1286 = vpop.f32.mrb[0].mxu0
        %1287 = vmatprep.mubr.f32.mxu0 0.0
        %1288 = vmatmul.mubr.f32.gmra.mrb[0].mxu0 %v1154
        %v1289 = vpop.f32.mrb[0].mxu0
        %v1290 = vadd.f32 %v713, %v1289
        %v1291 = vpop.f32.mrb[0].mxu0
        %1292 = vmatprep.mubr.f32.mxu0 0.0
        %1293 = vmatmul.mubr.f32.gmra.mrb[0].mxu0 %v1157
        %v1294 = vpop.f32.mrb[0].mxu0
        %v1295 = vadd.f32 %v713, %v1294
        %v1296 = vpop.f32.mrb[0].mxu0
        %1297 = vmatprep.mubr.f32.mxu0 0.0
        %1298 = vmatmul.mubr.f32.gmra.mrb[0].mxu0 %v1160
        %v1299 = vpop.f32.mrb[0].mxu0
        %v1300 = vadd.f32 %v713, %v1299
        %v1301 = vpop.f32.mrb[0].mxu0
        %1302 = vmatprep.mubr.f32.mxu0 0.0
        %1303 = vmatmul.mubr.f32.gmra.mrb[0].mxu0 %v1163
        %v1304 = vpop.f32.mrb[0].mxu0
        %v1305 = vadd.f32 %v713, %v1304
        %v1306 = vpop.f32.mrb[0].mxu0
        %1307 = vmatprep.mubr.f32.mxu0 0.0
        %1308 = vmatmul.mubr.f32.gmra.mrb[0].mxu0 %v1166
        %v1309 = vpop.f32.mrb[0].mxu0
        %v1310 = vadd.f32 %v713, %v1309
        %v1311 = vpop.f32.mrb[0].mxu0
        %1312 = vdwg.mxu0
        %v1313 = vmax.f32 %v1235, 0.0
        %v1314 = vmax.f32 %v1240, 0.0
        %v1315 = vmax.f32 %v1245, 0.0
        %v1316 = vmax.f32 %v1250, 0.0
        %v1317 = vmax.f32 %v1255, 0.0
        %v1318 = vmax.f32 %v1260, 0.0
        %v1319 = vmax.f32 %v1265, 0.0
        %v1320 = vmax.f32 %v1270, 0.0
        %v1321 = vmax.f32 %v1275, 0.0
        %v1322 = vmax.f32 %v1280, 0.0
        %v1323 = vmax.f32 %v1285, 0.0
        %v1324 = vmax.f32 %v1290, 0.0
        %v1325 = vmax.f32 %v1295, 0.0
        %v1326 = vmax.f32 %v1300, 0.0
        %v1327 = vmax.f32 %v1305, 0.0
        %v1328 = vmax.f32 %v1310, 0.0
        %1329 = vrot.lane.b32.xlu0 %v488, 4
        %v1330 = vpop.permute.xlu0 %1329
        %1331 = vrot.lane.b32.xlu0 %v490, 4
        %v1332 = vpop.permute.xlu0 %1331
        %1335 = vrot.lane.b32.xlu0 %v358, 8
        %v1336 = vpop.permute.xlu0 %1335
        %1337 = vrot.lane.b32.xlu0 %v359, 8
        %v1338 = vpop.permute.xlu0 %1337
        %1341 = vrot.lane.b32.xlu0 %v503, 12
        %v1342 = vpop.permute.xlu0 %1341
        %1343 = vrot.lane.b32.xlu0 %v505, 12
        %v1344 = vpop.permute.xlu0 %1343
        %v1347 = vsel %vm655, %v355, %v1330
        %v1348 = vsel %vm655, %v356, %v1332
        %v1349 = vsel %vm672, %v1347, %v1336
        %v1350 = vsel %vm672, %v1348, %v1338
        %v1351 = vsel %vm689, %v1349, %v1342
        %v1352 = vsel %vm689, %v1350, %v1344
        %s1353 = scalar_lea.vmem [#allocation7], 32
        %v1354 = vld [vmem:[%s1353] sm:$0xff]
        %v1355 = vld [vmem:[%s1353 + $0x8] sm:$0xff]
        %v1357 = vsel %vm715, %v1351, 0
        %v1360 = vsel %vm715, %v1352, 0
        %1362 = vmatprep.subr.mxu0 0.0
        %1363 = vmatpush1.msra.mxu0 %v1354
        %1364 = vmatprep.subr.mxu0 0.0
        %1365 = vmatpush1.msra.mxu0 %v1355
        %1366 = vmatprep.subr.mxu0 0.0
        %1367 = vmatpush1.msra.mxu0 0.0
        %1368 = vmatprep.subr.mxu0 0.0
        %1369 = vmatpush1.msra.mxu0 0.0
        %1370 = vmatprep.subr.mxu0 0.0
        %1371 = vmatpush1.msra.mxu0 0.0
        %1372 = vmatprep.subr.mxu0 0.0
        %1373 = vmatpush1.msra.mxu0 0.0
        %1374 = vmatprep.subr.mxu0 0.0
        %1375 = vmatpush1.msra.mxu0 0.0
        %1376 = vmatprep.subr.mxu0 0.0
        %1377 = vmatpush1.msra.mxu0 0.0
        %1378 = vmatprep.subr.mxu0 0.0
        %1379 = vmatpush1.msra.mxu0 0.0
        %1380 = vmatprep.subr.mxu0 0.0
        %1381 = vmatpush1.msra.mxu0 0.0
        %1382 = vmatprep.subr.mxu0 0.0
        %1383 = vmatpush1.msra.mxu0 0.0
        %1384 = vmatprep.subr.mxu0 0.0
        %1385 = vmatpush1.msra.mxu0 0.0
        %1386 = vmatprep.subr.mxu0 0.0
        %1387 = vmatpush1.msra.mxu0 0.0
        %1388 = vmatprep.subr.mxu0 0.0
        %1389 = vmatpush1.msra.mxu0 0.0
        %1390 = vmatprep.subr.mxu0 0.0
        %1391 = vmatpush1.msra.mxu0 0.0
        %1392 = vmatprep.subr.mxu0 0.0
        %1393 = vmatpush1.msra.mxu0 0.0
        %1394 = vmatprep.subr.mxu0 0.0
        %1395 = vmatpush1.msra.mxu0 0.0
        %1396 = vmatprep.subr.mxu0 0.0
        %1397 = vmatpush1.msra.mxu0 0.0
        %1398 = vmatprep.subr.mxu0 0.0
        %1399 = vmatpush1.msra.mxu0 0.0
        %1400 = vmatprep.subr.mxu0 0.0
        %1401 = vmatpush1.msra.mxu0 0.0
        %1402 = vmatprep.subr.mxu0 0.0
        %1403 = vmatpush1.msra.mxu0 0.0
        %1404 = vmatprep.subr.mxu0 0.0
        %1405 = vmatpush1.msra.mxu0 0.0
        %1406 = vmatprep.subr.mxu0 0.0
        %1407 = vmatpush1.msra.mxu0 0.0
        %1408 = vmatprep.subr.mxu0 0.0
        %1409 = vmatpush1.msra.mxu0 0.0
        %1410 = vmatprep.subr.mxu0 0.0
        %1411 = vmatpush1.msra.mxu0 0.0
        %1412 = vmatprep.subr.mxu0 0.0
        %1413 = vmatpush1.msra.mxu0 0.0
        %1414 = vmatprep.subr.mxu0 0.0
        %1415 = vmatpush1.msra.mxu0 0.0
        %1416 = vmatprep.subr.mxu0 0.0
        %1417 = vmatpush1.msra.mxu0 0.0
        %1418 = vmatprep.subr.mxu0 0.0
        %1419 = vmatpush1.msra.mxu0 0.0
        %1420 = vmatprep.subr.mxu0 0.0
        %1421 = vmatpush1.msra.mxu0 0.0
        %1422 = vmatprep.subr.mxu0 0.0
        %1423 = vmatpush1.msra.mxu0 0.0
        %1424 = vmatprep.subr.mxu0 0.0
        %1425 = vmatpush1.msra.mxu0 0.0
        %1426 = vmatprep.mubr.f32.mxu0 0.0
        %1427 = vmatmul.mubr.f32.gmra.mrb[0].mxu0 %v723
        %v1428 = vpop.f32.mrb[0].mxu0
        %v1429 = vadd.f32 %v713, %v1428
        %v1430 = vpop.f32.mrb[0].mxu0
        %1431 = vmatprep.mubr.f32.mxu0 0.0
        %1432 = vmatmul.mubr.f32.gmra.mrb[0].mxu0 %v726
        %v1433 = vpop.f32.mrb[0].mxu0
        %v1434 = vadd.f32 %v713, %v1433
        %v1435 = vpop.f32.mrb[0].mxu0
        %1436 = vmatprep.mubr.f32.mxu0 0.0
        %1437 = vmatmul.mubr.f32.gmra.mrb[0].mxu0 %v729
        %v1438 = vpop.f32.mrb[0].mxu0
        %v1439 = vadd.f32 %v713, %v1438
        %v1440 = vpop.f32.mrb[0].mxu0
        %1441 = vmatprep.mubr.f32.mxu0 0.0
        %1442 = vmatmul.mubr.f32.gmra.mrb[0].mxu0 %v732
        %v1443 = vpop.f32.mrb[0].mxu0
        %v1444 = vadd.f32 %v713, %v1443
        %v1445 = vpop.f32.mrb[0].mxu0
        %1446 = vmatprep.mubr.f32.mxu0 0.0
        %1447 = vmatmul.mubr.f32.gmra.mrb[0].mxu0 %v735
        %v1448 = vpop.f32.mrb[0].mxu0
        %v1449 = vadd.f32 %v713, %v1448
        %v1450 = vpop.f32.mrb[0].mxu0
        %1451 = vmatprep.mubr.f32.mxu0 0.0
        %1452 = vmatmul.mubr.f32.gmra.mrb[0].mxu0 %v738
        %v1453 = vpop.f32.mrb[0].mxu0
        %v1454 = vadd.f32 %v713, %v1453
        %v1455 = vpop.f32.mrb[0].mxu0
        %1456 = vmatprep.mubr.f32.mxu0 0.0
        %1457 = vmatmul.mubr.f32.gmra.mrb[0].mxu0 %v741
        %v1458 = vpop.f32.mrb[0].mxu0
        %v1459 = vadd.f32 %v713, %v1458
        %v1460 = vpop.f32.mrb[0].mxu0
        %1461 = vmatprep.mubr.f32.mxu0 0.0
        %1462 = vmatmul.mubr.f32.gmra.mrb[0].mxu0 %v744
        %v1463 = vpop.f32.mrb[0].mxu0
        %v1464 = vadd.f32 %v713, %v1463
        %v1465 = vpop.f32.mrb[0].mxu0
        %1466 = vmatprep.mubr.f32.mxu0 0.0
        %1467 = vmatmul.mubr.f32.gmra.mrb[0].mxu0 %v747
        %v1468 = vpop.f32.mrb[0].mxu0
        %v1469 = vadd.f32 %v713, %v1468
        %v1470 = vpop.f32.mrb[0].mxu0
        %1471 = vmatprep.mubr.f32.mxu0 0.0
        %1472 = vmatmul.mubr.f32.gmra.mrb[0].mxu0 %v750
        %v1473 = vpop.f32.mrb[0].mxu0
        %v1474 = vadd.f32 %v713, %v1473
        %v1475 = vpop.f32.mrb[0].mxu0
        %1476 = vmatprep.mubr.f32.mxu0 0.0
        %1477 = vmatmul.mubr.f32.gmra.mrb[0].mxu0 %v753
        %v1478 = vpop.f32.mrb[0].mxu0
        %v1479 = vadd.f32 %v713, %v1478
        %v1480 = vpop.f32.mrb[0].mxu0
        %1481 = vmatprep.mubr.f32.mxu0 0.0
        %1482 = vmatmul.mubr.f32.gmra.mrb[0].mxu0 %v756
        %v1483 = vpop.f32.mrb[0].mxu0
        %v1484 = vadd.f32 %v713, %v1483
        %v1485 = vpop.f32.mrb[0].mxu0
        %1486 = vmatprep.mubr.f32.mxu0 0.0
        %1487 = vmatmul.mubr.f32.gmra.mrb[0].mxu0 %v759
        %v1488 = vpop.f32.mrb[0].mxu0
        %v1489 = vadd.f32 %v713, %v1488
        %v1490 = vpop.f32.mrb[0].mxu0
        %1491 = vmatprep.mubr.f32.mxu0 0.0
        %1492 = vmatmul.mubr.f32.gmra.mrb[0].mxu0 %v762
        %v1493 = vpop.f32.mrb[0].mxu0
        %v1494 = vadd.f32 %v713, %v1493
        %v1495 = vpop.f32.mrb[0].mxu0
        %1496 = vmatprep.mubr.f32.mxu0 0.0
        %1497 = vmatmul.mubr.f32.gmra.mrb[0].mxu0 %v1357
        %v1498 = vpop.f32.mrb[0].mxu0
        %v1499 = vadd.f32 %v713, %v1498
        %v1500 = vpop.f32.mrb[0].mxu0
        %1501 = vmatprep.mubr.f32.mxu0 0.0
        %1502 = vmatmul.mubr.f32.gmra.mrb[0].mxu0 %v1360
        %v1503 = vpop.f32.mrb[0].mxu0
        %v1504 = vadd.f32 %v713, %v1503
        %v1505 = vpop.f32.mrb[0].mxu0
        %1506 = vdwg.mxu0
        %v1507 = vmax.f32 %v1429, 0.0
        %v1508 = vmax.f32 %v1434, 0.0
        %v1509 = vmax.f32 %v1439, 0.0
        %v1510 = vmax.f32 %v1444, 0.0
        %v1511 = vmax.f32 %v1449, 0.0
        %v1512 = vmax.f32 %v1454, 0.0
        %v1513 = vmax.f32 %v1459, 0.0
        %v1514 = vmax.f32 %v1464, 0.0
        %v1515 = vmax.f32 %v1469, 0.0
        %v1516 = vmax.f32 %v1474, 0.0
        %v1517 = vmax.f32 %v1479, 0.0
        %v1518 = vmax.f32 %v1484, 0.0
        %v1519 = vmax.f32 %v1489, 0.0
        %v1520 = vmax.f32 %v1494, 0.0
        %v1521 = vmax.f32 %v1499, 0.0
        %v1522 = vmax.f32 %v1504, 0.0
        %1523 = vrot.lane.b32.xlu0 %v495, 4
        %v1524 = vpop.permute.xlu0 %1523
        %1525 = vrot.lane.b32.xlu0 %v497, 4
        %v1526 = vpop.permute.xlu0 %1525
        %1529 = vrot.lane.b32.xlu0 %v503, 8
        %v1530 = vpop.permute.xlu0 %1529
        %1531 = vrot.lane.b32.xlu0 %v505, 8
        %v1532 = vpop.permute.xlu0 %1531
        %1535 = vrot.lane.b32.xlu0 %v508, 12
        %v1536 = vpop.permute.xlu0 %1535
        %1537 = vrot.lane.b32.xlu0 %v510, 12
        %v1538 = vpop.permute.xlu0 %1537
        %v1541 = vsel %vm655, %v488, %v1524
        %v1542 = vsel %vm655, %v490, %v1526
        %v1543 = vsel %vm672, %v1541, %v1530
        %v1544 = vsel %vm672, %v1542, %v1532
        %v1545 = vsel %vm689, %v1543, %v1536
        %v1546 = vsel %vm689, %v1544, %v1538
        %s1547 = scalar_lea.vmem [#allocation7], 48
        %v1548 = vld [vmem:[%s1547] sm:$0xff]
        %v1549 = vld [vmem:[%s1547 + $0x8] sm:$0xff]
        %v1551 = vsel %vm715, %v1545, 0
        %v1554 = vsel %vm715, %v1546, 0
        %1556 = vmatprep.subr.mxu0 0.0
        %1557 = vmatpush1.msra.mxu0 %v1548
        %1558 = vmatprep.subr.mxu0 0.0
        %1559 = vmatpush1.msra.mxu0 %v1549
        %1560 = vmatprep.subr.mxu0 0.0
        %1561 = vmatpush1.msra.mxu0 0.0
        %1562 = vmatprep.subr.mxu0 0.0
        %1563 = vmatpush1.msra.mxu0 0.0
        %1564 = vmatprep.subr.mxu0 0.0
        %1565 = vmatpush1.msra.mxu0 0.0
        %1566 = vmatprep.subr.mxu0 0.0
        %1567 = vmatpush1.msra.mxu0 0.0
        %1568 = vmatprep.subr.mxu0 0.0
        %1569 = vmatpush1.msra.mxu0 0.0
        %1570 = vmatprep.subr.mxu0 0.0
        %1571 = vmatpush1.msra.mxu0 0.0
        %1572 = vmatprep.subr.mxu0 0.0
        %1573 = vmatpush1.msra.mxu0 0.0
        %1574 = vmatprep.subr.mxu0 0.0
        %1575 = vmatpush1.msra.mxu0 0.0
        %1576 = vmatprep.subr.mxu0 0.0
        %1577 = vmatpush1.msra.mxu0 0.0
        %1578 = vmatprep.subr.mxu0 0.0
        %1579 = vmatpush1.msra.mxu0 0.0
        %1580 = vmatprep.subr.mxu0 0.0
        %1581 = vmatpush1.msra.mxu0 0.0
        %1582 = vmatprep.subr.mxu0 0.0
        %1583 = vmatpush1.msra.mxu0 0.0
        %1584 = vmatprep.subr.mxu0 0.0
        %1585 = vmatpush1.msra.mxu0 0.0
        %1586 = vmatprep.subr.mxu0 0.0
        %1587 = vmatpush1.msra.mxu0 0.0
        %1588 = vmatprep.subr.mxu0 0.0
        %1589 = vmatpush1.msra.mxu0 0.0
        %1590 = vmatprep.subr.mxu0 0.0
        %1591 = vmatpush1.msra.mxu0 0.0
        %1592 = vmatprep.subr.mxu0 0.0
        %1593 = vmatpush1.msra.mxu0 0.0
        %1594 = vmatprep.subr.mxu0 0.0
        %1595 = vmatpush1.msra.mxu0 0.0
        %1596 = vmatprep.subr.mxu0 0.0
        %1597 = vmatpush1.msra.mxu0 0.0
        %1598 = vmatprep.subr.mxu0 0.0
        %1599 = vmatpush1.msra.mxu0 0.0
        %1600 = vmatprep.subr.mxu0 0.0
        %1601 = vmatpush1.msra.mxu0 0.0
        %1602 = vmatprep.subr.mxu0 0.0
        %1603 = vmatpush1.msra.mxu0 0.0
        %1604 = vmatprep.subr.mxu0 0.0
        %1605 = vmatpush1.msra.mxu0 0.0
        %1606 = vmatprep.subr.mxu0 0.0
        %1607 = vmatpush1.msra.mxu0 0.0
        %1608 = vmatprep.subr.mxu0 0.0
        %1609 = vmatpush1.msra.mxu0 0.0
        %1610 = vmatprep.subr.mxu0 0.0
        %1611 = vmatpush1.msra.mxu0 0.0
        %1612 = vmatprep.subr.mxu0 0.0
        %1613 = vmatpush1.msra.mxu0 0.0
        %1614 = vmatprep.subr.mxu0 0.0
        %1615 = vmatpush1.msra.mxu0 0.0
        %1616 = vmatprep.subr.mxu0 0.0
        %1617 = vmatpush1.msra.mxu0 0.0
        %1618 = vmatprep.subr.mxu0 0.0
        %1619 = vmatpush1.msra.mxu0 0.0
        %1620 = vmatprep.mubr.f32.mxu0 0.0
        %1621 = vmatmul.mubr.f32.gmra.mrb[0].mxu0 %v1127
        %v1622 = vpop.f32.mrb[0].mxu0
        %v1623 = vadd.f32 %v713, %v1622
        %v1624 = vpop.f32.mrb[0].mxu0
        %1625 = vmatprep.mubr.f32.mxu0 0.0
        %1626 = vmatmul.mubr.f32.gmra.mrb[0].mxu0 %v1130
        %v1627 = vpop.f32.mrb[0].mxu0
        %v1628 = vadd.f32 %v713, %v1627
        %v1629 = vpop.f32.mrb[0].mxu0
        %1630 = vmatprep.mubr.f32.mxu0 0.0
        %1631 = vmatmul.mubr.f32.gmra.mrb[0].mxu0 %v1133
        %v1632 = vpop.f32.mrb[0].mxu0
        %v1633 = vadd.f32 %v713, %v1632
        %v1634 = vpop.f32.mrb[0].mxu0
        %1635 = vmatprep.mubr.f32.mxu0 0.0
        %1636 = vmatmul.mubr.f32.gmra.mrb[0].mxu0 %v1136
        %v1637 = vpop.f32.mrb[0].mxu0
        %v1638 = vadd.f32 %v713, %v1637
        %v1639 = vpop.f32.mrb[0].mxu0
        %1640 = vmatprep.mubr.f32.mxu0 0.0
        %1641 = vmatmul.mubr.f32.gmra.mrb[0].mxu0 %v1139
        %v1642 = vpop.f32.mrb[0].mxu0
        %v1643 = vadd.f32 %v713, %v1642
        %v1644 = vpop.f32.mrb[0].mxu0
        %1645 = vmatprep.mubr.f32.mxu0 0.0
        %1646 = vmatmul.mubr.f32.gmra.mrb[0].mxu0 %v1142
        %v1647 = vpop.f32.mrb[0].mxu0
        %v1648 = vadd.f32 %v713, %v1647
        %v1649 = vpop.f32.mrb[0].mxu0
        %1650 = vmatprep.mubr.f32.mxu0 0.0
        %1651 = vmatmul.mubr.f32.gmra.mrb[0].mxu0 %v1145
        %v1652 = vpop.f32.mrb[0].mxu0
        %v1653 = vadd.f32 %v713, %v1652
        %v1654 = vpop.f32.mrb[0].mxu0
        %1655 = vmatprep.mubr.f32.mxu0 0.0
        %1656 = vmatmul.mubr.f32.gmra.mrb[0].mxu0 %v1148
        %v1657 = vpop.f32.mrb[0].mxu0
        %v1658 = vadd.f32 %v713, %v1657
        %v1659 = vpop.f32.mrb[0].mxu0
        %1660 = vmatprep.mubr.f32.mxu0 0.0
        %1661 = vmatmul.mubr.f32.gmra.mrb[0].mxu0 %v1151
        %v1662 = vpop.f32.mrb[0].mxu0
        %v1663 = vadd.f32 %v713, %v1662
        %v1664 = vpop.f32.mrb[0].mxu0
        %1665 = vmatprep.mubr.f32.mxu0 0.0
        %1666 = vmatmul.mubr.f32.gmra.mrb[0].mxu0 %v1154
        %v1667 = vpop.f32.mrb[0].mxu0
        %v1668 = vadd.f32 %v713, %v1667
        %v1669 = vpop.f32.mrb[0].mxu0
        %1670 = vmatprep.mubr.f32.mxu0 0.0
        %1671 = vmatmul.mubr.f32.gmra.mrb[0].mxu0 %v1157
        %v1672 = vpop.f32.mrb[0].mxu0
        %v1673 = vadd.f32 %v713, %v1672
        %v1674 = vpop.f32.mrb[0].mxu0
        %1675 = vmatprep.mubr.f32.mxu0 0.0
        %1676 = vmatmul.mubr.f32.gmra.mrb[0].mxu0 %v1160
        %v1677 = vpop.f32.mrb[0].mxu0
        %v1678 = vadd.f32 %v713, %v1677
        %v1679 = vpop.f32.mrb[0].mxu0
        %1680 = vmatprep.mubr.f32.mxu0 0.0
        %1681 = vmatmul.mubr.f32.gmra.mrb[0].mxu0 %v1163
        %v1682 = vpop.f32.mrb[0].mxu0
        %v1683 = vadd.f32 %v713, %v1682
        %v1684 = vpop.f32.mrb[0].mxu0
        %1685 = vmatprep.mubr.f32.mxu0 0.0
        %1686 = vmatmul.mubr.f32.gmra.mrb[0].mxu0 %v1166
        %v1687 = vpop.f32.mrb[0].mxu0
        %v1688 = vadd.f32 %v713, %v1687
        %v1689 = vpop.f32.mrb[0].mxu0
        %1690 = vmatprep.mubr.f32.mxu0 0.0
        %1691 = vmatmul.mubr.f32.gmra.mrb[0].mxu0 %v1551
        %v1692 = vpop.f32.mrb[0].mxu0
        %v1693 = vadd.f32 %v713, %v1692
        %v1694 = vpop.f32.mrb[0].mxu0
        %1695 = vmatprep.mubr.f32.mxu0 0.0
        %1696 = vmatmul.mubr.f32.gmra.mrb[0].mxu0 %v1554
        %v1697 = vpop.f32.mrb[0].mxu0
        %v1698 = vadd.f32 %v713, %v1697
        %v1699 = vpop.f32.mrb[0].mxu0
        %1700 = vdwg.mxu0
        %v1701 = vmax.f32 %v1623, 0.0
        %v1702 = vmax.f32 %v1628, 0.0
        %v1703 = vmax.f32 %v1633, 0.0
        %v1704 = vmax.f32 %v1638, 0.0
        %v1705 = vmax.f32 %v1643, 0.0
        %v1706 = vmax.f32 %v1648, 0.0
        %v1707 = vmax.f32 %v1653, 0.0
        %v1708 = vmax.f32 %v1658, 0.0
        %v1709 = vmax.f32 %v1663, 0.0
        %v1710 = vmax.f32 %v1668, 0.0
        %v1711 = vmax.f32 %v1673, 0.0
        %v1712 = vmax.f32 %v1678, 0.0
        %v1713 = vmax.f32 %v1683, 0.0
        %v1714 = vmax.f32 %v1688, 0.0
        %v1715 = vmax.f32 %v1693, 0.0
        %v1716 = vmax.f32 %v1698, 0.0
        %1733 = vrot.lane.b32.xlu0 %v1313, 8
        %v1734 = vpop.permute.xlu0 %1733
        %1735 = vrot.lane.b32.xlu0 %v1314, 8
        %v1736 = vpop.permute.xlu0 %1735
        %1737 = vrot.lane.b32.xlu0 %v1315, 8
        %v1738 = vpop.permute.xlu0 %1737
        %1739 = vrot.lane.b32.xlu0 %v1316, 8
        %v1740 = vpop.permute.xlu0 %1739
        %1741 = vrot.lane.b32.xlu0 %v1317, 8
        %v1742 = vpop.permute.xlu0 %1741
        %1743 = vrot.lane.b32.xlu0 %v1318, 8
        %v1744 = vpop.permute.xlu0 %1743
        %1745 = vrot.lane.b32.xlu0 %v1319, 8
        %v1746 = vpop.permute.xlu0 %1745
        %1747 = vrot.lane.b32.xlu0 %v1320, 8
        %v1748 = vpop.permute.xlu0 %1747
        %1749 = vrot.lane.b32.xlu0 %v1321, 8
        %v1750 = vpop.permute.xlu0 %1749
        %1751 = vrot.lane.b32.xlu0 %v1322, 8
        %v1752 = vpop.permute.xlu0 %1751
        %1753 = vrot.lane.b32.xlu0 %v1323, 8
        %v1754 = vpop.permute.xlu0 %1753
        %1755 = vrot.lane.b32.xlu0 %v1324, 8
        %v1756 = vpop.permute.xlu0 %1755
        %1757 = vrot.lane.b32.xlu0 %v1325, 8
        %v1758 = vpop.permute.xlu0 %1757
        %1759 = vrot.lane.b32.xlu0 %v1326, 8
        %v1760 = vpop.permute.xlu0 %1759
        %1761 = vrot.lane.b32.xlu0 %v1327, 8
        %v1762 = vpop.permute.xlu0 %1761
        %1763 = vrot.lane.b32.xlu0 %v1328, 8
        %v1764 = vpop.permute.xlu0 %1763
        %1797 = vrot.lane.b32.xlu0 %v1507, 16
        %v1798 = vpop.permute.xlu0 %1797
        %1799 = vrot.lane.b32.xlu0 %v1508, 16
        %v1800 = vpop.permute.xlu0 %1799
        %1801 = vrot.lane.b32.xlu0 %v1509, 16
        %v1802 = vpop.permute.xlu0 %1801
        %1803 = vrot.lane.b32.xlu0 %v1510, 16
        %v1804 = vpop.permute.xlu0 %1803
        %1805 = vrot.lane.b32.xlu0 %v1511, 16
        %v1806 = vpop.permute.xlu0 %1805
        %1807 = vrot.lane.b32.xlu0 %v1512, 16
        %v1808 = vpop.permute.xlu0 %1807
        %1809 = vrot.lane.b32.xlu0 %v1513, 16
        %v1810 = vpop.permute.xlu0 %1809
        %1811 = vrot.lane.b32.xlu0 %v1514, 16
        %v1812 = vpop.permute.xlu0 %1811
        %1813 = vrot.lane.b32.xlu0 %v1515, 16
        %v1814 = vpop.permute.xlu0 %1813
        %1815 = vrot.lane.b32.xlu0 %v1516, 16
        %v1816 = vpop.permute.xlu0 %1815
        %1817 = vrot.lane.b32.xlu0 %v1517, 16
        %v1818 = vpop.permute.xlu0 %1817
        %1819 = vrot.lane.b32.xlu0 %v1518, 16
        %v1820 = vpop.permute.xlu0 %1819
        %1821 = vrot.lane.b32.xlu0 %v1519, 16
        %v1822 = vpop.permute.xlu0 %1821
        %1823 = vrot.lane.b32.xlu0 %v1520, 16
        %v1824 = vpop.permute.xlu0 %1823
        %1825 = vrot.lane.b32.xlu0 %v1521, 16
        %v1826 = vpop.permute.xlu0 %1825
        %1827 = vrot.lane.b32.xlu0 %v1522, 16
        %v1828 = vpop.permute.xlu0 %1827
        %1861 = vrot.lane.b32.xlu0 %v1701, 24
        %v1862 = vpop.permute.xlu0 %1861
        %1863 = vrot.lane.b32.xlu0 %v1702, 24
        %v1864 = vpop.permute.xlu0 %1863
        %1865 = vrot.lane.b32.xlu0 %v1703, 24
        %v1866 = vpop.permute.xlu0 %1865
        %1867 = vrot.lane.b32.xlu0 %v1704, 24
        %v1868 = vpop.permute.xlu0 %1867
        %1869 = vrot.lane.b32.xlu0 %v1705, 24
        %v1870 = vpop.permute.xlu0 %1869
        %1871 = vrot.lane.b32.xlu0 %v1706, 24
        %v1872 = vpop.permute.xlu0 %1871
        %1873 = vrot.lane.b32.xlu0 %v1707, 24
        %v1874 = vpop.permute.xlu0 %1873
        %1875 = vrot.lane.b32.xlu0 %v1708, 24
        %v1876 = vpop.permute.xlu0 %1875
        %1877 = vrot.lane.b32.xlu0 %v1709, 24
        %v1878 = vpop.permute.xlu0 %1877
        %1879 = vrot.lane.b32.xlu0 %v1710, 24
        %v1880 = vpop.permute.xlu0 %1879
        %1881 = vrot.lane.b32.xlu0 %v1711, 24
        %v1882 = vpop.permute.xlu0 %1881
        %1883 = vrot.lane.b32.xlu0 %v1712, 24
        %v1884 = vpop.permute.xlu0 %1883
        %1885 = vrot.lane.b32.xlu0 %v1713, 24
        %v1886 = vpop.permute.xlu0 %1885
        %1887 = vrot.lane.b32.xlu0 %v1714, 24
        %v1888 = vpop.permute.xlu0 %1887
        %1889 = vrot.lane.b32.xlu0 %v1715, 24
        %v1890 = vpop.permute.xlu0 %1889
        %1891 = vrot.lane.b32.xlu0 %v1716, 24
        %v1892 = vpop.permute.xlu0 %1891
        %v1909 = vsel %vm672, %v909, %v1734
        %v1910 = vsel %vm672, %v910, %v1736
        %v1911 = vsel %vm672, %v911, %v1738
        %v1912 = vsel %vm672, %v912, %v1740
        %v1913 = vsel %vm672, %v913, %v1742
        %v1914 = vsel %vm672, %v914, %v1744
        %v1915 = vsel %vm672, %v915, %v1746
        %v1916 = vsel %vm672, %v916, %v1748
        %v1917 = vsel %vm672, %v917, %v1750
        %v1918 = vsel %vm672, %v918, %v1752
        %v1919 = vsel %vm672, %v919, %v1754
        %v1920 = vsel %vm672, %v920, %v1756
        %v1921 = vsel %vm672, %v921, %v1758
        %v1922 = vsel %vm672, %v922, %v1760
        %v1923 = vsel %vm672, %v923, %v1762
        %v1924 = vsel %vm672, %v924, %v1764
        %v1925 = vsel %vm715, %v1909, %v1798
        %v1926 = vsel %vm715, %v1910, %v1800
        %v1927 = vsel %vm715, %v1911, %v1802
        %v1928 = vsel %vm715, %v1912, %v1804
        %v1929 = vsel %vm715, %v1913, %v1806
        %v1930 = vsel %vm715, %v1914, %v1808
        %v1931 = vsel %vm715, %v1915, %v1810
        %v1932 = vsel %vm715, %v1916, %v1812
        %v1933 = vsel %vm715, %v1917, %v1814
        %v1934 = vsel %vm715, %v1918, %v1816
        %v1935 = vsel %vm715, %v1919, %v1818
        %v1936 = vsel %vm715, %v1920, %v1820
        %v1937 = vsel %vm715, %v1921, %v1822
        %v1938 = vsel %vm715, %v1922, %v1824
        %v1939 = vsel %vm715, %v1923, %v1826
        %v1940 = vsel %vm715, %v1924, %v1828
        %vm1941 = vcmask 195584
        %v1942 = vsel %vm1941, %v1925, %v1862
        %v1943 = vsel %vm1941, %v1926, %v1864
        %v1944 = vsel %vm1941, %v1927, %v1866
        %v1945 = vsel %vm1941, %v1928, %v1868
        %v1946 = vsel %vm1941, %v1929, %v1870
        %v1947 = vsel %vm1941, %v1930, %v1872
        %v1948 = vsel %vm1941, %v1931, %v1874
        %v1949 = vsel %vm1941, %v1932, %v1876
        %v1950 = vsel %vm1941, %v1933, %v1878
        %v1951 = vsel %vm1941, %v1934, %v1880
        %v1952 = vsel %vm1941, %v1935, %v1882
        %v1953 = vsel %vm1941, %v1936, %v1884
        %v1954 = vsel %vm1941, %v1937, %v1886
        %v1955 = vsel %vm1941, %v1938, %v1888
        %v1956 = vsel %vm1941, %v1939, %v1890
        %v1957 = vsel %vm1941, %v1940, %v1892
        %vm1958 = vcmask 261120
        %1959 = vst.msk [vmem:[%s320] sm:$0xff] %vm1958, %v1942
        %1960 = vst.msk [vmem:[%s320 + $0x8] sm:$0xff] %vm1958, %v1943
        %1961 = vst.msk [vmem:[%s320 + $0x10] sm:$0xff] %vm1958, %v1944
        %1962 = vst.msk [vmem:[%s320 + $0x18] sm:$0xff] %vm1958, %v1945
        %1963 = vst.msk [vmem:[%s320 + $0x20] sm:$0xff] %vm1958, %v1946
        %1964 = vst.msk [vmem:[%s320 + $0x28] sm:$0xff] %vm1958, %v1947
        %1965 = vst.msk [vmem:[%s320 + $0x30] sm:$0xff] %vm1958, %v1948
        %1966 = vst.msk [vmem:[%s320 + $0x38] sm:$0xff] %vm1958, %v1949
        %1967 = vst.msk [vmem:[%s320 + $0x40] sm:$0xff] %vm1958, %v1950
        %1968 = vst.msk [vmem:[%s320 + $0x48] sm:$0xff] %vm1958, %v1951
        %1969 = vst.msk [vmem:[%s320 + $0x50] sm:$0xff] %vm1958, %v1952
        %1970 = vst.msk [vmem:[%s320 + $0x58] sm:$0xff] %vm1958, %v1953
        %1971 = vst.msk [vmem:[%s320 + $0x60] sm:$0xff] %vm1958, %v1954
        %1972 = vst.msk [vmem:[%s320 + $0x68] sm:$0xff] %vm1958, %v1955
        %1973 = vst.msk [vmem:[%s320 + $0x70] sm:$0xff] %vm1958, %v1956
        %1974 = vst.msk [vmem:[%s320 + $0x78] sm:$0xff] %vm1958, %v1957
        %s1975 = sand.u32 %s149, 1
        %s1976 = scalar_lea.sflag [#allocation4], %s1975
        %s1977 = sand.u32 %s149, 1
        %s1978 = smul.addr %s1977, 128
        %s1979 = scalar_lea.vmem [#allocation10], %s1978
        // Predicated region
        $region53: #{up_forward.2} parent=35 // pred_check
          %p1980 = pneg %p159
        $region54: #{up_forward.2} parent=35 // pred_check_branch
          %1982 = sbr.rel (%p1980) target = $region56
        $region55: #{up_forward.2} parent=35 // pred_region
          %s1983 = smul.u32 16, %s30
          %s1985 = ssub.s32 2048, 2048
          %1986 = vsyncadd %s1976, %s1985
          %s1987 = smul.addr %s29, 32
          %s1988 = sadd.s32 %s1983, %s1987
          %s1989 = smul.addr %s1988, 128
          %s1990 = scalar_lea.hbm %s4, %s1989
          %s1991 = sshll.u32 %s1979, 4
          %s1992 = int_to_ptr.vmem [resolvable:$true] %s1991
          %1997 = dma.vmem_to_hbm [thread:$0]  %s1992, 2048, %s1990, %s1976, 128, 128, 8
        $region56: #{up_forward.2} parent=35 // pred_fallthru
          _
      $region36: #{up_forward.2} parent=5 // pred_fallthru
        _
      %p1998 = scmp.le.s32.totalorder 2, %s20
      // Predicated region
      $region57: #{up_forward.2} parent=5 // pred_check
        %p1999 = pneg %p1998
      $region58: #{up_forward.2} parent=5 // pred_check_branch
        %2001 = sbr.rel (%p1999) target = $region60
      $region59: #{up_forward.2} parent=5 // pred_region
        %s2002 = ssub.s32 %s20, 2
        // Predicated region
        $region61: #{up_forward.2} parent=59 // pred_check
          %p2003 = pneg %p165
        $region62: #{up_forward.2} parent=59 // pred_check_branch
          %2005 = sbr.rel (%p2003) target = $region64
        $region63: #{up_forward.2} parent=59 // pred_region
          %s2006 = sand.u32 %s150, 1
          %s2007 = scalar_lea.sflag [#allocation4], %s2006
          %s2008 = sand.u32 %s150, 1
          %s2009 = smul.addr %s2008, 128
          %s2010 = scalar_lea.vmem [#allocation10], %s2009
          %2011 = dma.done %s2007, 2048
        $region64: #{up_forward.2} parent=59 // pred_fallthru
          _
      $region60: #{up_forward.2} parent=5 // pred_fallthru
        _
    $region6: #{up_forward.2} parent=1 // loop_footer
      %s24 = sadd.s32 1, %s20
    $region7: #{up_forward.2} parent=1 // loop_footer_branch
      %19 = sbr.rel target = $region3
    $region8: #{up_forward.2} parent=1 // loop_exit
      _
    %2012 = vsyncpa [#allocation3], 1
    %s2013 = scalar_lea.sflag [#allocation3], 1
    %2014 = vsyncpa %s2013, 1
    %2015 = vsyncpa [#allocation6], 1
    %s2016 = scalar_lea.sflag [#allocation6], 1
    %2017 = vsyncpa %s2016, 1
    %2018 = vsyncpa [#allocation9], 1
    %2019 = vsyncpa [#allocation4], 1
    %s2020 = scalar_lea.sflag [#allocation4], 1
    %2021 = vsyncpa %s2020, 1

// kernel: up_forward.3
$region0: #{up_forward.3}
  #allocation0 [shape = 'u32[]', space=smem, size = 0x4, offset = 0x4, fixed_abs, tag = 'smem constant byte address 0x4 - core index']
  #allocation1 [shape = 'u32[144,128]{1,0:T(1,128)}', space=vmem, size = 0x12000, scoped, tag = 'internal scratch']
  %s0 = inlined_call_operand.hbm [shape: f32[2,34,34,8], index: 0, kind: input, shape index: {}, may-alias: {0,1}]
  %s1 = inlined_call_operand.hbm [shape: f32[2,34,34,8], index: 1, kind: input, shape index: {}, may-alias: {0,1}]
  %s2 = inlined_call_operand.hbm [shape: f32[2,34,34,8], index: 2, kind: input, shape index: {}, may-alias: {2,3}]
  %s3 = inlined_call_operand.hbm [shape: f32[2,34,34,8], index: 3, kind: input, shape index: {}, may-alias: {2,3}]
  %s4 = inlined_call_operand.hbm [shape: f32[72,8], index: 4, kind: input, shape index: {}]
  %s5 = inlined_call_operand.hbm [shape: f32[72,8], index: 5, kind: input, shape index: {}]
  %s6 = inlined_call_operand.hbm [shape: f32[1,8], index: 6, kind: input, shape index: {}]
  %s7 = inlined_call_operand.hbm [shape: f32[2,1024,8], index: 7, kind: output, shape index: {}]
  %s8 = sld [smem:[#allocation0]]
  $region89: #{up_forward.3} parent=0
    _
  %s10 = ssub.s32 1, %s8
  %s11 = scalar_select 0, %s10, %s8
  $region1: #{up_forward.3} parent=0
    #allocation2 [shape = 'u8[327680]{0}', space=vmem, size = 0x50000, scoped, tag = 'input window, operand 0']
    #allocation3 [shape = 's32[2]{0}', space=sflag, size = 0x8, scoped, tag = 'scoped memory for up_forward.3']
    #allocation4 [shape = 's32[2]{0}', space=sflag, size = 0x8, scoped, tag = 'scoped memory for up_forward.3']
    #allocation5 [shape = 'u8[81920]{0}', space=vmem, size = 0x14000, scoped, tag = 'input window, operand 1']
    #allocation6 [shape = 's32[2]{0}', space=sflag, size = 0x8, scoped, tag = 'scoped memory for up_forward.3']
    #allocation7 [shape = 'u8[327680]{0}', space=vmem, size = 0x50000, scoped, tag = 'input window, operand 2']
    #allocation8 [shape = 'u8[81920]{0}', space=vmem, size = 0x14000, scoped, tag = 'input window, operand 3']
    #allocation9 [shape = 's32[2]{0}', space=sflag, size = 0x8, scoped, tag = 'scoped memory for up_forward.3']
    #allocation10 [shape = 'u8[36864]{0}', space=vmem, size = 0x9000, scoped, tag = 'input window, operand 4, single buffered']
    #allocation11 [shape = 'u8[36864]{0}', space=vmem, size = 0x9000, scoped, tag = 'input window, operand 5, single buffered']
    #allocation12 [shape = 's32[1]{0}', space=sflag, size = 0x4, scoped, tag = 'scoped memory for up_forward.3']
    #allocation13 [shape = 'u8[512]{0}', space=vmem, size = 0x400, scoped, tag = 'input window, operand 6, single buffered']
    #allocation14 [shape = 'u8[262144]{0}', space=vmem, size = 0x40000, scoped, tag = 'output window, operand 0']
    %12 = vsyncpa [#allocation3], 0
    %s13 = scalar_lea.sflag [#allocation3], 1
    %14 = vsyncpa %s13, 0
    %15 = vsyncpa [#allocation6], 0
    %s16 = scalar_lea.sflag [#allocation6], 1
    %17 = vsyncpa %s16, 0
    %18 = vsyncpa [#allocation9], 0
    %s19 = scalar_lea.sflag [#allocation9], 1
    %20 = vsyncpa %s19, 0
    %21 = vsyncpa [#allocation12], 0
    %22 = vsyncpa [#allocation4], 0
    %s23 = scalar_lea.sflag [#allocation4], 1
    %24 = vsyncpa %s23, 0
    loop: start=0, step=1, limit=10
    $region2: #{up_forward.3} parent=1 // loop_pre_header
      _
    $region3: #{up_forward.3} parent=1 // loop_header
      %s26 = sphi 0, %s30
      %p27 = scmp.ge.s32.totalorder %s26, 10
      %s33 = sphi 0, %s45
      %s34 = sphi 0, %s41
      %s35 = sphi 0, %s33
      %s36 = sphi 0, %s34
      %s37 = sphi 0, %s35
      %s38 = sphi 0, %s36
      %s50 = sphi 0, %s52
      %s53 = sphi 0, %s50
      %s54 = sphi 0, %s53
      %s70 = sphi 0, %s54
      %s82 = sphi 0, %s84
      %s85 = sphi 0, %s82
      %s86 = sphi 0, %s85
      %s102 = sphi 0, %s86
      %s110 = sphi 0, %s112
      %s113 = sphi 0, %s110
      %s114 = sphi 0, %s113
      %s130 = sphi 0, %s114
      %s142 = sphi 0, %s144
      %s145 = sphi 0, %s142
      %s146 = sphi 0, %s145
      %s162 = sphi 0, %s146
      %s166 = sphi 0, %s166
      %s168 = sphi 0, %s166
      %s169 = sphi 0, %s168
      %s183 = sphi 0, %s169
      %s187 = sphi 0, %s187
      %s189 = sphi 0, %s187
      %s190 = sphi 0, %s189
      %s204 = sphi 0, %s190
      %s208 = sphi 0, %s208
      %s210 = sphi 0, %s208
      %s211 = sphi 0, %s210
      %s225 = sphi 0, %s211
      %s233 = sphi 0, %s235
      %s236 = sphi 0, %s233
      %s237 = sphi 0, %s236
      %s253 = sphi 0, %s237
    $region4: #{up_forward.3} parent=1 // loop_header_branch
      %29 = sbr.rel (%p27) target = $region8
    $region5: #{up_forward.3} parent=1 // loop_body
      %s31 = ssub.s32 %s26, 1
      %s32 = ssub.s32 %s26, 2
      %s39 = sadd.s32 1, %s34
      %p40 = scmp.ge.s32.totalorder %s39, 4
      %s41 = scalar_select %p40, 0, %s39
      %s42 = sadd.s32 1, %s33
      %s43 = scalar_select %p40, %s42, %s33
      %p44 = scmp.ge.s32.totalorder %s43, 2
      %s45 = scalar_select %p44, 0, %s43
      %s46 = ssub.s32 %s33, %s45
      %s47 = ssub.s32 %s34, %s41
      %s48 = sor.u32 %s46, %s47
      %p49 = scmp.eq.s32.totalorder %s48, 0
      %s51 = sadd.s32 %s50, 1
      %s52 = scalar_select %p49, %s50, %s51
      %p55 = pneg %p49
      %p56 = scmp.eq.s32.totalorder %s26, 7
      %p57 = por %p55, %p56
      %p58 = scmp.ne.s32.totalorder %s50, %s53
      %p59 = scmp.eq.s32.totalorder %s26, 0
      %p60 = por %p58, %p59
      %p61 = scmp.ne.s32.totalorder %s50, %s53
      %p62 = scmp.eq.s32.totalorder %s31, 7
      %p63 = por %p61, %p62
      %p64 = scmp.ne.s32.totalorder %s53, %s54
      %p65 = scmp.eq.s32.totalorder %s31, 0
      %p66 = por %p64, %p65
      %p67 = scmp.ne.s32.totalorder %s53, %s54
      %p68 = scmp.eq.s32.totalorder %s32, 7
      %p69 = por %p67, %p68
      %p71 = scmp.ne.s32.totalorder %s54, %s70
      %p72 = scmp.eq.s32.totalorder %s32, 0
      %p73 = por %p71, %p72
      %s74 = smul.u32 %s34, 4
      %s75 = sadd.s32 %s74, 4
      %s76 = smul.u32 %s41, 4
      %s77 = sadd.s32 %s76, 4
      %s78 = ssub.s32 %s33, %s45
      %s79 = ssub.s32 %s75, %s77
      %s80 = sor.u32 %s78, %s79
      %p81 = scmp.eq.s32.totalorder %s80, 0
      %s83 = sadd.s32 %s82, 1
      %s84 = scalar_select %p81, %s82, %s83
      %p87 = pneg %p81
      %p88 = scmp.eq.s32.totalorder %s26, 7
      %p89 = por %p87, %p88
      %p90 = scmp.ne.s32.totalorder %s82, %s85
      %p91 = scmp.eq.s32.totalorder %s26, 0
      %p92 = por %p90, %p91
      %p93 = scmp.ne.s32.totalorder %s82, %s85
      %p94 = scmp.eq.s32.totalorder %s31, 7
      %p95 = por %p93, %p94
      %p96 = scmp.ne.s32.totalorder %s85, %s86
      %p97 = scmp.eq.s32.totalorder %s31, 0
      %p98 = por %p96, %p97
      %p99 = scmp.ne.s32.totalorder %s85, %s86
      %p100 = scmp.eq.s32.totalorder %s32, 7
      %p101 = por %p99, %p100
      %p103 = scmp.ne.s32.totalorder %s86, %s102
      %p104 = scmp.eq.s32.totalorder %s32, 0
      %p105 = por %p103, %p104
      %s106 = ssub.s32 %s33, %s45
      %s107 = ssub.s32 %s34, %s41
      %s108 = sor.u32 %s106, %s107
      %p109 = scmp.eq.s32.totalorder %s108, 0
      %s111 = sadd.s32 %s110, 1
      %s112 = scalar_select %p109, %s110, %s111
      %p115 = pneg %p109
      %p116 = scmp.eq.s32.totalorder %s26, 7
      %p117 = por %p115, %p116
      %p118 = scmp.ne.s32.totalorder %s110, %s113
      %p119 = scmp.eq.s32.totalorder %s26, 0
      %p120 = por %p118, %p119
      %p121 = scmp.ne.s32.totalorder %s110, %s113
      %p122 = scmp.eq.s32.totalorder %s31, 7
      %p123 = por %p121, %p122
      %p124 = scmp.ne.s32.totalorder %s113, %s114
      %p125 = scmp.eq.s32.totalorder %s31, 0
      %p126 = por %p124, %p125
      %p127 = scmp.ne.s32.totalorder %s113, %s114
      %p128 = scmp.eq.s32.totalorder %s32, 7
      %p129 = por %p127, %p128
      %p131 = scmp.ne.s32.totalorder %s114, %s130
      %p132 = scmp.eq.s32.totalorder %s32, 0
      %p133 = por %p131, %p132
      %s134 = smul.u32 %s34, 4
      %s135 = sadd.s32 %s134, 4
      %s136 = smul.u32 %s41, 4
      %s137 = sadd.s32 %s136, 4
      %s138 = ssub.s32 %s33, %s45
      %s139 = ssub.s32 %s135, %s137
      %s140 = sor.u32 %s138, %s139
      %p141 = scmp.eq.s32.totalorder %s140, 0
      %s143 = sadd.s32 %s142, 1
      %s144 = scalar_select %p141, %s142, %s143
      %p147 = pneg %p141
      %p148 = scmp.eq.s32.totalorder %s26, 7
      %p149 = por %p147, %p148
      %p150 = scmp.ne.s32.totalorder %s142, %s145
      %p151 = scmp.eq.s32.totalorder %s26, 0
      %p152 = por %p150, %p151
      %p153 = scmp.ne.s32.totalorder %s142, %s145
      %p154 = scmp.eq.s32.totalorder %s31, 7
      %p155 = por %p153, %p154
      %p156 = scmp.ne.s32.totalorder %s145, %s146
      %p157 = scmp.eq.s32.totalorder %s31, 0
      %p158 = por %p156, %p157
      %p159 = scmp.ne.s32.totalorder %s145, %s146
      %p160 = scmp.eq.s32.totalorder %s32, 7
      %p161 = por %p159, %p160
      %p163 = scmp.ne.s32.totalorder %s146, %s162
      %p164 = scmp.eq.s32.totalorder %s32, 0
      %p165 = por %p163, %p164
      %s167 = sadd.s32 %s166, 1
      %p170 = scmp.eq.s32.totalorder %s26, 7
      %p171 = scmp.ne.s32.totalorder %s166, %s168
      %p172 = scmp.eq.s32.totalorder %s26, 0
      %p173 = por %p171, %p172
      %p174 = scmp.ne.s32.totalorder %s166, %s168
      %p175 = scmp.eq.s32.totalorder %s31, 7
      %p176 = por %p174, %p175
      %p177 = scmp.ne.s32.totalorder %s168, %s169
      %p178 = scmp.eq.s32.totalorder %s31, 0
      %p179 = por %p177, %p178
      %p180 = scmp.ne.s32.totalorder %s168, %s169
      %p181 = scmp.eq.s32.totalorder %s32, 7
      %p182 = por %p180, %p181
      %p184 = scmp.ne.s32.totalorder %s169, %s183
      %p185 = scmp.eq.s32.totalorder %s32, 0
      %p186 = por %p184, %p185
      %s188 = sadd.s32 %s187, 1
      %p191 = scmp.eq.s32.totalorder %s26, 7
      %p192 = scmp.ne.s32.totalorder %s187, %s189
      %p193 = scmp.eq.s32.totalorder %s26, 0
      %p194 = por %p192, %p193
      %p195 = scmp.ne.s32.totalorder %s187, %s189
      %p196 = scmp.eq.s32.totalorder %s31, 7
      %p197 = por %p195, %p196
      %p198 = scmp.ne.s32.totalorder %s189, %s190
      %p199 = scmp.eq.s32.totalorder %s31, 0
      %p200 = por %p198, %p199
      %p201 = scmp.ne.s32.totalorder %s189, %s190
      %p202 = scmp.eq.s32.totalorder %s32, 7
      %p203 = por %p201, %p202
      %p205 = scmp.ne.s32.totalorder %s190, %s204
      %p206 = scmp.eq.s32.totalorder %s32, 0
      %p207 = por %p205, %p206
      %s209 = sadd.s32 %s208, 1
      %p212 = scmp.eq.s32.totalorder %s26, 7
      %p213 = scmp.ne.s32.totalorder %s208, %s210
      %p214 = scmp.eq.s32.totalorder %s26, 0
      %p215 = por %p213, %p214
      %p216 = scmp.ne.s32.totalorder %s208, %s210
      %p217 = scmp.eq.s32.totalorder %s31, 7
      %p218 = por %p216, %p217
      %p219 = scmp.ne.s32.totalorder %s210, %s211
      %p220 = scmp.eq.s32.totalorder %s31, 0
      %p221 = por %p219, %p220
      %p222 = scmp.ne.s32.totalorder %s210, %s211
      %p223 = scmp.eq.s32.totalorder %s32, 7
      %p224 = por %p222, %p223
      %p226 = scmp.ne.s32.totalorder %s211, %s225
      %p227 = scmp.eq.s32.totalorder %s32, 0
      %p228 = por %p226, %p227
      %s229 = ssub.s32 %s33, %s45
      %s230 = ssub.s32 %s34, %s41
      %s231 = sor.u32 %s229, %s230
      %p232 = scmp.eq.s32.totalorder %s231, 0
      %s234 = sadd.s32 %s233, 1
      %s235 = scalar_select %p232, %s233, %s234
      %p238 = pneg %p232
      %p239 = scmp.eq.s32.totalorder %s26, 7
      %p240 = por %p238, %p239
      %p241 = scmp.ne.s32.totalorder %s233, %s236
      %p242 = scmp.eq.s32.totalorder %s26, 0
      %p243 = por %p241, %p242
      %p244 = scmp.ne.s32.totalorder %s233, %s236
      %p245 = scmp.eq.s32.totalorder %s31, 7
      %p246 = por %p244, %p245
      %p247 = scmp.ne.s32.totalorder %s236, %s237
      %p248 = scmp.eq.s32.totalorder %s31, 0
      %p249 = por %p247, %p248
      %p250 = scmp.ne.s32.totalorder %s236, %s237
      %p251 = scmp.eq.s32.totalorder %s32, 7
      %p252 = por %p250, %p251
      %p254 = scmp.ne.s32.totalorder %s237, %s253
      %p255 = scmp.eq.s32.totalorder %s32, 0
      %p256 = por %p254, %p255
      %p257 = scmp.le.s32.totalorder 1, %s26
      %p258 = scmp.lt.s32.totalorder %s26, 9
      %p259 = pnand %p257, %p258
      %p260 = pneg %p259
      // Predicated region
      $region9: #{up_forward.3} parent=5 // pred_check
        _
      $region10: #{up_forward.3} parent=5 // pred_check_branch
        %262 = sbr.rel (%p259) target = $region12
      $region11: #{up_forward.3} parent=5 // pred_region
        %s263 = ssub.s32 %s26, 1
        // Predicated region
        $region13: #{up_forward.3} parent=11 // pred_check
          %p264 = pneg %p179
        $region14: #{up_forward.3} parent=11 // pred_check_branch
          %266 = sbr.rel (%p264) target = $region16
        $region15: #{up_forward.3} parent=11 // pred_region
          %s268 = ssub.s32 1152, 1152
          %269 = vsyncadd [#allocation9], %s268
          %s270 = sshll.u32 [#allocation10], 4
          %s271 = int_to_ptr.vmem [resolvable:$true] %s270
          %276 = dma.hbm_to_vmem [thread:$0]  %s4, 1152, %s271, [#allocation9], 128, 128, 8
        $region16: #{up_forward.3} parent=11 // pred_fallthru
          _
        // Predicated region
        $region17: #{up_forward.3} parent=11 // pred_check
          %p277 = pneg %p200
        $region18: #{up_forward.3} parent=11 // pred_check_branch
          %279 = sbr.rel (%p277) target = $region20
        $region19: #{up_forward.3} parent=11 // pred_region
          %s281 = ssub.s32 1152, 1152
          %282 = vsyncadd [#allocation12], %s281
          %s283 = sshll.u32 [#allocation11], 4
          %s284 = int_to_ptr.vmem [resolvable:$true] %s283
          %289 = dma.hbm_to_vmem [thread:$0]  %s5, 1152, %s284, [#allocation12], 128, 128, 8
        $region20: #{up_forward.3} parent=11 // pred_fallthru
          _
        // Predicated region
        $region21: #{up_forward.3} parent=11 // pred_check
          %p290 = pneg %p221
        $region22: #{up_forward.3} parent=11 // pred_check_branch
          %292 = sbr.rel (%p290) target = $region24
        $region23: #{up_forward.3} parent=11 // pred_region
          %s294 = ssub.s32 16, 16
          %295 = vsyncadd [#allocation12], %s294
          %s297 = sshll.u32 [#allocation13], 4
          %s298 = int_to_ptr.vmem [resolvable:$true] %s297
          %300 = dma.hbm_to_vmem [thread:$0]  %s6, 16, %s298, [#allocation12]
        $region24: #{up_forward.3} parent=11 // pred_fallthru
          _
      $region12: #{up_forward.3} parent=5 // pred_fallthru
        _
      %p301 = scmp.lt.s32.totalorder %s26, 8
      // Predicated region
      $region25: #{up_forward.3} parent=5 // pred_check
        %p302 = pneg %p301
      $region26: #{up_forward.3} parent=5 // pred_check_branch
        %304 = sbr.rel (%p302) target = $region28
      $region27: #{up_forward.3} parent=5 // pred_region
        // Predicated region
        $region29: #{up_forward.3} parent=27 // pred_check
          %p305 = pneg %p60
        $region30: #{up_forward.3} parent=27 // pred_check_branch
          %307 = sbr.rel (%p305) target = $region32
        $region31: #{up_forward.3} parent=27 // pred_region
          %s308 = sand.u32 %s50, 1
          %s309 = scalar_lea.sflag [#allocation3], %s308
          %s310 = sand.u32 %s50, 1
          %s311 = smul.addr %s310, 320
          %s312 = scalar_lea.vmem [#allocation2], %s311
          %s313 = smul.u32 8, %s34
          %s314 = ssub.s32 34, %s313
          %p315 = scmp.lt.s32.totalorder %s314, 8
          %s316 = scalar_select %p315, %s314, 8
          %s317 = smul.u32 128, %s316
          %s318 = smul.u32 %s317, 5
          %s320 = ssub.s32 5120, %s318
          %321 = vsyncadd %s309, %s320
          %p322 = scmp.ne.s32.totalorder 0, %s318
          %s323 = smul.addr %s313, 5
          %s324 = smul.addr %s33, 170
          %s325 = sadd.s32 %s323, %s324
          %s326 = smul.addr %s325, 128
          %s327 = scalar_lea.hbm %s0, %s326
          %s328 = smul.u32 %s316, 5
          %s329 = smul.u32 8, %s328
          %s330 = sshll.u32 %s312, 4
          %s331 = int_to_ptr.vmem [resolvable:$true] %s330
          %s332 = sshll.u32 %s329, 4
          %336 = dma.hbm_to_vmem [thread:$0]  (%p322), %s327, %s332, %s331, %s309, 128, 128, 8
        $region32: #{up_forward.3} parent=27 // pred_fallthru
          _
        // Predicated region
        $region33: #{up_forward.3} parent=27 // pred_check
          %p337 = pneg %p92
        $region34: #{up_forward.3} parent=27 // pred_check_branch
          %339 = sbr.rel (%p337) target = $region36
        $region35: #{up_forward.3} parent=27 // pred_region
          %s340 = sand.u32 %s26, 1
          %s341 = scalar_lea.sflag [#allocation6], %s340
          %s342 = sand.u32 %s82, 1
          %s343 = smul.addr %s342, 80
          %s344 = scalar_lea.vmem [#allocation5], %s343
          %s345 = smul.u32 %s34, 4
          %s346 = sadd.s32 %s345, 4
          %s347 = smul.u32 2, %s346
          %s349 = ssub.s32 1280, 1280
          %350 = vsyncadd %s341, %s349
          %s351 = smul.addr %s347, 5
          %s352 = smul.addr %s33, 170
          %s353 = sadd.s32 %s351, %s352
          %s354 = smul.addr %s353, 128
          %s355 = scalar_lea.hbm %s1, %s354
          %s356 = sshll.u32 %s344, 4
          %s357 = int_to_ptr.vmem [resolvable:$true] %s356
          %362 = dma.hbm_to_vmem [thread:$0]  %s355, 1280, %s357, %s341, 128, 128, 8
        $region36: #{up_forward.3} parent=27 // pred_fallthru
          _
        // Predicated region
        $region37: #{up_forward.3} parent=27 // pred_check
          %p363 = pneg %p120
        $region38: #{up_forward.3} parent=27 // pred_check_branch
          %365 = sbr.rel (%p363) target = $region40
        $region39: #{up_forward.3} parent=27 // pred_region
          %s366 = sand.u32 %s26, 1
          %s367 = scalar_lea.sflag [#allocation6], %s366
          %s368 = sand.u32 %s110, 1
          %s369 = smul.addr %s368, 320
          %s370 = scalar_lea.vmem [#allocation7], %s369
          %s371 = smul.u32 8, %s34
          %s372 = ssub.s32 34, %s371
          %p373 = scmp.lt.s32.totalorder %s372, 8
          %s374 = scalar_select %p373, %s372, 8
          %s375 = smul.u32 128, %s374
          %s376 = smul.u32 %s375, 5
          %s378 = ssub.s32 5120, %s376
          %379 = vsyncadd %s367, %s378
          %p380 = scmp.ne.s32.totalorder 0, %s376
          %s381 = smul.addr %s371, 5
          %s382 = smul.addr %s33, 170
          %s383 = sadd.s32 %s381, %s382
          %s384 = smul.addr %s383, 128
          %s385 = scalar_lea.hbm %s2, %s384
          %s386 = smul.u32 %s374, 5
          %s387 = smul.u32 8, %s386
          %s388 = sshll.u32 %s370, 4
          %s389 = int_to_ptr.vmem [resolvable:$true] %s388
          %s390 = sshll.u32 %s387, 4
          %394 = dma.hbm_to_vmem [thread:$0]  (%p380), %s385, %s390, %s389, %s367, 128, 128, 8
        $region40: #{up_forward.3} parent=27 // pred_fallthru
          _
        // Predicated region
        $region41: #{up_forward.3} parent=27 // pred_check
          %p395 = pneg %p152
        $region42: #{up_forward.3} parent=27 // pred_check_branch
          %397 = sbr.rel (%p395) target = $region44
        $region43: #{up_forward.3} parent=27 // pred_region
          %s398 = sand.u32 %s26, 1
          %s399 = scalar_lea.sflag [#allocation9], %s398
          %s400 = sand.u32 %s142, 1
          %s401 = smul.addr %s400, 80
          %s402 = scalar_lea.vmem [#allocation8], %s401
          %s403 = smul.u32 %s34, 4
          %s404 = sadd.s32 %s403, 4
          %s405 = smul.u32 2, %s404
          %s407 = ssub.s32 1280, 1280
          %408 = vsyncadd %s399, %s407
          %s409 = smul.addr %s405, 5
          %s410 = smul.addr %s33, 170
          %s411 = sadd.s32 %s409, %s410
          %s412 = smul.addr %s411, 128
          %s413 = scalar_lea.hbm %s3, %s412
          %s414 = sshll.u32 %s402, 4
          %s415 = int_to_ptr.vmem [resolvable:$true] %s414
          %420 = dma.hbm_to_vmem [thread:$0]  %s413, 1280, %s415, %s399, 128, 128, 8
        $region44: #{up_forward.3} parent=27 // pred_fallthru
          _
      $region28: #{up_forward.3} parent=5 // pred_fallthru
        _
      %p421 = scmp.le.s32.totalorder 1, %s26
      %p422 = scmp.lt.s32.totalorder %s26, 9
      %p423 = pnand %p421, %p422
      %p424 = pneg %p423
      // Predicated region
      $region45: #{up_forward.3} parent=5 // pred_check
        _
      $region46: #{up_forward.3} parent=5 // pred_check_branch
        %426 = sbr.rel (%p423) target = $region48
      $region47: #{up_forward.3} parent=5 // pred_region
        %s427 = ssub.s32 %s26, 1
        %s428 = sand.u32 %s53, 1
        %s429 = scalar_lea.sflag [#allocation3], %s428
        %s430 = sand.u32 %s53, 1
        %s431 = smul.addr %s430, 320
        %s432 = scalar_lea.vmem [#allocation2], %s431
        // Predicated region
        $region49: #{up_forward.3} parent=47 // pred_check
          %p433 = pneg %p66
        $region50: #{up_forward.3} parent=47 // pred_check_branch
          %435 = sbr.rel (%p433) target = $region52
        $region51: #{up_forward.3} parent=47 // pred_region
          %436 = dma.done %s429, 5120
        $region52: #{up_forward.3} parent=47 // pred_fallthru
          _
        %s437 = sand.u32 %s31, 1
        %s438 = scalar_lea.sflag [#allocation6], %s437
        %s439 = sand.u32 %s85, 1
        %s440 = smul.addr %s439, 80
        %s441 = scalar_lea.vmem [#allocation5], %s440
        // Predicated region
        $region53: #{up_forward.3} parent=47 // pred_check
          %p442 = pneg %p98
        $region54: #{up_forward.3} parent=47 // pred_check_branch
          %444 = sbr.rel (%p442) target = $region56
        $region55: #{up_forward.3} parent=47 // pred_region
          %445 = dma.done %s438, 1280
        $region56: #{up_forward.3} parent=47 // pred_fallthru
          _
        %s446 = sand.u32 %s31, 1
        %s447 = scalar_lea.sflag [#allocation6], %s446
        %s448 = sand.u32 %s113, 1
        %s449 = smul.addr %s448, 320
        %s450 = scalar_lea.vmem [#allocation7], %s449
        // Predicated region
        $region57: #{up_forward.3} parent=47 // pred_check
          %p451 = pneg %p126
        $region58: #{up_forward.3} parent=47 // pred_check_branch
          %453 = sbr.rel (%p451) target = $region60
        $region59: #{up_forward.3} parent=47 // pred_region
          %454 = dma.done %s447, 5120
        $region60: #{up_forward.3} parent=47 // pred_fallthru
          _
        %s455 = sand.u32 %s31, 1
        %s456 = scalar_lea.sflag [#allocation9], %s455
        %s457 = sand.u32 %s145, 1
        %s458 = smul.addr %s457, 80
        %s459 = scalar_lea.vmem [#allocation8], %s458
        // Predicated region
        $region61: #{up_forward.3} parent=47 // pred_check
          %p460 = pneg %p158
        $region62: #{up_forward.3} parent=47 // pred_check_branch
          %462 = sbr.rel (%p460) target = $region64
        $region63: #{up_forward.3} parent=47 // pred_region
          %463 = dma.done %s456, 1280
        $region64: #{up_forward.3} parent=47 // pred_fallthru
          _
        // Predicated region
        $region65: #{up_forward.3} parent=47 // pred_check
          %p464 = pneg %p179
        $region66: #{up_forward.3} parent=47 // pred_check_branch
          %466 = sbr.rel (%p464) target = $region68
        $region67: #{up_forward.3} parent=47 // pred_region
          %467 = dma.done [#allocation9], 1152
        $region68: #{up_forward.3} parent=47 // pred_fallthru
          _
        // Predicated region
        $region69: #{up_forward.3} parent=47 // pred_check
          %p468 = pneg %p200
        $region70: #{up_forward.3} parent=47 // pred_check_branch
          %470 = sbr.rel (%p468) target = $region72
        $region71: #{up_forward.3} parent=47 // pred_region
          %471 = dma.done [#allocation12], 1152
        $region72: #{up_forward.3} parent=47 // pred_fallthru
          _
        // Predicated region
        $region73: #{up_forward.3} parent=47 // pred_check
          %p472 = pneg %p221
        $region74: #{up_forward.3} parent=47 // pred_check_branch
          %474 = sbr.rel (%p472) target = $region76
        $region75: #{up_forward.3} parent=47 // pred_region
          %475 = dma.done [#allocation12], 16
        $region76: #{up_forward.3} parent=47 // pred_fallthru
          _
        %s476 = sand.u32 %s53, 1
        %s477 = scalar_lea.sflag [#allocation3], %s476
        %s478 = sand.u32 %s53, 1
        %s479 = smul.addr %s478, 320
        %s480 = scalar_lea.vmem [#allocation2], %s479
        %p481 = pneg %p66
        %p482 = pneg %p63
        %s483 = sand.u32 %s31, 1
        %s484 = scalar_lea.sflag [#allocation6], %s483
        %s485 = sand.u32 %s85, 1
        %s486 = smul.addr %s485, 80
        %s487 = scalar_lea.vmem [#allocation5], %s486
        %p488 = pneg %p98
        %p489 = pneg %p95
        %s490 = sand.u32 %s31, 1
        %s491 = scalar_lea.sflag [#allocation6], %s490
        %s492 = sand.u32 %s113, 1
        %s493 = smul.addr %s492, 320
        %s494 = scalar_lea.vmem [#allocation7], %s493
        %p495 = pneg %p126
        %p496 = pneg %p123
        %s497 = sand.u32 %s31, 1
        %s498 = scalar_lea.sflag [#allocation9], %s497
        %s499 = sand.u32 %s145, 1
        %s500 = smul.addr %s499, 80
        %s501 = scalar_lea.vmem [#allocation8], %s500
        %p502 = pneg %p158
        %p503 = pneg %p155
        %p504 = pneg %p179
        %p505 = pneg %p176
        %p506 = pneg %p200
        %p507 = pneg %p197
        %p508 = pneg %p221
        %p509 = pneg %p218
        %p510 = pneg %p249
        %p511 = pneg %p246
        %s512 = sand.u32 %s236, 1
        %s513 = scalar_lea.sflag [#allocation4], %s512
        %s514 = sand.u32 %s236, 1
        %s515 = smul.addr %s514, 256
        %s516 = scalar_lea.vmem [#allocation14], %s515
        %s517 = smul.u32 8, %s36
        %s518 = ssub.s32 34, %s517
        %p519 = scmp.lt.s32.totalorder %s518, 8
        %s520 = scalar_select %p519, %s518, 8
        %s521 = smul.u32 128, %s520
        %s522 = smul.u32 %s521, 5
        %s523 = smul.u32 %s36, 4
        %s524 = sadd.s32 %s523, 4
        %s525 = smul.u32 2, %s524
        %s526 = smul.u32 8, %s36
        %s527 = ssub.s32 34, %s526
        %p528 = scmp.lt.s32.totalorder %s527, 8
        %s529 = scalar_select %p528, %s527, 8
        %s530 = smul.u32 128, %s529
        %s531 = smul.u32 %s530, 5
        %s532 = smul.u32 %s36, 4
        %s533 = sadd.s32 %s532, 4
        %s534 = smul.u32 2, %s533
        %s535 = smul.u32 32, %s36
        %v536 = vld [vmem:[%s432] sm:$0xff]
        %v537 = vld [vmem:[%s432 + $0x8] sm:$0xff]
        %v538 = vld [vmem:[%s432 + $0x10] sm:$0xff]
        %v539 = vld [vmem:[%s432 + $0x18] sm:$0xff]
        %v540 = vld [vmem:[%s432 + $0x20] sm:$0x3]
        %v541 = vld [vmem:[%s432 + $0x28] sm:$0xff]
        %v542 = vld [vmem:[%s432 + $0x30] sm:$0xff]
        %v543 = vld [vmem:[%s432 + $0x38] sm:$0xff]
        %v544 = vld [vmem:[%s432 + $0x40] sm:$0xff]
        %v545 = vld [vmem:[%s432 + $0x48] sm:$0x3]
        %v546 = vld [vmem:[%s432 + $0x50] sm:$0xff]
        %v547 = vld [vmem:[%s432 + $0x58] sm:$0xff]
        %v548 = vld [vmem:[%s432 + $0x60] sm:$0xff]
        %v549 = vld [vmem:[%s432 + $0x68] sm:$0xff]
        %v550 = vld [vmem:[%s432 + $0x70] sm:$0x3]
        %v551 = vld [vmem:[%s432 + $0x78] sm:$0xff]
        %v552 = vld [vmem:[%s432 + $0x80] sm:$0xff]
        %v553 = vld [vmem:[%s432 + $0x88] sm:$0xff]
        %v554 = vld [vmem:[%s432 + $0x90] sm:$0xff]
        %v555 = vld [vmem:[%s432 + $0x98] sm:$0x3]
        %v556 = vld [vmem:[%s432 + $0xa0] sm:$0xff]
        %v557 = vld [vmem:[%s432 + $0xa8] sm:$0xff]
        %v558 = vld [vmem:[%s432 + $0xb0] sm:$0xff]
        %v559 = vld [vmem:[%s432 + $0xb8] sm:$0xff]
        %v560 = vld [vmem:[%s432 + $0xc0] sm:$0x3]
        %v561 = vld [vmem:[%s432 + $0xc8] sm:$0xff]
        %v562 = vld [vmem:[%s432 + $0xd0] sm:$0xff]
        %v563 = vld [vmem:[%s432 + $0xd8] sm:$0xff]
        %v564 = vld [vmem:[%s432 + $0xe0] sm:$0xff]
        %v565 = vld [vmem:[%s432 + $0xe8] sm:$0x3]
        %v566 = vld [vmem:[%s432 + $0xf0] sm:$0xff]
        %v567 = vld [vmem:[%s432 + $0xf8] sm:$0xff]
        %v568 = vld [vmem:[%s432 + $0x100] sm:$0xff]
        %v569 = vld [vmem:[%s432 + $0x108] sm:$0xff]
        %v570 = vld [vmem:[%s432 + $0x110] sm:$0x3]
        %v571 = vld [vmem:[%s432 + $0x118] sm:$0xff]
        %v572 = vld [vmem:[%s432 + $0x120] sm:$0xff]
        %v573 = vld [vmem:[%s432 + $0x128] sm:$0xff]
        %v574 = vld [vmem:[%s432 + $0x130] sm:$0xff]
        %v575 = vld [vmem:[%s432 + $0x138] sm:$0x3]
        %v576 = vld [vmem:[%s441] sm:$0xff]
        %v577 = vld [vmem:[%s441 + $0x8] sm:$0xff]
        %v578 = vld [vmem:[%s441 + $0x10] sm:$0xff]
        %v579 = vld [vmem:[%s441 + $0x18] sm:$0xff]
        %v580 = vld [vmem:[%s441 + $0x20] sm:$0x3]
        %v581 = vld [vmem:[%s441 + $0x28] sm:$0xff]
        %v582 = vld [vmem:[%s441 + $0x30] sm:$0xff]
        %v583 = vld [vmem:[%s441 + $0x38] sm:$0xff]
        %v584 = vld [vmem:[%s441 + $0x40] sm:$0xff]
        %v585 = vld [vmem:[%s441 + $0x48] sm:$0x3]
        %vm626 = vcmask 1046528
        %v627 = vrot.slane %v536, 1
        %v628 = vrot.slane %v537, 1
        %v629 = vsel %vm626, %v627, %v628
        %v630 = vrot.slane %v538, 1
        %v631 = vsel %vm626, %v628, %v630
        %v632 = vrot.slane %v539, 1
        %v633 = vsel %vm626, %v630, %v632
        %v634 = vrot.slane %v540, 1
        %v635 = vsel %vm626, %v632, %v634
        %v636 = vrot.slane %v541, 1
        %v637 = vrot.slane %v542, 1
        %v638 = vsel %vm626, %v636, %v637
        %v639 = vrot.slane %v543, 1
        %v640 = vsel %vm626, %v637, %v639
        %v641 = vrot.slane %v544, 1
        %v642 = vsel %vm626, %v639, %v641
        %v643 = vrot.slane %v545, 1
        %v644 = vsel %vm626, %v641, %v643
        %v645 = vrot.slane %v546, 1
        %v646 = vrot.slane %v547, 1
        %v647 = vsel %vm626, %v645, %v646
        %v648 = vrot.slane %v548, 1
        %v649 = vsel %vm626, %v646, %v648
        %v650 = vrot.slane %v549, 1
        %v651 = vsel %vm626, %v648, %v650
        %v652 = vrot.slane %v550, 1
        %v653 = vsel %vm626, %v650, %v652
        %v654 = vrot.slane %v551, 1
        %v655 = vrot.slane %v552, 1
        %v656 = vsel %vm626, %v654, %v655
        %v657 = vrot.slane %v553, 1
        %v658 = vsel %vm626, %v655, %v657
        %v659 = vrot.slane %v554, 1
        %v660 = vsel %vm626, %v657, %v659
        %v661 = vrot.slane %v555, 1
        %v662 = vsel %vm626, %v659, %v661
        %v663 = vrot.slane %v556, 1
        %v664 = vrot.slane %v557, 1
        %v665 = vsel %vm626, %v663, %v664
        %v666 = vrot.slane %v558, 1
        %v667 = vsel %vm626, %v664, %v666
        %v668 = vrot.slane %v559, 1
        %v669 = vsel %vm626, %v666, %v668
        %v670 = vrot.slane %v560, 1
        %v671 = vsel %vm626, %v668, %v670
        %v672 = vrot.slane %v561, 1
        %v673 = vrot.slane %v562, 1
        %v674 = vsel %vm626, %v672, %v673
        %v675 = vrot.slane %v563, 1
        %v676 = vsel %vm626, %v673, %v675
        %v677 = vrot.slane %v564, 1
        %v678 = vsel %vm626, %v675, %v677
        %v679 = vrot.slane %v565, 1
        %v680 = vsel %vm626, %v677, %v679
        %v681 = vrot.slane %v566, 1
        %v682 = vrot.slane %v567, 1
        %v683 = vsel %vm626, %v681, %v682
        %v684 = vrot.slane %v568, 1
        %v685 = vsel %vm626, %v682, %v684
        %v686 = vrot.slane %v569, 1
        %v687 = vsel %vm626, %v684, %v686
        %v688 = vrot.slane %v570, 1
        %v689 = vsel %vm626, %v686, %v688
        %v690 = vrot.slane %v571, 1
        %v691 = vrot.slane %v572, 1
        %v692 = vsel %vm626, %v690, %v691
        %v693 = vrot.slane %v573, 1
        %v694 = vsel %vm626, %v691, %v693
        %v695 = vrot.slane %v574, 1
        %v696 = vsel %vm626, %v693, %v695
        %v697 = vrot.slane %v575, 1
        %v698 = vsel %vm626, %v695, %v697
        %vm699 = vcmask 1045504
        %v700 = vrot.slane %v536, 2
        %v701 = vrot.slane %v537, 2
        %v702 = vsel %vm699, %v700, %v701
        %v703 = vrot.slane %v538, 2
        %v704 = vsel %vm699, %v701, %v703
        %v705 = vrot.slane %v539, 2
        %v706 = vsel %vm699, %v703, %v705
        %v707 = vrot.slane %v540, 2
        %v708 = vsel %vm699, %v705, %v707
        %v709 = vrot.slane %v541, 2
        %v710 = vrot.slane %v542, 2
        %v711 = vsel %vm699, %v709, %v710
        %v712 = vrot.slane %v543, 2
        %v713 = vsel %vm699, %v710, %v712
        %v714 = vrot.slane %v544, 2
        %v715 = vsel %vm699, %v712, %v714
        %v716 = vrot.slane %v545, 2
        %v717 = vsel %vm699, %v714, %v716
        %v718 = vrot.slane %v546, 2
        %v719 = vrot.slane %v547, 2
        %v720 = vsel %vm699, %v718, %v719
        %v721 = vrot.slane %v548, 2
        %v722 = vsel %vm699, %v719, %v721
        %v723 = vrot.slane %v549, 2
        %v724 = vsel %vm699, %v721, %v723
        %v725 = vrot.slane %v550, 2
        %v726 = vsel %vm699, %v723, %v725
        %v727 = vrot.slane %v551, 2
        %v728 = vrot.slane %v552, 2
        %v729 = vsel %vm699, %v727, %v728
        %v730 = vrot.slane %v553, 2
        %v731 = vsel %vm699, %v728, %v730
        %v732 = vrot.slane %v554, 2
        %v733 = vsel %vm699, %v730, %v732
        %v734 = vrot.slane %v555, 2
        %v735 = vsel %vm699, %v732, %v734
        %v736 = vrot.slane %v556, 2
        %v737 = vrot.slane %v557, 2
        %v738 = vsel %vm699, %v736, %v737
        %v739 = vrot.slane %v558, 2
        %v740 = vsel %vm699, %v737, %v739
        %v741 = vrot.slane %v559, 2
        %v742 = vsel %vm699, %v739, %v741
        %v743 = vrot.slane %v560, 2
        %v744 = vsel %vm699, %v741, %v743
        %v745 = vrot.slane %v561, 2
        %v746 = vrot.slane %v562, 2
        %v747 = vsel %vm699, %v745, %v746
        %v748 = vrot.slane %v563, 2
        %v749 = vsel %vm699, %v746, %v748
        %v750 = vrot.slane %v564, 2
        %v751 = vsel %vm699, %v748, %v750
        %v752 = vrot.slane %v565, 2
        %v753 = vsel %vm699, %v750, %v752
        %v754 = vrot.slane %v566, 2
        %v755 = vrot.slane %v567, 2
        %v756 = vsel %vm699, %v754, %v755
        %v757 = vrot.slane %v568, 2
        %v758 = vsel %vm699, %v755, %v757
        %v759 = vrot.slane %v569, 2
        %v760 = vsel %vm699, %v757, %v759
        %v761 = vrot.slane %v570, 2
        %v762 = vsel %vm699, %v759, %v761
        %v763 = vrot.slane %v571, 2
        %v764 = vrot.slane %v572, 2
        %v765 = vsel %vm699, %v763, %v764
        %v766 = vrot.slane %v573, 2
        %v767 = vsel %vm699, %v764, %v766
        %v768 = vrot.slane %v574, 2
        %v769 = vsel %vm699, %v766, %v768
        %v770 = vrot.slane %v575, 2
        %v771 = vsel %vm699, %v768, %v770
        %v777 = vrot.slane %v576, 1
        %v778 = vrot.slane %v577, 1
        %v779 = vsel %vm626, %v777, %v778
        %v780 = vrot.slane %v578, 1
        %v781 = vsel %vm626, %v778, %v780
        %v782 = vrot.slane %v579, 1
        %v783 = vsel %vm626, %v780, %v782
        %v784 = vrot.slane %v580, 1
        %v785 = vsel %vm626, %v782, %v784
        %v786 = vrot.slane %v576, 2
        %v787 = vrot.slane %v577, 2
        %v788 = vsel %vm699, %v786, %v787
        %v789 = vrot.slane %v578, 2
        %v790 = vsel %vm699, %v787, %v789
        %v791 = vrot.slane %v579, 2
        %v792 = vsel %vm699, %v789, %v791
        %v793 = vrot.slane %v580, 2
        %v794 = vsel %vm699, %v791, %v793
        %v800 = vrot.slane %v581, 1
        %v801 = vrot.slane %v582, 1
        %v802 = vsel %vm626, %v800, %v801
        %v803 = vrot.slane %v583, 1
        %v804 = vsel %vm626, %v801, %v803
        %v805 = vrot.slane %v584, 1
        %v806 = vsel %vm626, %v803, %v805
        %v807 = vrot.slane %v585, 1
        %v808 = vsel %vm626, %v805, %v807
        %v809 = vrot.slane %v581, 2
        %v810 = vrot.slane %v582, 2
        %v811 = vsel %vm699, %v809, %v810
        %v812 = vrot.slane %v583, 2
        %v813 = vsel %vm699, %v810, %v812
        %v814 = vrot.slane %v584, 2
        %v815 = vsel %vm699, %v812, %v814
        %v816 = vrot.slane %v585, 2
        %v817 = vsel %vm699, %v814, %v816
        %818 = vrot.lane.b32.xlu0 %v629, 8
        %v819 = vpop.permute.xlu0 %818
        %820 = vrot.lane.b32.xlu0 %v631, 8
        %v821 = vpop.permute.xlu0 %820
        %822 = vrot.lane.b32.xlu0 %v633, 8
        %v823 = vpop.permute.xlu0 %822
        %824 = vrot.lane.b32.xlu0 %v635, 8
        %v825 = vpop.permute.xlu0 %824
        %826 = vrot.lane.b32.xlu0 %v638, 8
        %v827 = vpop.permute.xlu0 %826
        %828 = vrot.lane.b32.xlu0 %v640, 8
        %v829 = vpop.permute.xlu0 %828
        %830 = vrot.lane.b32.xlu0 %v642, 8
        %v831 = vpop.permute.xlu0 %830
        %832 = vrot.lane.b32.xlu0 %v644, 8
        %v833 = vpop.permute.xlu0 %832
        %834 = vrot.lane.b32.xlu0 %v647, 8
        %v835 = vpop.permute.xlu0 %834
        %836 = vrot.lane.b32.xlu0 %v649, 8
        %v837 = vpop.permute.xlu0 %836
        %838 = vrot.lane.b32.xlu0 %v651, 8
        %v839 = vpop.permute.xlu0 %838
        %840 = vrot.lane.b32.xlu0 %v653, 8
        %v841 = vpop.permute.xlu0 %840
        %842 = vrot.lane.b32.xlu0 %v656, 8
        %v843 = vpop.permute.xlu0 %842
        %844 = vrot.lane.b32.xlu0 %v658, 8
        %v845 = vpop.permute.xlu0 %844
        %846 = vrot.lane.b32.xlu0 %v660, 8
        %v847 = vpop.permute.xlu0 %846
        %848 = vrot.lane.b32.xlu0 %v662, 8
        %v849 = vpop.permute.xlu0 %848
        %850 = vrot.lane.b32.xlu0 %v665, 8
        %v851 = vpop.permute.xlu0 %850
        %852 = vrot.lane.b32.xlu0 %v667, 8
        %v853 = vpop.permute.xlu0 %852
        %854 = vrot.lane.b32.xlu0 %v669, 8
        %v855 = vpop.permute.xlu0 %854
        %856 = vrot.lane.b32.xlu0 %v671, 8
        %v857 = vpop.permute.xlu0 %856
        %858 = vrot.lane.b32.xlu0 %v674, 8
        %v859 = vpop.permute.xlu0 %858
        %860 = vrot.lane.b32.xlu0 %v676, 8
        %v861 = vpop.permute.xlu0 %860
        %862 = vrot.lane.b32.xlu0 %v678, 8
        %v863 = vpop.permute.xlu0 %862
        %864 = vrot.lane.b32.xlu0 %v680, 8
        %v865 = vpop.permute.xlu0 %864
        %866 = vrot.lane.b32.xlu0 %v683, 8
        %v867 = vpop.permute.xlu0 %866
        %868 = vrot.lane.b32.xlu0 %v685, 8
        %v869 = vpop.permute.xlu0 %868
        %870 = vrot.lane.b32.xlu0 %v687, 8
        %v871 = vpop.permute.xlu0 %870
        %872 = vrot.lane.b32.xlu0 %v689, 8
        %v873 = vpop.permute.xlu0 %872
        %874 = vrot.lane.b32.xlu0 %v692, 8
        %v875 = vpop.permute.xlu0 %874
        %876 = vrot.lane.b32.xlu0 %v694, 8
        %v877 = vpop.permute.xlu0 %876
        %878 = vrot.lane.b32.xlu0 %v696, 8
        %v879 = vpop.permute.xlu0 %878
        %880 = vrot.lane.b32.xlu0 %v698, 8
        %v881 = vpop.permute.xlu0 %880
        %914 = vrot.lane.b32.xlu0 %v702, 16
        %v915 = vpop.permute.xlu0 %914
        %916 = vrot.lane.b32.xlu0 %v704, 16
        %v917 = vpop.permute.xlu0 %916
        %918 = vrot.lane.b32.xlu0 %v706, 16
        %v919 = vpop.permute.xlu0 %918
        %920 = vrot.lane.b32.xlu0 %v708, 16
        %v921 = vpop.permute.xlu0 %920
        %922 = vrot.lane.b32.xlu0 %v711, 16
        %v923 = vpop.permute.xlu0 %922
        %924 = vrot.lane.b32.xlu0 %v713, 16
        %v925 = vpop.permute.xlu0 %924
        %926 = vrot.lane.b32.xlu0 %v715, 16
        %v927 = vpop.permute.xlu0 %926
        %928 = vrot.lane.b32.xlu0 %v717, 16
        %v929 = vpop.permute.xlu0 %928
        %930 = vrot.lane.b32.xlu0 %v720, 16
        %v931 = vpop.permute.xlu0 %930
        %932 = vrot.lane.b32.xlu0 %v722, 16
        %v933 = vpop.permute.xlu0 %932
        %934 = vrot.lane.b32.xlu0 %v724, 16
        %v935 = vpop.permute.xlu0 %934
        %936 = vrot.lane.b32.xlu0 %v726, 16
        %v937 = vpop.permute.xlu0 %936
        %938 = vrot.lane.b32.xlu0 %v729, 16
        %v939 = vpop.permute.xlu0 %938
        %940 = vrot.lane.b32.xlu0 %v731, 16
        %v941 = vpop.permute.xlu0 %940
        %942 = vrot.lane.b32.xlu0 %v733, 16
        %v943 = vpop.permute.xlu0 %942
        %944 = vrot.lane.b32.xlu0 %v735, 16
        %v945 = vpop.permute.xlu0 %944
        %946 = vrot.lane.b32.xlu0 %v738, 16
        %v947 = vpop.permute.xlu0 %946
        %948 = vrot.lane.b32.xlu0 %v740, 16
        %v949 = vpop.permute.xlu0 %948
        %950 = vrot.lane.b32.xlu0 %v742, 16
        %v951 = vpop.permute.xlu0 %950
        %952 = vrot.lane.b32.xlu0 %v744, 16
        %v953 = vpop.permute.xlu0 %952
        %954 = vrot.lane.b32.xlu0 %v747, 16
        %v955 = vpop.permute.xlu0 %954
        %956 = vrot.lane.b32.xlu0 %v749, 16
        %v957 = vpop.permute.xlu0 %956
        %958 = vrot.lane.b32.xlu0 %v751, 16
        %v959 = vpop.permute.xlu0 %958
        %960 = vrot.lane.b32.xlu0 %v753, 16
        %v961 = vpop.permute.xlu0 %960
        %962 = vrot.lane.b32.xlu0 %v756, 16
        %v963 = vpop.permute.xlu0 %962
        %964 = vrot.lane.b32.xlu0 %v758, 16
        %v965 = vpop.permute.xlu0 %964
        %966 = vrot.lane.b32.xlu0 %v760, 16
        %v967 = vpop.permute.xlu0 %966
        %968 = vrot.lane.b32.xlu0 %v762, 16
        %v969 = vpop.permute.xlu0 %968
        %970 = vrot.lane.b32.xlu0 %v765, 16
        %v971 = vpop.permute.xlu0 %970
        %972 = vrot.lane.b32.xlu0 %v767, 16
        %v973 = vpop.permute.xlu0 %972
        %974 = vrot.lane.b32.xlu0 %v769, 16
        %v975 = vpop.permute.xlu0 %974
        %976 = vrot.lane.b32.xlu0 %v771, 16
        %v977 = vpop.permute.xlu0 %976
        %1010 = vrot.lane.b32.xlu0 %v541, 24
        %v1011 = vpop.permute.xlu0 %1010
        %1012 = vrot.lane.b32.xlu0 %v542, 24
        %v1013 = vpop.permute.xlu0 %1012
        %1014 = vrot.lane.b32.xlu0 %v543, 24
        %v1015 = vpop.permute.xlu0 %1014
        %1016 = vrot.lane.b32.xlu0 %v544, 24
        %v1017 = vpop.permute.xlu0 %1016
        %1018 = vrot.lane.b32.xlu0 %v546, 24
        %v1019 = vpop.permute.xlu0 %1018
        %1020 = vrot.lane.b32.xlu0 %v547, 24
        %v1021 = vpop.permute.xlu0 %1020
        %1022 = vrot.lane.b32.xlu0 %v548, 24
        %v1023 = vpop.permute.xlu0 %1022
        %1024 = vrot.lane.b32.xlu0 %v549, 24
        %v1025 = vpop.permute.xlu0 %1024
        %1026 = vrot.lane.b32.xlu0 %v551, 24
        %v1027 = vpop.permute.xlu0 %1026
        %1028 = vrot.lane.b32.xlu0 %v552, 24
        %v1029 = vpop.permute.xlu0 %1028
        %1030 = vrot.lane.b32.xlu0 %v553, 24
        %v1031 = vpop.permute.xlu0 %1030
        %1032 = vrot.lane.b32.xlu0 %v554, 24
        %v1033 = vpop.permute.xlu0 %1032
        %1034 = vrot.lane.b32.xlu0 %v556, 24
        %v1035 = vpop.permute.xlu0 %1034
        %1036 = vrot.lane.b32.xlu0 %v557, 24
        %v1037 = vpop.permute.xlu0 %1036
        %1038 = vrot.lane.b32.xlu0 %v558, 24
        %v1039 = vpop.permute.xlu0 %1038
        %1040 = vrot.lane.b32.xlu0 %v559, 24
        %v1041 = vpop.permute.xlu0 %1040
        %1042 = vrot.lane.b32.xlu0 %v561, 24
        %v1043 = vpop.permute.xlu0 %1042
        %1044 = vrot.lane.b32.xlu0 %v562, 24
        %v1045 = vpop.permute.xlu0 %1044
        %1046 = vrot.lane.b32.xlu0 %v563, 24
        %v1047 = vpop.permute.xlu0 %1046
        %1048 = vrot.lane.b32.xlu0 %v564, 24
        %v1049 = vpop.permute.xlu0 %1048
        %1050 = vrot.lane.b32.xlu0 %v566, 24
        %v1051 = vpop.permute.xlu0 %1050
        %1052 = vrot.lane.b32.xlu0 %v567, 24
        %v1053 = vpop.permute.xlu0 %1052
        %1054 = vrot.lane.b32.xlu0 %v568, 24
        %v1055 = vpop.permute.xlu0 %1054
        %1056 = vrot.lane.b32.xlu0 %v569, 24
        %v1057 = vpop.permute.xlu0 %1056
        %1058 = vrot.lane.b32.xlu0 %v571, 24
        %v1059 = vpop.permute.xlu0 %1058
        %1060 = vrot.lane.b32.xlu0 %v572, 24
        %v1061 = vpop.permute.xlu0 %1060
        %1062 = vrot.lane.b32.xlu0 %v573, 24
        %v1063 = vpop.permute.xlu0 %1062
        %1064 = vrot.lane.b32.xlu0 %v574, 24
        %v1065 = vpop.permute.xlu0 %1064
        %1066 = vrot.lane.b32.xlu0 %v576, 24
        %v1067 = vpop.permute.xlu0 %1066
        %1068 = vrot.lane.b32.xlu0 %v577, 24
        %v1069 = vpop.permute.xlu0 %1068
        %1070 = vrot.lane.b32.xlu0 %v578, 24
        %v1071 = vpop.permute.xlu0 %1070
        %1072 = vrot.lane.b32.xlu0 %v579, 24
        %v1073 = vpop.permute.xlu0 %1072
        %1106 = vrot.lane.b32.xlu0 %v638, 32
        %v1107 = vpop.permute.xlu0 %1106
        %1108 = vrot.lane.b32.xlu0 %v640, 32
        %v1109 = vpop.permute.xlu0 %1108
        %1110 = vrot.lane.b32.xlu0 %v642, 32
        %v1111 = vpop.permute.xlu0 %1110
        %1112 = vrot.lane.b32.xlu0 %v644, 32
        %v1113 = vpop.permute.xlu0 %1112
        %1114 = vrot.lane.b32.xlu0 %v647, 32
        %v1115 = vpop.permute.xlu0 %1114
        %1116 = vrot.lane.b32.xlu0 %v649, 32
        %v1117 = vpop.permute.xlu0 %1116
        %1118 = vrot.lane.b32.xlu0 %v651, 32
        %v1119 = vpop.permute.xlu0 %1118
        %1120 = vrot.lane.b32.xlu0 %v653, 32
        %v1121 = vpop.permute.xlu0 %1120
        %1122 = vrot.lane.b32.xlu0 %v656, 32
        %v1123 = vpop.permute.xlu0 %1122
        %1124 = vrot.lane.b32.xlu0 %v658, 32
        %v1125 = vpop.permute.xlu0 %1124
        %1126 = vrot.lane.b32.xlu0 %v660, 32
        %v1127 = vpop.permute.xlu0 %1126
        %1128 = vrot.lane.b32.xlu0 %v662, 32
        %v1129 = vpop.permute.xlu0 %1128
        %1130 = vrot.lane.b32.xlu0 %v665, 32
        %v1131 = vpop.permute.xlu0 %1130
        %1132 = vrot.lane.b32.xlu0 %v667, 32
        %v1133 = vpop.permute.xlu0 %1132
        %1134 = vrot.lane.b32.xlu0 %v669, 32
        %v1135 = vpop.permute.xlu0 %1134
        %1136 = vrot.lane.b32.xlu0 %v671, 32
        %v1137 = vpop.permute.xlu0 %1136
        %1138 = vrot.lane.b32.xlu0 %v674, 32
        %v1139 = vpop.permute.xlu0 %1138
        %1140 = vrot.lane.b32.xlu0 %v676, 32
        %v1141 = vpop.permute.xlu0 %1140
        %1142 = vrot.lane.b32.xlu0 %v678, 32
        %v1143 = vpop.permute.xlu0 %1142
        %1144 = vrot.lane.b32.xlu0 %v680, 32
        %v1145 = vpop.permute.xlu0 %1144
        %1146 = vrot.lane.b32.xlu0 %v683, 32
        %v1147 = vpop.permute.xlu0 %1146
        %1148 = vrot.lane.b32.xlu0 %v685, 32
        %v1149 = vpop.permute.xlu0 %1148
        %1150 = vrot.lane.b32.xlu0 %v687, 32
        %v1151 = vpop.permute.xlu0 %1150
        %1152 = vrot.lane.b32.xlu0 %v689, 32
        %v1153 = vpop.permute.xlu0 %1152
        %1154 = vrot.lane.b32.xlu0 %v692, 32
        %v1155 = vpop.permute.xlu0 %1154
        %1156 = vrot.lane.b32.xlu0 %v694, 32
        %v1157 = vpop.permute.xlu0 %1156
        %1158 = vrot.lane.b32.xlu0 %v696, 32
        %v1159 = vpop.permute.xlu0 %1158
        %1160 = vrot.lane.b32.xlu0 %v698, 32
        %v1161 = vpop.permute.xlu0 %1160
        %1162 = vrot.lane.b32.xlu0 %v779, 32
        %v1163 = vpop.permute.xlu0 %1162
        %1164 = vrot.lane.b32.xlu0 %v781, 32
        %v1165 = vpop.permute.xlu0 %1164
        %1166 = vrot.lane.b32.xlu0 %v783, 32
        %v1167 = vpop.permute.xlu0 %1166
        %1168 = vrot.lane.b32.xlu0 %v785, 32
        %v1169 = vpop.permute.xlu0 %1168
        %1202 = vrot.lane.b32.xlu0 %v711, 40
        %v1203 = vpop.permute.xlu0 %1202
        %1204 = vrot.lane.b32.xlu0 %v713, 40
        %v1205 = vpop.permute.xlu0 %1204
        %1206 = vrot.lane.b32.xlu0 %v715, 40
        %v1207 = vpop.permute.xlu0 %1206
        %1208 = vrot.lane.b32.xlu0 %v717, 40
        %v1209 = vpop.permute.xlu0 %1208
        %1210 = vrot.lane.b32.xlu0 %v720, 40
        %v1211 = vpop.permute.xlu0 %1210
        %1212 = vrot.lane.b32.xlu0 %v722, 40
        %v1213 = vpop.permute.xlu0 %1212
        %1214 = vrot.lane.b32.xlu0 %v724, 40
        %v1215 = vpop.permute.xlu0 %1214
        %1216 = vrot.lane.b32.xlu0 %v726, 40
        %v1217 = vpop.permute.xlu0 %1216
        %1218 = vrot.lane.b32.xlu0 %v729, 40
        %v1219 = vpop.permute.xlu0 %1218
        %1220 = vrot.lane.b32.xlu0 %v731, 40
        %v1221 = vpop.permute.xlu0 %1220
        %1222 = vrot.lane.b32.xlu0 %v733, 40
        %v1223 = vpop.permute.xlu0 %1222
        %1224 = vrot.lane.b32.xlu0 %v735, 40
        %v1225 = vpop.permute.xlu0 %1224
        %1226 = vrot.lane.b32.xlu0 %v738, 40
        %v1227 = vpop.permute.xlu0 %1226
        %1228 = vrot.lane.b32.xlu0 %v740, 40
        %v1229 = vpop.permute.xlu0 %1228
        %1230 = vrot.lane.b32.xlu0 %v742, 40
        %v1231 = vpop.permute.xlu0 %1230
        %1232 = vrot.lane.b32.xlu0 %v744, 40
        %v1233 = vpop.permute.xlu0 %1232
        %1234 = vrot.lane.b32.xlu0 %v747, 40
        %v1235 = vpop.permute.xlu0 %1234
        %1236 = vrot.lane.b32.xlu0 %v749, 40
        %v1237 = vpop.permute.xlu0 %1236
        %1238 = vrot.lane.b32.xlu0 %v751, 40
        %v1239 = vpop.permute.xlu0 %1238
        %1240 = vrot.lane.b32.xlu0 %v753, 40
        %v1241 = vpop.permute.xlu0 %1240
        %1242 = vrot.lane.b32.xlu0 %v756, 40
        %v1243 = vpop.permute.xlu0 %1242
        %1244 = vrot.lane.b32.xlu0 %v758, 40
        %v1245 = vpop.permute.xlu0 %1244
        %1246 = vrot.lane.b32.xlu0 %v760, 40
        %v1247 = vpop.permute.xlu0 %1246
        %1248 = vrot.lane.b32.xlu0 %v762, 40
        %v1249 = vpop.permute.xlu0 %1248
        %1250 = vrot.lane.b32.xlu0 %v765, 40
        %v1251 = vpop.permute.xlu0 %1250
        %1252 = vrot.lane.b32.xlu0 %v767, 40
        %v1253 = vpop.permute.xlu0 %1252
        %1254 = vrot.lane.b32.xlu0 %v769, 40
        %v1255 = vpop.permute.xlu0 %1254
        %1256 = vrot.lane.b32.xlu0 %v771, 40
        %v1257 = vpop.permute.xlu0 %1256
        %1258 = vrot.lane.b32.xlu0 %v788, 40
        %v1259 = vpop.permute.xlu0 %1258
        %1260 = vrot.lane.b32.xlu0 %v790, 40
        %v1261 = vpop.permute.xlu0 %1260
        %1262 = vrot.lane.b32.xlu0 %v792, 40
        %v1263 = vpop.permute.xlu0 %1262
        %1264 = vrot.lane.b32.xlu0 %v794, 40
        %v1265 = vpop.permute.xlu0 %1264
        %1298 = vrot.lane.b32.xlu0 %v546, 48
        %v1299 = vpop.permute.xlu0 %1298
        %1300 = vrot.lane.b32.xlu0 %v547, 48
        %v1301 = vpop.permute.xlu0 %1300
        %1302 = vrot.lane.b32.xlu0 %v548, 48
        %v1303 = vpop.permute.xlu0 %1302
        %1304 = vrot.lane.b32.xlu0 %v549, 48
        %v1305 = vpop.permute.xlu0 %1304
        %1306 = vrot.lane.b32.xlu0 %v551, 48
        %v1307 = vpop.permute.xlu0 %1306
        %1308 = vrot.lane.b32.xlu0 %v552, 48
        %v1309 = vpop.permute.xlu0 %1308
        %1310 = vrot.lane.b32.xlu0 %v553, 48
        %v1311 = vpop.permute.xlu0 %1310
        %1312 = vrot.lane.b32.xlu0 %v554, 48
        %v1313 = vpop.permute.xlu0 %1312
        %1314 = vrot.lane.b32.xlu0 %v556, 48
        %v1315 = vpop.permute.xlu0 %1314
        %1316 = vrot.lane.b32.xlu0 %v557, 48
        %v1317 = vpop.permute.xlu0 %1316
        %1318 = vrot.lane.b32.xlu0 %v558, 48
        %v1319 = vpop.permute.xlu0 %1318
        %1320 = vrot.lane.b32.xlu0 %v559, 48
        %v1321 = vpop.permute.xlu0 %1320
        %1322 = vrot.lane.b32.xlu0 %v561, 48
        %v1323 = vpop.permute.xlu0 %1322
        %1324 = vrot.lane.b32.xlu0 %v562, 48
        %v1325 = vpop.permute.xlu0 %1324
        %1326 = vrot.lane.b32.xlu0 %v563, 48
        %v1327 = vpop.permute.xlu0 %1326
        %1328 = vrot.lane.b32.xlu0 %v564, 48
        %v1329 = vpop.permute.xlu0 %1328
        %1330 = vrot.lane.b32.xlu0 %v566, 48
        %v1331 = vpop.permute.xlu0 %1330
        %1332 = vrot.lane.b32.xlu0 %v567, 48
        %v1333 = vpop.permute.xlu0 %1332
        %1334 = vrot.lane.b32.xlu0 %v568, 48
        %v1335 = vpop.permute.xlu0 %1334
        %1336 = vrot.lane.b32.xlu0 %v569, 48
        %v1337 = vpop.permute.xlu0 %1336
        %1338 = vrot.lane.b32.xlu0 %v571, 48
        %v1339 = vpop.permute.xlu0 %1338
        %1340 = vrot.lane.b32.xlu0 %v572, 48
        %v1341 = vpop.permute.xlu0 %1340
        %1342 = vrot.lane.b32.xlu0 %v573, 48
        %v1343 = vpop.permute.xlu0 %1342
        %1344 = vrot.lane.b32.xlu0 %v574, 48
        %v1345 = vpop.permute.xlu0 %1344
        %1346 = vrot.lane.b32.xlu0 %v576, 48
        %v1347 = vpop.permute.xlu0 %1346
        %1348 = vrot.lane.b32.xlu0 %v577, 48
        %v1349 = vpop.permute.xlu0 %1348
        %1350 = vrot.lane.b32.xlu0 %v578, 48
        %v1351 = vpop.permute.xlu0 %1350
        %1352 = vrot.lane.b32.xlu0 %v579, 48
        %v1353 = vpop.permute.xlu0 %1352
        %1354 = vrot.lane.b32.xlu0 %v581, 48
        %v1355 = vpop.permute.xlu0 %1354
        %1356 = vrot.lane.b32.xlu0 %v582, 48
        %v1357 = vpop.permute.xlu0 %1356
        %1358 = vrot.lane.b32.xlu0 %v583, 48
        %v1359 = vpop.permute.xlu0 %1358
        %1360 = vrot.lane.b32.xlu0 %v584, 48
        %v1361 = vpop.permute.xlu0 %1360
        %1394 = vrot.lane.b32.xlu0 %v647, 56
        %v1395 = vpop.permute.xlu0 %1394
        %1396 = vrot.lane.b32.xlu0 %v649, 56
        %v1397 = vpop.permute.xlu0 %1396
        %1398 = vrot.lane.b32.xlu0 %v651, 56
        %v1399 = vpop.permute.xlu0 %1398
        %1400 = vrot.lane.b32.xlu0 %v653, 56
        %v1401 = vpop.permute.xlu0 %1400
        %1402 = vrot.lane.b32.xlu0 %v656, 56
        %v1403 = vpop.permute.xlu0 %1402
        %1404 = vrot.lane.b32.xlu0 %v658, 56
        %v1405 = vpop.permute.xlu0 %1404
        %1406 = vrot.lane.b32.xlu0 %v660, 56
        %v1407 = vpop.permute.xlu0 %1406
        %1408 = vrot.lane.b32.xlu0 %v662, 56
        %v1409 = vpop.permute.xlu0 %1408
        %1410 = vrot.lane.b32.xlu0 %v665, 56
        %v1411 = vpop.permute.xlu0 %1410
        %1412 = vrot.lane.b32.xlu0 %v667, 56
        %v1413 = vpop.permute.xlu0 %1412
        %1414 = vrot.lane.b32.xlu0 %v669, 56
        %v1415 = vpop.permute.xlu0 %1414
        %1416 = vrot.lane.b32.xlu0 %v671, 56
        %v1417 = vpop.permute.xlu0 %1416
        %1418 = vrot.lane.b32.xlu0 %v674, 56
        %v1419 = vpop.permute.xlu0 %1418
        %1420 = vrot.lane.b32.xlu0 %v676, 56
        %v1421 = vpop.permute.xlu0 %1420
        %1422 = vrot.lane.b32.xlu0 %v678, 56
        %v1423 = vpop.permute.xlu0 %1422
        %1424 = vrot.lane.b32.xlu0 %v680, 56
        %v1425 = vpop.permute.xlu0 %1424
        %1426 = vrot.lane.b32.xlu0 %v683, 56
        %v1427 = vpop.permute.xlu0 %1426
        %1428 = vrot.lane.b32.xlu0 %v685, 56
        %v1429 = vpop.permute.xlu0 %1428
        %1430 = vrot.lane.b32.xlu0 %v687, 56
        %v1431 = vpop.permute.xlu0 %1430
        %1432 = vrot.lane.b32.xlu0 %v689, 56
        %v1433 = vpop.permute.xlu0 %1432
        %1434 = vrot.lane.b32.xlu0 %v692, 56
        %v1435 = vpop.permute.xlu0 %1434
        %1436 = vrot.lane.b32.xlu0 %v694, 56
        %v1437 = vpop.permute.xlu0 %1436
        %1438 = vrot.lane.b32.xlu0 %v696, 56
        %v1439 = vpop.permute.xlu0 %1438
        %1440 = vrot.lane.b32.xlu0 %v698, 56
        %v1441 = vpop.permute.xlu0 %1440
        %1442 = vrot.lane.b32.xlu0 %v779, 56
        %v1443 = vpop.permute.xlu0 %1442
        %1444 = vrot.lane.b32.xlu0 %v781, 56
        %v1445 = vpop.permute.xlu0 %1444
        %1446 = vrot.lane.b32.xlu0 %v783, 56
        %v1447 = vpop.permute.xlu0 %1446
        %1448 = vrot.lane.b32.xlu0 %v785, 56
        %v1449 = vpop.permute.xlu0 %1448
        %1450 = vrot.lane.b32.xlu0 %v802, 56
        %v1451 = vpop.permute.xlu0 %1450
        %1452 = vrot.lane.b32.xlu0 %v804, 56
        %v1453 = vpop.permute.xlu0 %1452
        %1454 = vrot.lane.b32.xlu0 %v806, 56
        %v1455 = vpop.permute.xlu0 %1454
        %1456 = vrot.lane.b32.xlu0 %v808, 56
        %v1457 = vpop.permute.xlu0 %1456
        %1490 = vrot.lane.b32.xlu0 %v720, 64
        %v1491 = vpop.permute.xlu0 %1490
        %1492 = vrot.lane.b32.xlu0 %v722, 64
        %v1493 = vpop.permute.xlu0 %1492
        %1494 = vrot.lane.b32.xlu0 %v724, 64
        %v1495 = vpop.permute.xlu0 %1494
        %1496 = vrot.lane.b32.xlu0 %v726, 64
        %v1497 = vpop.permute.xlu0 %1496
        %1498 = vrot.lane.b32.xlu0 %v729, 64
        %v1499 = vpop.permute.xlu0 %1498
        %1500 = vrot.lane.b32.xlu0 %v731, 64
        %v1501 = vpop.permute.xlu0 %1500
        %1502 = vrot.lane.b32.xlu0 %v733, 64
        %v1503 = vpop.permute.xlu0 %1502
        %1504 = vrot.lane.b32.xlu0 %v735, 64
        %v1505 = vpop.permute.xlu0 %1504
        %1506 = vrot.lane.b32.xlu0 %v738, 64
        %v1507 = vpop.permute.xlu0 %1506
        %1508 = vrot.lane.b32.xlu0 %v740, 64
        %v1509 = vpop.permute.xlu0 %1508
        %1510 = vrot.lane.b32.xlu0 %v742, 64
        %v1511 = vpop.permute.xlu0 %1510
        %1512 = vrot.lane.b32.xlu0 %v744, 64
        %v1513 = vpop.permute.xlu0 %1512
        %1514 = vrot.lane.b32.xlu0 %v747, 64
        %v1515 = vpop.permute.xlu0 %1514
        %1516 = vrot.lane.b32.xlu0 %v749, 64
        %v1517 = vpop.permute.xlu0 %1516
        %1518 = vrot.lane.b32.xlu0 %v751, 64
        %v1519 = vpop.permute.xlu0 %1518
        %1520 = vrot.lane.b32.xlu0 %v753, 64
        %v1521 = vpop.permute.xlu0 %1520
        %1522 = vrot.lane.b32.xlu0 %v756, 64
        %v1523 = vpop.permute.xlu0 %1522
        %1524 = vrot.lane.b32.xlu0 %v758, 64
        %v1525 = vpop.permute.xlu0 %1524
        %1526 = vrot.lane.b32.xlu0 %v760, 64
        %v1527 = vpop.permute.xlu0 %1526
        %1528 = vrot.lane.b32.xlu0 %v762, 64
        %v1529 = vpop.permute.xlu0 %1528
        %1530 = vrot.lane.b32.xlu0 %v765, 64
        %v1531 = vpop.permute.xlu0 %1530
        %1532 = vrot.lane.b32.xlu0 %v767, 64
        %v1533 = vpop.permute.xlu0 %1532
        %1534 = vrot.lane.b32.xlu0 %v769, 64
        %v1535 = vpop.permute.xlu0 %1534
        %1536 = vrot.lane.b32.xlu0 %v771, 64
        %v1537 = vpop.permute.xlu0 %1536
        %1538 = vrot.lane.b32.xlu0 %v788, 64
        %v1539 = vpop.permute.xlu0 %1538
        %1540 = vrot.lane.b32.xlu0 %v790, 64
        %v1541 = vpop.permute.xlu0 %1540
        %1542 = vrot.lane.b32.xlu0 %v792, 64
        %v1543 = vpop.permute.xlu0 %1542
        %1544 = vrot.lane.b32.xlu0 %v794, 64
        %v1545 = vpop.permute.xlu0 %1544
        %1546 = vrot.lane.b32.xlu0 %v811, 64
        %v1547 = vpop.permute.xlu0 %1546
        %1548 = vrot.lane.b32.xlu0 %v813, 64
        %v1549 = vpop.permute.xlu0 %1548
        %1550 = vrot.lane.b32.xlu0 %v815, 64
        %v1551 = vpop.permute.xlu0 %1550
        %1552 = vrot.lane.b32.xlu0 %v817, 64
        %v1553 = vpop.permute.xlu0 %1552
        %vm1586 = vcmask 64512
        %v1587 = vsel %vm1586, %v536, %v819
        %v1588 = vsel %vm1586, %v537, %v821
        %v1589 = vsel %vm1586, %v538, %v823
        %v1590 = vsel %vm1586, %v539, %v825
        %v1591 = vsel %vm1586, %v541, %v827
        %v1592 = vsel %vm1586, %v542, %v829
        %v1593 = vsel %vm1586, %v543, %v831
        %v1594 = vsel %vm1586, %v544, %v833
        %v1595 = vsel %vm1586, %v546, %v835
        %v1596 = vsel %vm1586, %v547, %v837
        %v1597 = vsel %vm1586, %v548, %v839
        %v1598 = vsel %vm1586, %v549, %v841
        %v1599 = vsel %vm1586, %v551, %v843
        %v1600 = vsel %vm1586, %v552, %v845
        %v1601 = vsel %vm1586, %v553, %v847
        %v1602 = vsel %vm1586, %v554, %v849
        %v1603 = vsel %vm1586, %v556, %v851
        %v1604 = vsel %vm1586, %v557, %v853
        %v1605 = vsel %vm1586, %v558, %v855
        %v1606 = vsel %vm1586, %v559, %v857
        %v1607 = vsel %vm1586, %v561, %v859
        %v1608 = vsel %vm1586, %v562, %v861
        %v1609 = vsel %vm1586, %v563, %v863
        %v1610 = vsel %vm1586, %v564, %v865
        %v1611 = vsel %vm1586, %v566, %v867
        %v1612 = vsel %vm1586, %v567, %v869
        %v1613 = vsel %vm1586, %v568, %v871
        %v1614 = vsel %vm1586, %v569, %v873
        %v1615 = vsel %vm1586, %v571, %v875
        %v1616 = vsel %vm1586, %v572, %v877
        %v1617 = vsel %vm1586, %v573, %v879
        %v1618 = vsel %vm1586, %v574, %v881
        %vm1619 = vcmask 130048
        %v1620 = vsel %vm1619, %v1587, %v915
        %v1621 = vsel %vm1619, %v1588, %v917
        %v1622 = vsel %vm1619, %v1589, %v919
        %v1623 = vsel %vm1619, %v1590, %v921
        %v1624 = vsel %vm1619, %v1591, %v923
        %v1625 = vsel %vm1619, %v1592, %v925
        %v1626 = vsel %vm1619, %v1593, %v927
        %v1627 = vsel %vm1619, %v1594, %v929
        %v1628 = vsel %vm1619, %v1595, %v931
        %v1629 = vsel %vm1619, %v1596, %v933
        %v1630 = vsel %vm1619, %v1597, %v935
        %v1631 = vsel %vm1619, %v1598, %v937
        %v1632 = vsel %vm1619, %v1599, %v939
        %v1633 = vsel %vm1619, %v1600, %v941
        %v1634 = vsel %vm1619, %v1601, %v943
        %v1635 = vsel %vm1619, %v1602, %v945
        %v1636 = vsel %vm1619, %v1603, %v947
        %v1637 = vsel %vm1619, %v1604, %v949
        %v1638 = vsel %vm1619, %v1605, %v951
        %v1639 = vsel %vm1619, %v1606, %v953
        %v1640 = vsel %vm1619, %v1607, %v955
        %v1641 = vsel %vm1619, %v1608, %v957
        %v1642 = vsel %vm1619, %v1609, %v959
        %v1643 = vsel %vm1619, %v1610, %v961
        %v1644 = vsel %vm1619, %v1611, %v963
        %v1645 = vsel %vm1619, %v1612, %v965
        %v1646 = vsel %vm1619, %v1613, %v967
        %v1647 = vsel %vm1619, %v1614, %v969
        %v1648 = vsel %vm1619, %v1615, %v971
        %v1649 = vsel %vm1619, %v1616, %v973
        %v1650 = vsel %vm1619, %v1617, %v975
        %v1651 = vsel %vm1619, %v1618, %v977
        %vm1652 = vcmask 195584
        %v1653 = vsel %vm1652, %v1620, %v1011
        %v1654 = vsel %vm1652, %v1621, %v1013
        %v1655 = vsel %vm1652, %v1622, %v1015
        %v1656 = vsel %vm1652, %v1623, %v1017
        %v1657 = vsel %vm1652, %v1624, %v1019
        %v1658 = vsel %vm1652, %v1625, %v1021
        %v1659 = vsel %vm1652, %v1626, %v1023
        %v1660 = vsel %vm1652, %v1627, %v1025
        %v1661 = vsel %vm1652, %v1628, %v1027
        %v1662 = vsel %vm1652, %v1629, %v1029
        %v1663 = vsel %vm1652, %v1630, %v1031
        %v1664 = vsel %vm1652, %v1631, %v1033
        %v1665 = vsel %vm1652, %v1632, %v1035
        %v1666 = vsel %vm1652, %v1633, %v1037
        %v1667 = vsel %vm1652, %v1634, %v1039
        %v1668 = vsel %vm1652, %v1635, %v1041
        %v1669 = vsel %vm1652, %v1636, %v1043
        %v1670 = vsel %vm1652, %v1637, %v1045
        %v1671 = vsel %vm1652, %v1638, %v1047
        %v1672 = vsel %vm1652, %v1639, %v1049
        %v1673 = vsel %vm1652, %v1640, %v1051
        %v1674 = vsel %vm1652, %v1641, %v1053
        %v1675 = vsel %vm1652, %v1642, %v1055
        %v1676 = vsel %vm1652, %v1643, %v1057
        %v1677 = vsel %vm1652, %v1644, %v1059
        %v1678 = vsel %vm1652, %v1645, %v1061
        %v1679 = vsel %vm1652, %v1646, %v1063
        %v1680 = vsel %vm1652, %v1647, %v1065
        %v1681 = vsel %vm1652, %v1648, %v1067
        %v1682 = vsel %vm1652, %v1649, %v1069
        %v1683 = vsel %vm1652, %v1650, %v1071
        %v1684 = vsel %vm1652, %v1651, %v1073
        %vm1685 = vcmask 261120
        %v1686 = vsel %vm1685, %v1653, %v1107
        %v1687 = vsel %vm1685, %v1654, %v1109
        %v1688 = vsel %vm1685, %v1655, %v1111
        %v1689 = vsel %vm1685, %v1656, %v1113
        %v1690 = vsel %vm1685, %v1657, %v1115
        %v1691 = vsel %vm1685, %v1658, %v1117
        %v1692 = vsel %vm1685, %v1659, %v1119
        %v1693 = vsel %vm1685, %v1660, %v1121
        %v1694 = vsel %vm1685, %v1661, %v1123
        %v1695 = vsel %vm1685, %v1662, %v1125
        %v1696 = vsel %vm1685, %v1663, %v1127
        %v1697 = vsel %vm1685, %v1664, %v1129
        %v1698 = vsel %vm1685, %v1665, %v1131
        %v1699 = vsel %vm1685, %v1666, %v1133
        %v1700 = vsel %vm1685, %v1667, %v1135
        %v1701 = vsel %vm1685, %v1668, %v1137
        %v1702 = vsel %vm1685, %v1669, %v1139
        %v1703 = vsel %vm1685, %v1670, %v1141
        %v1704 = vsel %vm1685, %v1671, %v1143
        %v1705 = vsel %vm1685, %v1672, %v1145
        %v1706 = vsel %vm1685, %v1673, %v1147
        %v1707 = vsel %vm1685, %v1674, %v1149
        %v1708 = vsel %vm1685, %v1675, %v1151
        %v1709 = vsel %vm1685, %v1676, %v1153
        %v1710 = vsel %vm1685, %v1677, %v1155
        %v1711 = vsel %vm1685, %v1678, %v1157
        %v1712 = vsel %vm1685, %v1679, %v1159
        %v1713 = vsel %vm1685, %v1680, %v1161
        %v1714 = vsel %vm1685, %v1681, %v1163
        %v1715 = vsel %vm1685, %v1682, %v1165
        %v1716 = vsel %vm1685, %v1683, %v1167
        %v1717 = vsel %vm1685, %v1684, %v1169
        %vm1718 = vcmask 326656
        %v1719 = vsel %vm1718, %v1686, %v1203
        %v1720 = vsel %vm1718, %v1687, %v1205
        %v1721 = vsel %vm1718, %v1688, %v1207
        %v1722 = vsel %vm1718, %v1689, %v1209
        %v1723 = vsel %vm1718, %v1690, %v1211
        %v1724 = vsel %vm1718, %v1691, %v1213
        %v1725 = vsel %vm1718, %v1692, %v1215
        %v1726 = vsel %vm1718, %v1693, %v1217
        %v1727 = vsel %vm1718, %v1694, %v1219
        %v1728 = vsel %vm1718, %v1695, %v1221
        %v1729 = vsel %vm1718, %v1696, %v1223
        %v1730 = vsel %vm1718, %v1697, %v1225
        %v1731 = vsel %vm1718, %v1698, %v1227
        %v1732 = vsel %vm1718, %v1699, %v1229
        %v1733 = vsel %vm1718, %v1700, %v1231
        %v1734 = vsel %vm1718, %v1701, %v1233
        %v1735 = vsel %vm1718, %v1702, %v1235
        %v1736 = vsel %vm1718, %v1703, %v1237
        %v1737 = vsel %vm1718, %v1704, %v1239
        %v1738 = vsel %vm1718, %v1705, %v1241
        %v1739 = vsel %vm1718, %v1706, %v1243
        %v1740 = vsel %vm1718, %v1707, %v1245
        %v1741 = vsel %vm1718, %v1708, %v1247
        %v1742 = vsel %vm1718, %v1709, %v1249
        %v1743 = vsel %vm1718, %v1710, %v1251
        %v1744 = vsel %vm1718, %v1711, %v1253
        %v1745 = vsel %vm1718, %v1712, %v1255
        %v1746 = vsel %vm1718, %v1713, %v1257
        %v1747 = vsel %vm1718, %v1714, %v1259
        %v1748 = vsel %vm1718, %v1715, %v1261
        %v1749 = vsel %vm1718, %v1716, %v1263
        %v1750 = vsel %vm1718, %v1717, %v1265
        %vm1751 = vcmask 392192
        %v1752 = vsel %vm1751, %v1719, %v1299
        %v1753 = vsel %vm1751, %v1720, %v1301
        %v1754 = vsel %vm1751, %v1721, %v1303
        %v1755 = vsel %vm1751, %v1722, %v1305
        %v1756 = vsel %vm1751, %v1723, %v1307
        %v1757 = vsel %vm1751, %v1724, %v1309
        %v1758 = vsel %vm1751, %v1725, %v1311
        %v1759 = vsel %vm1751, %v1726, %v1313
        %v1760 = vsel %vm1751, %v1727, %v1315
        %v1761 = vsel %vm1751, %v1728, %v1317
        %v1762 = vsel %vm1751, %v1729, %v1319
        %v1763 = vsel %vm1751, %v1730, %v1321
        %v1764 = vsel %vm1751, %v1731, %v1323
        %v1765 = vsel %vm1751, %v1732, %v1325
        %v1766 = vsel %vm1751, %v1733, %v1327
        %v1767 = vsel %vm1751, %v1734, %v1329
        %v1768 = vsel %vm1751, %v1735, %v1331
        %v1769 = vsel %vm1751, %v1736, %v1333
        %v1770 = vsel %vm1751, %v1737, %v1335
        %v1771 = vsel %vm1751, %v1738, %v1337
        %v1772 = vsel %vm1751, %v1739, %v1339
        %v1773 = vsel %vm1751, %v1740, %v1341
        %v1774 = vsel %vm1751, %v1741, %v1343
        %v1775 = vsel %vm1751, %v1742, %v1345
        %v1776 = vsel %vm1751, %v1743, %v1347
        %v1777 = vsel %vm1751, %v1744, %v1349
        %v1778 = vsel %vm1751, %v1745, %v1351
        %v1779 = vsel %vm1751, %v1746, %v1353
        %v1780 = vsel %vm1751, %v1747, %v1355
        %v1781 = vsel %vm1751, %v1748, %v1357
        %v1782 = vsel %vm1751, %v1749, %v1359
        %v1783 = vsel %vm1751, %v1750, %v1361
        %vm1784 = vcmask 457728
        %v1785 = vsel %vm1784, %v1752, %v1395
        %v1786 = vsel %vm1784, %v1753, %v1397
        %v1787 = vsel %vm1784, %v1754, %v1399
        %v1788 = vsel %vm1784, %v1755, %v1401
        %v1789 = vsel %vm1784, %v1756, %v1403
        %v1790 = vsel %vm1784, %v1757, %v1405
        %v1791 = vsel %vm1784, %v1758, %v1407
        %v1792 = vsel %vm1784, %v1759, %v1409
        %v1793 = vsel %vm1784, %v1760, %v1411
        %v1794 = vsel %vm1784, %v1761, %v1413
        %v1795 = vsel %vm1784, %v1762, %v1415
        %v1796 = vsel %vm1784, %v1763, %v1417
        %v1797 = vsel %vm1784, %v1764, %v1419
        %v1798 = vsel %vm1784, %v1765, %v1421
        %v1799 = vsel %vm1784, %v1766, %v1423
        %v1800 = vsel %vm1784, %v1767, %v1425
        %v1801 = vsel %vm1784, %v1768, %v1427
        %v1802 = vsel %vm1784, %v1769, %v1429
        %v1803 = vsel %vm1784, %v1770, %v1431
        %v1804 = vsel %vm1784, %v1771, %v1433
        %v1805 = vsel %vm1784, %v1772, %v1435
        %v1806 = vsel %vm1784, %v1773, %v1437
        %v1807 = vsel %vm1784, %v1774, %v1439
        %v1808 = vsel %vm1784, %v1775, %v1441
        %v1809 = vsel %vm1784, %v1776, %v1443
        %v1810 = vsel %vm1784, %v1777, %v1445
        %v1811 = vsel %vm1784, %v1778, %v1447
        %v1812 = vsel %vm1784, %v1779, %v1449
        %v1813 = vsel %vm1784, %v1780, %v1451
        %v1814 = vsel %vm1784, %v1781, %v1453
        %v1815 = vsel %vm1784, %v1782, %v1455
        %v1816 = vsel %vm1784, %v1783, %v1457
        %vm1817 = vcmask 523264
        %v1818 = vsel %vm1817, %v1785, %v1491
        %v1819 = vsel %vm1817, %v1786, %v1493
        %v1820 = vsel %vm1817, %v1787, %v1495
        %v1821 = vsel %vm1817, %v1788, %v1497
        %v1822 = vsel %vm1817, %v1789, %v1499
        %v1823 = vsel %vm1817, %v1790, %v1501
        %v1824 = vsel %vm1817, %v1791, %v1503
        %v1825 = vsel %vm1817, %v1792, %v1505
        %v1826 = vsel %vm1817, %v1793, %v1507
        %v1827 = vsel %vm1817, %v1794, %v1509
        %v1828 = vsel %vm1817, %v1795, %v1511
        %v1829 = vsel %vm1817, %v1796, %v1513
        %v1830 = vsel %vm1817, %v1797, %v1515
        %v1831 = vsel %vm1817, %v1798, %v1517
        %v1832 = vsel %vm1817, %v1799, %v1519
        %v1833 = vsel %vm1817, %v1800, %v1521
        %v1834 = vsel %vm1817, %v1801, %v1523
        %v1835 = vsel %vm1817, %v1802, %v1525
        %v1836 = vsel %vm1817, %v1803, %v1527
        %v1837 = vsel %vm1817, %v1804, %v1529
        %v1838 = vsel %vm1817, %v1805, %v1531
        %v1839 = vsel %vm1817, %v1806, %v1533
        %v1840 = vsel %vm1817, %v1807, %v1535
        %v1841 = vsel %vm1817, %v1808, %v1537
        %v1842 = vsel %vm1817, %v1809, %v1539
        %v1843 = vsel %vm1817, %v1810, %v1541
        %v1844 = vsel %vm1817, %v1811, %v1543
        %v1845 = vsel %vm1817, %v1812, %v1545
        %v1846 = vsel %vm1817, %v1813, %v1547
        %v1847 = vsel %vm1817, %v1814, %v1549
        %v1848 = vsel %vm1817, %v1815, %v1551
        %v1849 = vsel %vm1817, %v1816, %v1553
        %v1850 = vld [vmem:[#allocation10] sm:$0xff]
        %v1851 = vld [vmem:[#allocation10 + $0x8] sm:$0xff]
        %v1852 = vld [vmem:[#allocation10 + $0x10] sm:$0xff]
        %v1853 = vld [vmem:[#allocation10 + $0x18] sm:$0xff]
        %v1854 = vld [vmem:[#allocation10 + $0x20] sm:$0xff]
        %v1855 = vld [vmem:[#allocation10 + $0x28] sm:$0xff]
        %v1856 = vld [vmem:[#allocation10 + $0x30] sm:$0xff]
        %v1857 = vld [vmem:[#allocation10 + $0x38] sm:$0xff]
        %v1858 = vld [vmem:[#allocation10 + $0x40] sm:$0xff]
        %v1859 = vld [vmem:[%s450] sm:$0xff]
        %v1860 = vld [vmem:[%s450 + $0x8] sm:$0xff]
        %v1861 = vld [vmem:[%s450 + $0x10] sm:$0xff]
        %v1862 = vld [vmem:[%s450 + $0x18] sm:$0xff]
        %v1863 = vld [vmem:[%s450 + $0x20] sm:$0x3]
        %v1864 = vld [vmem:[%s450 + $0x28] sm:$0xff]
        %v1865 = vld [vmem:[%s450 + $0x30] sm:$0xff]
        %v1866 = vld [vmem:[%s450 + $0x38] sm:$0xff]
        %v1867 = vld [vmem:[%s450 + $0x40] sm:$0xff]
        %v1868 = vld [vmem:[%s450 + $0x48] sm:$0x3]
        %v1869 = vld [vmem:[%s450 + $0x50] sm:$0xff]
        %v1870 = vld [vmem:[%s450 + $0x58] sm:$0xff]
        %v1871 = vld [vmem:[%s450 + $0x60] sm:$0xff]
        %v1872 = vld [vmem:[%s450 + $0x68] sm:$0xff]
        %v1873 = vld [vmem:[%s450 + $0x70] sm:$0x3]
        %v1874 = vld [vmem:[%s450 + $0x78] sm:$0xff]
        %v1875 = vld [vmem:[%s450 + $0x80] sm:$0xff]
        %v1876 = vld [vmem:[%s450 + $0x88] sm:$0xff]
        %v1877 = vld [vmem:[%s450 + $0x90] sm:$0xff]
        %v1878 = vld [vmem:[%s450 + $0x98] sm:$0x3]
        %v1879 = vld [vmem:[%s450 + $0xa0] sm:$0xff]
        %v1880 = vld [vmem:[%s450 + $0xa8] sm:$0xff]
        %v1881 = vld [vmem:[%s450 + $0xb0] sm:$0xff]
        %v1882 = vld [vmem:[%s450 + $0xb8] sm:$0xff]
        %v1883 = vld [vmem:[%s450 + $0xc0] sm:$0x3]
        %v1884 = vld [vmem:[%s450 + $0xc8] sm:$0xff]
        %v1885 = vld [vmem:[%s450 + $0xd0] sm:$0xff]
        %v1886 = vld [vmem:[%s450 + $0xd8] sm:$0xff]
        %v1887 = vld [vmem:[%s450 + $0xe0] sm:$0xff]
        %v1888 = vld [vmem:[%s450 + $0xe8] sm:$0x3]
        %v1889 = vld [vmem:[%s450 + $0xf0] sm:$0xff]
        %v1890 = vld [vmem:[%s450 + $0xf8] sm:$0xff]
        %v1891 = vld [vmem:[%s450 + $0x100] sm:$0xff]
        %v1892 = vld [vmem:[%s450 + $0x108] sm:$0xff]
        %v1893 = vld [vmem:[%s450 + $0x110] sm:$0x3]
        %v1894 = vld [vmem:[%s450 + $0x118] sm:$0xff]
        %v1895 = vld [vmem:[%s450 + $0x120] sm:$0xff]
        %v1896 = vld [vmem:[%s450 + $0x128] sm:$0xff]
        %v1897 = vld [vmem:[%s450 + $0x130] sm:$0xff]
        %v1898 = vld [vmem:[%s450 + $0x138] sm:$0x3]
        %v1899 = vld [vmem:[%s459] sm:$0xff]
        %v1900 = vld [vmem:[%s459 + $0x8] sm:$0xff]
        %v1901 = vld [vmem:[%s459 + $0x10] sm:$0xff]
        %v1902 = vld [vmem:[%s459 + $0x18] sm:$0xff]
        %v1903 = vld [vmem:[%s459 + $0x20] sm:$0x3]
        %v1904 = vld [vmem:[%s459 + $0x28] sm:$0xff]
        %v1905 = vld [vmem:[%s459 + $0x30] sm:$0xff]
        %v1906 = vld [vmem:[%s459 + $0x38] sm:$0xff]
        %v1907 = vld [vmem:[%s459 + $0x40] sm:$0xff]
        %v1908 = vld [vmem:[%s459 + $0x48] sm:$0x3]
        %v1949 = vrot.slane %v1859, 1
        %v1950 = vrot.slane %v1860, 1
        %v1951 = vsel %vm626, %v1949, %v1950
        %v1952 = vrot.slane %v1861, 1
        %v1953 = vsel %vm626, %v1950, %v1952
        %v1954 = vrot.slane %v1862, 1
        %v1955 = vsel %vm626, %v1952, %v1954
        %v1956 = vrot.slane %v1863, 1
        %v1957 = vsel %vm626, %v1954, %v1956
        %v1958 = vrot.slane %v1864, 1
        %v1959 = vrot.slane %v1865, 1
        %v1960 = vsel %vm626, %v1958, %v1959
        %v1961 = vrot.slane %v1866, 1
        %v1962 = vsel %vm626, %v1959, %v1961
        %v1963 = vrot.slane %v1867, 1
        %v1964 = vsel %vm626, %v1961, %v1963
        %v1965 = vrot.slane %v1868, 1
        %v1966 = vsel %vm626, %v1963, %v1965
        %v1967 = vrot.slane %v1869, 1
        %v1968 = vrot.slane %v1870, 1
        %v1969 = vsel %vm626, %v1967, %v1968
        %v1970 = vrot.slane %v1871, 1
        %v1971 = vsel %vm626, %v1968, %v1970
        %v1972 = vrot.slane %v1872, 1
        %v1973 = vsel %vm626, %v1970, %v1972
        %v1974 = vrot.slane %v1873, 1
        %v1975 = vsel %vm626, %v1972, %v1974
        %v1976 = vrot.slane %v1874, 1
        %v1977 = vrot.slane %v1875, 1
        %v1978 = vsel %vm626, %v1976, %v1977
        %v1979 = vrot.slane %v1876, 1
        %v1980 = vsel %vm626, %v1977, %v1979
        %v1981 = vrot.slane %v1877, 1
        %v1982 = vsel %vm626, %v1979, %v1981
        %v1983 = vrot.slane %v1878, 1
        %v1984 = vsel %vm626, %v1981, %v1983
        %v1985 = vrot.slane %v1879, 1
        %v1986 = vrot.slane %v1880, 1
        %v1987 = vsel %vm626, %v1985, %v1986
        %v1988 = vrot.slane %v1881, 1
        %v1989 = vsel %vm626, %v1986, %v1988
        %v1990 = vrot.slane %v1882, 1
        %v1991 = vsel %vm626, %v1988, %v1990
        %v1992 = vrot.slane %v1883, 1
        %v1993 = vsel %vm626, %v1990, %v1992
        %v1994 = vrot.slane %v1884, 1
        %v1995 = vrot.slane %v1885, 1
        %v1996 = vsel %vm626, %v1994, %v1995
        %v1997 = vrot.slane %v1886, 1
        %v1998 = vsel %vm626, %v1995, %v1997
        %v1999 = vrot.slane %v1887, 1
        %v2000 = vsel %vm626, %v1997, %v1999
        %v2001 = vrot.slane %v1888, 1
        %v2002 = vsel %vm626, %v1999, %v2001
        %v2003 = vrot.slane %v1889, 1
        %v2004 = vrot.slane %v1890, 1
        %v2005 = vsel %vm626, %v2003, %v2004
        %v2006 = vrot.slane %v1891, 1
        %v2007 = vsel %vm626, %v2004, %v2006
        %v2008 = vrot.slane %v1892, 1
        %v2009 = vsel %vm626, %v2006, %v2008
        %v2010 = vrot.slane %v1893, 1
        %v2011 = vsel %vm626, %v2008, %v2010
        %v2012 = vrot.slane %v1894, 1
        %v2013 = vrot.slane %v1895, 1
        %v2014 = vsel %vm626, %v2012, %v2013
        %v2015 = vrot.slane %v1896, 1
        %v2016 = vsel %vm626, %v2013, %v2015
        %v2017 = vrot.slane %v1897, 1
        %v2018 = vsel %vm626, %v2015, %v2017
        %v2019 = vrot.slane %v1898, 1
        %v2020 = vsel %vm626, %v2017, %v2019
        %v2021 = vrot.slane %v1859, 2
        %v2022 = vrot.slane %v1860, 2
        %v2023 = vsel %vm699, %v2021, %v2022
        %v2024 = vrot.slane %v1861, 2
        %v2025 = vsel %vm699, %v2022, %v2024
        %v2026 = vrot.slane %v1862, 2
        %v2027 = vsel %vm699, %v2024, %v2026
        %v2028 = vrot.slane %v1863, 2
        %v2029 = vsel %vm699, %v2026, %v2028
        %v2030 = vrot.slane %v1864, 2
        %v2031 = vrot.slane %v1865, 2
        %v2032 = vsel %vm699, %v2030, %v2031
        %v2033 = vrot.slane %v1866, 2
        %v2034 = vsel %vm699, %v2031, %v2033
        %v2035 = vrot.slane %v1867, 2
        %v2036 = vsel %vm699, %v2033, %v2035
        %v2037 = vrot.slane %v1868, 2
        %v2038 = vsel %vm699, %v2035, %v2037
        %v2039 = vrot.slane %v1869, 2
        %v2040 = vrot.slane %v1870, 2
        %v2041 = vsel %vm699, %v2039, %v2040
        %v2042 = vrot.slane %v1871, 2
        %v2043 = vsel %vm699, %v2040, %v2042
        %v2044 = vrot.slane %v1872, 2
        %v2045 = vsel %vm699, %v2042, %v2044
        %v2046 = vrot.slane %v1873, 2
        %v2047 = vsel %vm699, %v2044, %v2046
        %v2048 = vrot.slane %v1874, 2
        %v2049 = vrot.slane %v1875, 2
        %v2050 = vsel %vm699, %v2048, %v2049
        %v2051 = vrot.slane %v1876, 2
        %v2052 = vsel %vm699, %v2049, %v2051
        %v2053 = vrot.slane %v1877, 2
        %v2054 = vsel %vm699, %v2051, %v2053
        %v2055 = vrot.slane %v1878, 2
        %v2056 = vsel %vm699, %v2053, %v2055
        %v2057 = vrot.slane %v1879, 2
        %v2058 = vrot.slane %v1880, 2
        %v2059 = vsel %vm699, %v2057, %v2058
        %v2060 = vrot.slane %v1881, 2
        %v2061 = vsel %vm699, %v2058, %v2060
        %v2062 = vrot.slane %v1882, 2
        %v2063 = vsel %vm699, %v2060, %v2062
        %v2064 = vrot.slane %v1883, 2
        %v2065 = vsel %vm699, %v2062, %v2064
        %v2066 = vrot.slane %v1884, 2
        %v2067 = vrot.slane %v1885, 2
        %v2068 = vsel %vm699, %v2066, %v2067
        %v2069 = vrot.slane %v1886, 2
        %v2070 = vsel %vm699, %v2067, %v2069
        %v2071 = vrot.slane %v1887, 2
        %v2072 = vsel %vm699, %v2069, %v2071
        %v2073 = vrot.slane %v1888, 2
        %v2074 = vsel %vm699, %v2071, %v2073
        %v2075 = vrot.slane %v1889, 2
        %v2076 = vrot.slane %v1890, 2
        %v2077 = vsel %vm699, %v2075, %v2076
        %v2078 = vrot.slane %v1891, 2
        %v2079 = vsel %vm699, %v2076, %v2078
        %v2080 = vrot.slane %v1892, 2
        %v2081 = vsel %vm699, %v2078, %v2080
        %v2082 = vrot.slane %v1893, 2
        %v2083 = vsel %vm699, %v2080, %v2082
        %v2084 = vrot.slane %v1894, 2
        %v2085 = vrot.slane %v1895, 2
        %v2086 = vsel %vm699, %v2084, %v2085
        %v2087 = vrot.slane %v1896, 2
        %v2088 = vsel %vm699, %v2085, %v2087
        %v2089 = vrot.slane %v1897, 2
        %v2090 = vsel %vm699, %v2087, %v2089
        %v2091 = vrot.slane %v1898, 2
        %v2092 = vsel %vm699, %v2089, %v2091
        %v2098 = vrot.slane %v1899, 1
        %v2099 = vrot.slane %v1900, 1
        %v2100 = vsel %vm626, %v2098, %v2099
        %v2101 = vrot.slane %v1901, 1
        %v2102 = vsel %vm626, %v2099, %v2101
        %v2103 = vrot.slane %v1902, 1
        %v2104 = vsel %vm626, %v2101, %v2103
        %v2105 = vrot.slane %v1903, 1
        %v2106 = vsel %vm626, %v2103, %v2105
        %v2107 = vrot.slane %v1899, 2
        %v2108 = vrot.slane %v1900, 2
        %v2109 = vsel %vm699, %v2107, %v2108
        %v2110 = vrot.slane %v1901, 2
        %v2111 = vsel %vm699, %v2108, %v2110
        %v2112 = vrot.slane %v1902, 2
        %v2113 = vsel %vm699, %v2110, %v2112
        %v2114 = vrot.slane %v1903, 2
        %v2115 = vsel %vm699, %v2112, %v2114
        %v2121 = vrot.slane %v1904, 1
        %v2122 = vrot.slane %v1905, 1
        %v2123 = vsel %vm626, %v2121, %v2122
        %v2124 = vrot.slane %v1906, 1
        %v2125 = vsel %vm626, %v2122, %v2124
        %v2126 = vrot.slane %v1907, 1
        %v2127 = vsel %vm626, %v2124, %v2126
        %v2128 = vrot.slane %v1908, 1
        %v2129 = vsel %vm626, %v2126, %v2128
        %v2130 = vrot.slane %v1904, 2
        %v2131 = vrot.slane %v1905, 2
        %v2132 = vsel %vm699, %v2130, %v2131
        %v2133 = vrot.slane %v1906, 2
        %v2134 = vsel %vm699, %v2131, %v2133
        %v2135 = vrot.slane %v1907, 2
        %v2136 = vsel %vm699, %v2133, %v2135
        %v2137 = vrot.slane %v1908, 2
        %v2138 = vsel %vm699, %v2135, %v2137
        %2139 = vrot.lane.b32.xlu0 %v1951, 8
        %v2140 = vpop.permute.xlu0 %2139
        %2141 = vrot.lane.b32.xlu0 %v1953, 8
        %v2142 = vpop.permute.xlu0 %2141
        %2143 = vrot.lane.b32.xlu0 %v1955, 8
        %v2144 = vpop.permute.xlu0 %2143
        %2145 = vrot.lane.b32.xlu0 %v1957, 8
        %v2146 = vpop.permute.xlu0 %2145
        %2147 = vrot.lane.b32.xlu0 %v1960, 8
        %v2148 = vpop.permute.xlu0 %2147
        %2149 = vrot.lane.b32.xlu0 %v1962, 8
        %v2150 = vpop.permute.xlu0 %2149
        %2151 = vrot.lane.b32.xlu0 %v1964, 8
        %v2152 = vpop.permute.xlu0 %2151
        %2153 = vrot.lane.b32.xlu0 %v1966, 8
        %v2154 = vpop.permute.xlu0 %2153
        %2155 = vrot.lane.b32.xlu0 %v1969, 8
        %v2156 = vpop.permute.xlu0 %2155
        %2157 = vrot.lane.b32.xlu0 %v1971, 8
        %v2158 = vpop.permute.xlu0 %2157
        %2159 = vrot.lane.b32.xlu0 %v1973, 8
        %v2160 = vpop.permute.xlu0 %2159
        %2161 = vrot.lane.b32.xlu0 %v1975, 8
        %v2162 = vpop.permute.xlu0 %2161
        %2163 = vrot.lane.b32.xlu0 %v1978, 8
        %v2164 = vpop.permute.xlu0 %2163
        %2165 = vrot.lane.b32.xlu0 %v1980, 8
        %v2166 = vpop.permute.xlu0 %2165
        %2167 = vrot.lane.b32.xlu0 %v1982, 8
        %v2168 = vpop.permute.xlu0 %2167
        %2169 = vrot.lane.b32.xlu0 %v1984, 8
        %v2170 = vpop.permute.xlu0 %2169
        %2171 = vrot.lane.b32.xlu0 %v1987, 8
        %v2172 = vpop.permute.xlu0 %2171
        %2173 = vrot.lane.b32.xlu0 %v1989, 8
        %v2174 = vpop.permute.xlu0 %2173
        %2175 = vrot.lane.b32.xlu0 %v1991, 8
        %v2176 = vpop.permute.xlu0 %2175
        %2177 = vrot.lane.b32.xlu0 %v1993, 8
        %v2178 = vpop.permute.xlu0 %2177
        %2179 = vrot.lane.b32.xlu0 %v1996, 8
        %v2180 = vpop.permute.xlu0 %2179
        %2181 = vrot.lane.b32.xlu0 %v1998, 8
        %v2182 = vpop.permute.xlu0 %2181
        %2183 = vrot.lane.b32.xlu0 %v2000, 8
        %v2184 = vpop.permute.xlu0 %2183
        %2185 = vrot.lane.b32.xlu0 %v2002, 8
        %v2186 = vpop.permute.xlu0 %2185
        %2187 = vrot.lane.b32.xlu0 %v2005, 8
        %v2188 = vpop.permute.xlu0 %2187
        %2189 = vrot.lane.b32.xlu0 %v2007, 8
        %v2190 = vpop.permute.xlu0 %2189
        %2191 = vrot.lane.b32.xlu0 %v2009, 8
        %v2192 = vpop.permute.xlu0 %2191
        %2193 = vrot.lane.b32.xlu0 %v2011, 8
        %v2194 = vpop.permute.xlu0 %2193
        %2195 = vrot.lane.b32.xlu0 %v2014, 8
        %v2196 = vpop.permute.xlu0 %2195
        %2197 = vrot.lane.b32.xlu0 %v2016, 8
        %v2198 = vpop.permute.xlu0 %2197
        %2199 = vrot.lane.b32.xlu0 %v2018, 8
        %v2200 = vpop.permute.xlu0 %2199
        %2201 = vrot.lane.b32.xlu0 %v2020, 8
        %v2202 = vpop.permute.xlu0 %2201
        %2235 = vrot.lane.b32.xlu0 %v2023, 16
        %v2236 = vpop.permute.xlu0 %2235
        %2237 = vrot.lane.b32.xlu0 %v2025, 16
        %v2238 = vpop.permute.xlu0 %2237
        %2239 = vrot.lane.b32.xlu0 %v2027, 16
        %v2240 = vpop.permute.xlu0 %2239
        %2241 = vrot.lane.b32.xlu0 %v2029, 16
        %v2242 = vpop.permute.xlu0 %2241
        %2243 = vrot.lane.b32.xlu0 %v2032, 16
        %v2244 = vpop.permute.xlu0 %2243
        %2245 = vrot.lane.b32.xlu0 %v2034, 16
        %v2246 = vpop.permute.xlu0 %2245
        %2247 = vrot.lane.b32.xlu0 %v2036, 16
        %v2248 = vpop.permute.xlu0 %2247
        %2249 = vrot.lane.b32.xlu0 %v2038, 16
        %v2250 = vpop.permute.xlu0 %2249
        %2251 = vrot.lane.b32.xlu0 %v2041, 16
        %v2252 = vpop.permute.xlu0 %2251
        %2253 = vrot.lane.b32.xlu0 %v2043, 16
        %v2254 = vpop.permute.xlu0 %2253
        %2255 = vrot.lane.b32.xlu0 %v2045, 16
        %v2256 = vpop.permute.xlu0 %2255
        %2257 = vrot.lane.b32.xlu0 %v2047, 16
        %v2258 = vpop.permute.xlu0 %2257
        %2259 = vrot.lane.b32.xlu0 %v2050, 16
        %v2260 = vpop.permute.xlu0 %2259
        %2261 = vrot.lane.b32.xlu0 %v2052, 16
        %v2262 = vpop.permute.xlu0 %2261
        %2263 = vrot.lane.b32.xlu0 %v2054, 16
        %v2264 = vpop.permute.xlu0 %2263
        %2265 = vrot.lane.b32.xlu0 %v2056, 16
        %v2266 = vpop.permute.xlu0 %2265
        %2267 = vrot.lane.b32.xlu0 %v2059, 16
        %v2268 = vpop.permute.xlu0 %2267
        %2269 = vrot.lane.b32.xlu0 %v2061, 16
        %v2270 = vpop.permute.xlu0 %2269
        %2271 = vrot.lane.b32.xlu0 %v2063, 16
        %v2272 = vpop.permute.xlu0 %2271
        %2273 = vrot.lane.b32.xlu0 %v2065, 16
        %v2274 = vpop.permute.xlu0 %2273
        %2275 = vrot.lane.b32.xlu0 %v2068, 16
        %v2276 = vpop.permute.xlu0 %2275
        %2277 = vrot.lane.b32.xlu0 %v2070, 16
        %v2278 = vpop.permute.xlu0 %2277
        %2279 = vrot.lane.b32.xlu0 %v2072, 16
        %v2280 = vpop.permute.xlu0 %2279
        %2281 = vrot.lane.b32.xlu0 %v2074, 16
        %v2282 = vpop.permute.xlu0 %2281
        %2283 = vrot.lane.b32.xlu0 %v2077, 16
        %v2284 = vpop.permute.xlu0 %2283
        %2285 = vrot.lane.b32.xlu0 %v2079, 16
        %v2286 = vpop.permute.xlu0 %2285
        %2287 = vrot.lane.b32.xlu0 %v2081, 16
        %v2288 = vpop.permute.xlu0 %2287
        %2289 = vrot.lane.b32.xlu0 %v2083, 16
        %v2290 = vpop.permute.xlu0 %2289
        %2291 = vrot.lane.b32.xlu0 %v2086, 16
        %v2292 = vpop.permute.xlu0 %2291
        %2293 = vrot.lane.b32.xlu0 %v2088, 16
        %v2294 = vpop.permute.xlu0 %2293
        %2295 = vrot.lane.b32.xlu0 %v2090, 16
        %v2296 = vpop.permute.xlu0 %2295
        %2297 = vrot.lane.b32.xlu0 %v2092, 16
        %v2298 = vpop.permute.xlu0 %2297
        %2331 = vrot.lane.b32.xlu0 %v1864, 24
        %v2332 = vpop.permute.xlu0 %2331
        %2333 = vrot.lane.b32.xlu0 %v1865, 24
        %v2334 = vpop.permute.xlu0 %2333
        %2335 = vrot.lane.b32.xlu0 %v1866, 24
        %v2336 = vpop.permute.xlu0 %2335
        %2337 = vrot.lane.b32.xlu0 %v1867, 24
        %v2338 = vpop.permute.xlu0 %2337
        %2339 = vrot.lane.b32.xlu0 %v1869, 24
        %v2340 = vpop.permute.xlu0 %2339
        %2341 = vrot.lane.b32.xlu0 %v1870, 24
        %v2342 = vpop.permute.xlu0 %2341
        %2343 = vrot.lane.b32.xlu0 %v1871, 24
        %v2344 = vpop.permute.xlu0 %2343
        %2345 = vrot.lane.b32.xlu0 %v1872, 24
        %v2346 = vpop.permute.xlu0 %2345
        %2347 = vrot.lane.b32.xlu0 %v1874, 24
        %v2348 = vpop.permute.xlu0 %2347
        %2349 = vrot.lane.b32.xlu0 %v1875, 24
        %v2350 = vpop.permute.xlu0 %2349
        %2351 = vrot.lane.b32.xlu0 %v1876, 24
        %v2352 = vpop.permute.xlu0 %2351
        %2353 = vrot.lane.b32.xlu0 %v1877, 24
        %v2354 = vpop.permute.xlu0 %2353
        %2355 = vrot.lane.b32.xlu0 %v1879, 24
        %v2356 = vpop.permute.xlu0 %2355
        %2357 = vrot.lane.b32.xlu0 %v1880, 24
        %v2358 = vpop.permute.xlu0 %2357
        %2359 = vrot.lane.b32.xlu0 %v1881, 24
        %v2360 = vpop.permute.xlu0 %2359
        %2361 = vrot.lane.b32.xlu0 %v1882, 24
        %v2362 = vpop.permute.xlu0 %2361
        %2363 = vrot.lane.b32.xlu0 %v1884, 24
        %v2364 = vpop.permute.xlu0 %2363
        %2365 = vrot.lane.b32.xlu0 %v1885, 24
        %v2366 = vpop.permute.xlu0 %2365
        %2367 = vrot.lane.b32.xlu0 %v1886, 24
        %v2368 = vpop.permute.xlu0 %2367
        %2369 = vrot.lane.b32.xlu0 %v1887, 24
        %v2370 = vpop.permute.xlu0 %2369
        %2371 = vrot.lane.b32.xlu0 %v1889, 24
        %v2372 = vpop.permute.xlu0 %2371
        %2373 = vrot.lane.b32.xlu0 %v1890, 24
        %v2374 = vpop.permute.xlu0 %2373
        %2375 = vrot.lane.b32.xlu0 %v1891, 24
        %v2376 = vpop.permute.xlu0 %2375
        %2377 = vrot.lane.b32.xlu0 %v1892, 24
        %v2378 = vpop.permute.xlu0 %2377
        %2379 = vrot.lane.b32.xlu0 %v1894, 24
        %v2380 = vpop.permute.xlu0 %2379
        %2381 = vrot.lane.b32.xlu0 %v1895, 24
        %v2382 = vpop.permute.xlu0 %2381
        %2383 = vrot.lane.b32.xlu0 %v1896, 24
        %v2384 = vpop.permute.xlu0 %2383
        %2385 = vrot.lane.b32.xlu0 %v1897, 24
        %v2386 = vpop.permute.xlu0 %2385
        %2387 = vrot.lane.b32.xlu0 %v1899, 24
        %v2388 = vpop.permute.xlu0 %2387
        %2389 = vrot.lane.b32.xlu0 %v1900, 24
        %v2390 = vpop.permute.xlu0 %2389
        %2391 = vrot.lane.b32.xlu0 %v1901, 24
        %v2392 = vpop.permute.xlu0 %2391
        %2393 = vrot.lane.b32.xlu0 %v1902, 24
        %v2394 = vpop.permute.xlu0 %2393
        %2427 = vrot.lane.b32.xlu0 %v1960, 32
        %v2428 = vpop.permute.xlu0 %2427
        %2429 = vrot.lane.b32.xlu0 %v1962, 32
        %v2430 = vpop.permute.xlu0 %2429
        %2431 = vrot.lane.b32.xlu0 %v1964, 32
        %v2432 = vpop.permute.xlu0 %2431
        %2433 = vrot.lane.b32.xlu0 %v1966, 32
        %v2434 = vpop.permute.xlu0 %2433
        %2435 = vrot.lane.b32.xlu0 %v1969, 32
        %v2436 = vpop.permute.xlu0 %2435
        %2437 = vrot.lane.b32.xlu0 %v1971, 32
        %v2438 = vpop.permute.xlu0 %2437
        %2439 = vrot.lane.b32.xlu0 %v1973, 32
        %v2440 = vpop.permute.xlu0 %2439
        %2441 = vrot.lane.b32.xlu0 %v1975, 32
        %v2442 = vpop.permute.xlu0 %2441
        %2443 = vrot.lane.b32.xlu0 %v1978, 32
        %v2444 = vpop.permute.xlu0 %2443
        %2445 = vrot.lane.b32.xlu0 %v1980, 32
        %v2446 = vpop.permute.xlu0 %2445
        %2447 = vrot.lane.b32.xlu0 %v1982, 32
        %v2448 = vpop.permute.xlu0 %2447
        %2449 = vrot.lane.b32.xlu0 %v1984, 32
        %v2450 = vpop.permute.xlu0 %2449
        %2451 = vrot.lane.b32.xlu0 %v1987, 32
        %v2452 = vpop.permute.xlu0 %2451
        %2453 = vrot.lane.b32.xlu0 %v1989, 32
        %v2454 = vpop.permute.xlu0 %2453
        %2455 = vrot.lane.b32.xlu0 %v1991, 32
        %v2456 = vpop.permute.xlu0 %2455
        %2457 = vrot.lane.b32.xlu0 %v1993, 32
        %v2458 = vpop.permute.xlu0 %2457
        %2459 = vrot.lane.b32.xlu0 %v1996, 32
        %v2460 = vpop.permute.xlu0 %2459
        %2461 = vrot.lane.b32.xlu0 %v1998, 32
        %v2462 = vpop.permute.xlu0 %2461
        %2463 = vrot.lane.b32.xlu0 %v2000, 32
        %v2464 = vpop.permute.xlu0 %2463
        %2465 = vrot.lane.b32.xlu0 %v2002, 32
        %v2466 = vpop.permute.xlu0 %2465
        %2467 = vrot.lane.b32.xlu0 %v2005, 32
        %v2468 = vpop.permute.xlu0 %2467
        %2469 = vrot.lane.b32.xlu0 %v2007, 32
        %v2470 = vpop.permute.xlu0 %2469
        %2471 = vrot.lane.b32.xlu0 %v2009, 32
        %v2472 = vpop.permute.xlu0 %2471
        %2473 = vrot.lane.b32.xlu0 %v2011, 32
        %v2474 = vpop.permute.xlu0 %2473
        %2475 = vrot.lane.b32.xlu0 %v2014, 32
        %v2476 = vpop.permute.xlu0 %2475
        %2477 = vrot.lane.b32.xlu0 %v2016, 32
        %v2478 = vpop.permute.xlu0 %2477
        %2479 = vrot.lane.b32.xlu0 %v2018, 32
        %v2480 = vpop.permute.xlu0 %2479
        %2481 = vrot.lane.b32.xlu0 %v2020, 32
        %v2482 = vpop.permute.xlu0 %2481
        %2483 = vrot.lane.b32.xlu0 %v2100, 32
        %v2484 = vpop.permute.xlu0 %2483
        %2485 = vrot.lane.b32.xlu0 %v2102, 32
        %v2486 = vpop.permute.xlu0 %2485
        %2487 = vrot.lane.b32.xlu0 %v2104, 32
        %v2488 = vpop.permute.xlu0 %2487
        %2489 = vrot.lane.b32.xlu0 %v2106, 32
        %v2490 = vpop.permute.xlu0 %2489
        %2523 = vrot.lane.b32.xlu0 %v2032, 40
        %v2524 = vpop.permute.xlu0 %2523
        %2525 = vrot.lane.b32.xlu0 %v2034, 40
        %v2526 = vpop.permute.xlu0 %2525
        %2527 = vrot.lane.b32.xlu0 %v2036, 40
        %v2528 = vpop.permute.xlu0 %2527
        %2529 = vrot.lane.b32.xlu0 %v2038, 40
        %v2530 = vpop.permute.xlu0 %2529
        %2531 = vrot.lane.b32.xlu0 %v2041, 40
        %v2532 = vpop.permute.xlu0 %2531
        %2533 = vrot.lane.b32.xlu0 %v2043, 40
        %v2534 = vpop.permute.xlu0 %2533
        %2535 = vrot.lane.b32.xlu0 %v2045, 40
        %v2536 = vpop.permute.xlu0 %2535
        %2537 = vrot.lane.b32.xlu0 %v2047, 40
        %v2538 = vpop.permute.xlu0 %2537
        %2539 = vrot.lane.b32.xlu0 %v2050, 40
        %v2540 = vpop.permute.xlu0 %2539
        %2541 = vrot.lane.b32.xlu0 %v2052, 40
        %v2542 = vpop.permute.xlu0 %2541
        %2543 = vrot.lane.b32.xlu0 %v2054, 40
        %v2544 = vpop.permute.xlu0 %2543
        %2545 = vrot.lane.b32.xlu0 %v2056, 40
        %v2546 = vpop.permute.xlu0 %2545
        %2547 = vrot.lane.b32.xlu0 %v2059, 40
        %v2548 = vpop.permute.xlu0 %2547
        %2549 = vrot.lane.b32.xlu0 %v2061, 40
        %v2550 = vpop.permute.xlu0 %2549
        %2551 = vrot.lane.b32.xlu0 %v2063, 40
        %v2552 = vpop.permute.xlu0 %2551
        %2553 = vrot.lane.b32.xlu0 %v2065, 40
        %v2554 = vpop.permute.xlu0 %2553
        %2555 = vrot.lane.b32.xlu0 %v2068, 40
        %v2556 = vpop.permute.xlu0 %2555
        %2557 = vrot.lane.b32.xlu0 %v2070, 40
        %v2558 = vpop.permute.xlu0 %2557
        %2559 = vrot.lane.b32.xlu0 %v2072, 40
        %v2560 = vpop.permute.xlu0 %2559
        %2561 = vrot.lane.b32.xlu0 %v2074, 40
        %v2562 = vpop.permute.xlu0 %2561
        %2563 = vrot.lane.b32.xlu0 %v2077, 40
        %v2564 = vpop.permute.xlu0 %2563
        %2565 = vrot.lane.b32.xlu0 %v2079, 40
        %v2566 = vpop.permute.xlu0 %2565
        %2567 = vrot.lane.b32.xlu0 %v2081, 40
        %v2568 = vpop.permute.xlu0 %2567
        %2569 = vrot.lane.b32.xlu0 %v2083, 40
        %v2570 = vpop.permute.xlu0 %2569
        %2571 = vrot.lane.b32.xlu0 %v2086, 40
        %v2572 = vpop.permute.xlu0 %2571
        %2573 = vrot.lane.b32.xlu0 %v2088, 40
        %v2574 = vpop.permute.xlu0 %2573
        %2575 = vrot.lane.b32.xlu0 %v2090, 40
        %v2576 = vpop.permute.xlu0 %2575
        %2577 = vrot.lane.b32.xlu0 %v2092, 40
        %v2578 = vpop.permute.xlu0 %2577
        %2579 = vrot.lane.b32.xlu0 %v2109, 40
        %v2580 = vpop.permute.xlu0 %2579
        %2581 = vrot.lane.b32.xlu0 %v2111, 40
        %v2582 = vpop.permute.xlu0 %2581
        %2583 = vrot.lane.b32.xlu0 %v2113, 40
        %v2584 = vpop.permute.xlu0 %2583
        %2585 = vrot.lane.b32.xlu0 %v2115, 40
        %v2586 = vpop.permute.xlu0 %2585
        %2619 = vrot.lane.b32.xlu0 %v1869, 48
        %v2620 = vpop.permute.xlu0 %2619
        %2621 = vrot.lane.b32.xlu0 %v1870, 48
        %v2622 = vpop.permute.xlu0 %2621
        %2623 = vrot.lane.b32.xlu0 %v1871, 48
        %v2624 = vpop.permute.xlu0 %2623
        %2625 = vrot.lane.b32.xlu0 %v1872, 48
        %v2626 = vpop.permute.xlu0 %2625
        %2627 = vrot.lane.b32.xlu0 %v1874, 48
        %v2628 = vpop.permute.xlu0 %2627
        %2629 = vrot.lane.b32.xlu0 %v1875, 48
        %v2630 = vpop.permute.xlu0 %2629
        %2631 = vrot.lane.b32.xlu0 %v1876, 48
        %v2632 = vpop.permute.xlu0 %2631
        %2633 = vrot.lane.b32.xlu0 %v1877, 48
        %v2634 = vpop.permute.xlu0 %2633
        %2635 = vrot.lane.b32.xlu0 %v1879, 48
        %v2636 = vpop.permute.xlu0 %2635
        %2637 = vrot.lane.b32.xlu0 %v1880, 48
        %v2638 = vpop.permute.xlu0 %2637
        %2639 = vrot.lane.b32.xlu0 %v1881, 48
        %v2640 = vpop.permute.xlu0 %2639
        %2641 = vrot.lane.b32.xlu0 %v1882, 48
        %v2642 = vpop.permute.xlu0 %2641
        %2643 = vrot.lane.b32.xlu0 %v1884, 48
        %v2644 = vpop.permute.xlu0 %2643
        %2645 = vrot.lane.b32.xlu0 %v1885, 48
        %v2646 = vpop.permute.xlu0 %2645
        %2647 = vrot.lane.b32.xlu0 %v1886, 48
        %v2648 = vpop.permute.xlu0 %2647
        %2649 = vrot.lane.b32.xlu0 %v1887, 48
        %v2650 = vpop.permute.xlu0 %2649
        %2651 = vrot.lane.b32.xlu0 %v1889, 48
        %v2652 = vpop.permute.xlu0 %2651
        %2653 = vrot.lane.b32.xlu0 %v1890, 48
        %v2654 = vpop.permute.xlu0 %2653
        %2655 = vrot.lane.b32.xlu0 %v1891, 48
        %v2656 = vpop.permute.xlu0 %2655
        %2657 = vrot.lane.b32.xlu0 %v1892, 48
        %v2658 = vpop.permute.xlu0 %2657
        %2659 = vrot.lane.b32.xlu0 %v1894, 48
        %v2660 = vpop.permute.xlu0 %2659
        %2661 = vrot.lane.b32.xlu0 %v1895, 48
        %v2662 = vpop.permute.xlu0 %2661
        %2663 = vrot.lane.b32.xlu0 %v1896, 48
        %v2664 = vpop.permute.xlu0 %2663
        %2665 = vrot.lane.b32.xlu0 %v1897, 48
        %v2666 = vpop.permute.xlu0 %2665
        %2667 = vrot.lane.b32.xlu0 %v1899, 48
        %v2668 = vpop.permute.xlu0 %2667
        %2669 = vrot.lane.b32.xlu0 %v1900, 48
        %v2670 = vpop.permute.xlu0 %2669
        %2671 = vrot.lane.b32.xlu0 %v1901, 48
        %v2672 = vpop.permute.xlu0 %2671
        %2673 = vrot.lane.b32.xlu0 %v1902, 48
        %v2674 = vpop.permute.xlu0 %2673
        %2675 = vrot.lane.b32.xlu0 %v1904, 48
        %v2676 = vpop.permute.xlu0 %2675
        %2677 = vrot.lane.b32.xlu0 %v1905, 48
        %v2678 = vpop.permute.xlu0 %2677
        %2679 = vrot.lane.b32.xlu0 %v1906, 48
        %v2680 = vpop.permute.xlu0 %2679
        %2681 = vrot.lane.b32.xlu0 %v1907, 48
        %v2682 = vpop.permute.xlu0 %2681
        %2715 = vrot.lane.b32.xlu0 %v1969, 56
        %v2716 = vpop.permute.xlu0 %2715
        %2717 = vrot.lane.b32.xlu0 %v1971, 56
        %v2718 = vpop.permute.xlu0 %2717
        %2719 = vrot.lane.b32.xlu0 %v1973, 56
        %v2720 = vpop.permute.xlu0 %2719
        %2721 = vrot.lane.b32.xlu0 %v1975, 56
        %v2722 = vpop.permute.xlu0 %2721
        %2723 = vrot.lane.b32.xlu0 %v1978, 56
        %v2724 = vpop.permute.xlu0 %2723
        %2725 = vrot.lane.b32.xlu0 %v1980, 56
        %v2726 = vpop.permute.xlu0 %2725
        %2727 = vrot.lane.b32.xlu0 %v1982, 56
        %v2728 = vpop.permute.xlu0 %2727
        %2729 = vrot.lane.b32.xlu0 %v1984, 56
        %v2730 = vpop.permute.xlu0 %2729
        %2731 = vrot.lane.b32.xlu0 %v1987, 56
        %v2732 = vpop.permute.xlu0 %2731
        %2733 = vrot.lane.b32.xlu0 %v1989, 56
        %v2734 = vpop.permute.xlu0 %2733
        %2735 = vrot.lane.b32.xlu0 %v1991, 56
        %v2736 = vpop.permute.xlu0 %2735
        %2737 = vrot.lane.b32.xlu0 %v1993, 56
        %v2738 = vpop.permute.xlu0 %2737
        %2739 = vrot.lane.b32.xlu0 %v1996, 56
        %v2740 = vpop.permute.xlu0 %2739
        %2741 = vrot.lane.b32.xlu0 %v1998, 56
        %v2742 = vpop.permute.xlu0 %2741
        %2743 = vrot.lane.b32.xlu0 %v2000, 56
        %v2744 = vpop.permute.xlu0 %2743
        %2745 = vrot.lane.b32.xlu0 %v2002, 56
        %v2746 = vpop.permute.xlu0 %2745
        %2747 = vrot.lane.b32.xlu0 %v2005, 56
        %v2748 = vpop.permute.xlu0 %2747
        %2749 = vrot.lane.b32.xlu0 %v2007, 56
        %v2750 = vpop.permute.xlu0 %2749
        %2751 = vrot.lane.b32.xlu0 %v2009, 56
        %v2752 = vpop.permute.xlu0 %2751
        %2753 = vrot.lane.b32.xlu0 %v2011, 56
        %v2754 = vpop.permute.xlu0 %2753
        %2755 = vrot.lane.b32.xlu0 %v2014, 56
        %v2756 = vpop.permute.xlu0 %2755
        %2757 = vrot.lane.b32.xlu0 %v2016, 56
        %v2758 = vpop.permute.xlu0 %2757
        %2759 = vrot.lane.b32.xlu0 %v2018, 56
        %v2760 = vpop.permute.xlu0 %2759
        %2761 = vrot.lane.b32.xlu0 %v2020, 56
        %v2762 = vpop.permute.xlu0 %2761
        %2763 = vrot.lane.b32.xlu0 %v2100, 56
        %v2764 = vpop.permute.xlu0 %2763
        %2765 = vrot.lane.b32.xlu0 %v2102, 56
        %v2766 = vpop.permute.xlu0 %2765
        %2767 = vrot.lane.b32.xlu0 %v2104, 56
        %v2768 = vpop.permute.xlu0 %2767
        %2769 = vrot.lane.b32.xlu0 %v2106, 56
        %v2770 = vpop.permute.xlu0 %2769
        %2771 = vrot.lane.b32.xlu0 %v2123, 56
        %v2772 = vpop.permute.xlu0 %2771
        %2773 = vrot.lane.b32.xlu0 %v2125, 56
        %v2774 = vpop.permute.xlu0 %2773
        %2775 = vrot.lane.b32.xlu0 %v2127, 56
        %v2776 = vpop.permute.xlu0 %2775
        %2777 = vrot.lane.b32.xlu0 %v2129, 56
        %v2778 = vpop.permute.xlu0 %2777
        %2811 = vrot.lane.b32.xlu0 %v2041, 64
        %v2812 = vpop.permute.xlu0 %2811
        %2813 = vrot.lane.b32.xlu0 %v2043, 64
        %v2814 = vpop.permute.xlu0 %2813
        %2815 = vrot.lane.b32.xlu0 %v2045, 64
        %v2816 = vpop.permute.xlu0 %2815
        %2817 = vrot.lane.b32.xlu0 %v2047, 64
        %v2818 = vpop.permute.xlu0 %2817
        %2819 = vrot.lane.b32.xlu0 %v2050, 64
        %v2820 = vpop.permute.xlu0 %2819
        %2821 = vrot.lane.b32.xlu0 %v2052, 64
        %v2822 = vpop.permute.xlu0 %2821
        %2823 = vrot.lane.b32.xlu0 %v2054, 64
        %v2824 = vpop.permute.xlu0 %2823
        %2825 = vrot.lane.b32.xlu0 %v2056, 64
        %v2826 = vpop.permute.xlu0 %2825
        %2827 = vrot.lane.b32.xlu0 %v2059, 64
        %v2828 = vpop.permute.xlu0 %2827
        %2829 = vrot.lane.b32.xlu0 %v2061, 64
        %v2830 = vpop.permute.xlu0 %2829
        %2831 = vrot.lane.b32.xlu0 %v2063, 64
        %v2832 = vpop.permute.xlu0 %2831
        %2833 = vrot.lane.b32.xlu0 %v2065, 64
        %v2834 = vpop.permute.xlu0 %2833
        %2835 = vrot.lane.b32.xlu0 %v2068, 64
        %v2836 = vpop.permute.xlu0 %2835
        %2837 = vrot.lane.b32.xlu0 %v2070, 64
        %v2838 = vpop.permute.xlu0 %2837
        %2839 = vrot.lane.b32.xlu0 %v2072, 64
        %v2840 = vpop.permute.xlu0 %2839
        %2841 = vrot.lane.b32.xlu0 %v2074, 64
        %v2842 = vpop.permute.xlu0 %2841
        %2843 = vrot.lane.b32.xlu0 %v2077, 64
        %v2844 = vpop.permute.xlu0 %2843
        %2845 = vrot.lane.b32.xlu0 %v2079, 64
        %v2846 = vpop.permute.xlu0 %2845
        %2847 = vrot.lane.b32.xlu0 %v2081, 64
        %v2848 = vpop.permute.xlu0 %2847
        %2849 = vrot.lane.b32.xlu0 %v2083, 64
        %v2850 = vpop.permute.xlu0 %2849
        %2851 = vrot.lane.b32.xlu0 %v2086, 64
        %v2852 = vpop.permute.xlu0 %2851
        %2853 = vrot.lane.b32.xlu0 %v2088, 64
        %v2854 = vpop.permute.xlu0 %2853
        %2855 = vrot.lane.b32.xlu0 %v2090, 64
        %v2856 = vpop.permute.xlu0 %2855
        %2857 = vrot.lane.b32.xlu0 %v2092, 64
        %v2858 = vpop.permute.xlu0 %2857
        %2859 = vrot.lane.b32.xlu0 %v2109, 64
        %v2860 = vpop.permute.xlu0 %2859
        %2861 = vrot.lane.b32.xlu0 %v2111, 64
        %v2862 = vpop.permute.xlu0 %2861
        %2863 = vrot.lane.b32.xlu0 %v2113, 64
        %v2864 = vpop.permute.xlu0 %2863
        %2865 = vrot.lane.b32.xlu0 %v2115, 64
        %v2866 = vpop.permute.xlu0 %2865
        %2867 = vrot.lane.b32.xlu0 %v2132, 64
        %v2868 = vpop.permute.xlu0 %2867
        %2869 = vrot.lane.b32.xlu0 %v2134, 64
        %v2870 = vpop.permute.xlu0 %2869
        %2871 = vrot.lane.b32.xlu0 %v2136, 64
        %v2872 = vpop.permute.xlu0 %2871
        %2873 = vrot.lane.b32.xlu0 %v2138, 64
        %v2874 = vpop.permute.xlu0 %2873
        %v2907 = vsel %vm1586, %v1859, %v2140
        %v2908 = vsel %vm1586, %v1860, %v2142
        %v2909 = vsel %vm1586, %v1861, %v2144
        %v2910 = vsel %vm1586, %v1862, %v2146
        %v2911 = vsel %vm1586, %v1864, %v2148
        %v2912 = vsel %vm1586, %v1865, %v2150
        %v2913 = vsel %vm1586, %v1866, %v2152
        %v2914 = vsel %vm1586, %v1867, %v2154
        %v2915 = vsel %vm1586, %v1869, %v2156
        %v2916 = vsel %vm1586, %v1870, %v2158
        %v2917 = vsel %vm1586, %v1871, %v2160
        %v2918 = vsel %vm1586, %v1872, %v2162
        %v2919 = vsel %vm1586, %v1874, %v2164
        %v2920 = vsel %vm1586, %v1875, %v2166
        %v2921 = vsel %vm1586, %v1876, %v2168
        %v2922 = vsel %vm1586, %v1877, %v2170
        %v2923 = vsel %vm1586, %v1879, %v2172
        %v2924 = vsel %vm1586, %v1880, %v2174
        %v2925 = vsel %vm1586, %v1881, %v2176
        %v2926 = vsel %vm1586, %v1882, %v2178
        %v2927 = vsel %vm1586, %v1884, %v2180
        %v2928 = vsel %vm1586, %v1885, %v2182
        %v2929 = vsel %vm1586, %v1886, %v2184
        %v2930 = vsel %vm1586, %v1887, %v2186
        %v2931 = vsel %vm1586, %v1889, %v2188
        %v2932 = vsel %vm1586, %v1890, %v2190
        %v2933 = vsel %vm1586, %v1891, %v2192
        %v2934 = vsel %vm1586, %v1892, %v2194
        %v2935 = vsel %vm1586, %v1894, %v2196
        %v2936 = vsel %vm1586, %v1895, %v2198
        %v2937 = vsel %vm1586, %v1896, %v2200
        %v2938 = vsel %vm1586, %v1897, %v2202
        %v2939 = vsel %vm1619, %v2907, %v2236
        %v2940 = vsel %vm1619, %v2908, %v2238
        %v2941 = vsel %vm1619, %v2909, %v2240
        %v2942 = vsel %vm1619, %v2910, %v2242
        %v2943 = vsel %vm1619, %v2911, %v2244
        %v2944 = vsel %vm1619, %v2912, %v2246
        %v2945 = vsel %vm1619, %v2913, %v2248
        %v2946 = vsel %vm1619, %v2914, %v2250
        %v2947 = vsel %vm1619, %v2915, %v2252
        %v2948 = vsel %vm1619, %v2916, %v2254
        %v2949 = vsel %vm1619, %v2917, %v2256
        %v2950 = vsel %vm1619, %v2918, %v2258
        %v2951 = vsel %vm1619, %v2919, %v2260
        %v2952 = vsel %vm1619, %v2920, %v2262
        %v2953 = vsel %vm1619, %v2921, %v2264
        %v2954 = vsel %vm1619, %v2922, %v2266
        %v2955 = vsel %vm1619, %v2923, %v2268
        %v2956 = vsel %vm1619, %v2924, %v2270
        %v2957 = vsel %vm1619, %v2925, %v2272
        %v2958 = vsel %vm1619, %v2926, %v2274
        %v2959 = vsel %vm1619, %v2927, %v2276
        %v2960 = vsel %vm1619, %v2928, %v2278
        %v2961 = vsel %vm1619, %v2929, %v2280
        %v2962 = vsel %vm1619, %v2930, %v2282
        %v2963 = vsel %vm1619, %v2931, %v2284
        %v2964 = vsel %vm1619, %v2932, %v2286
        %v2965 = vsel %vm1619, %v2933, %v2288
        %v2966 = vsel %vm1619, %v2934, %v2290
        %v2967 = vsel %vm1619, %v2935, %v2292
        %v2968 = vsel %vm1619, %v2936, %v2294
        %v2969 = vsel %vm1619, %v2937, %v2296
        %v2970 = vsel %vm1619, %v2938, %v2298
        %v2971 = vsel %vm1652, %v2939, %v2332
        %v2972 = vsel %vm1652, %v2940, %v2334
        %v2973 = vsel %vm1652, %v2941, %v2336
        %v2974 = vsel %vm1652, %v2942, %v2338
        %v2975 = vsel %vm1652, %v2943, %v2340
        %v2976 = vsel %vm1652, %v2944, %v2342
        %v2977 = vsel %vm1652, %v2945, %v2344
        %v2978 = vsel %vm1652, %v2946, %v2346
        %v2979 = vsel %vm1652, %v2947, %v2348
        %v2980 = vsel %vm1652, %v2948, %v2350
        %v2981 = vsel %vm1652, %v2949, %v2352
        %v2982 = vsel %vm1652, %v2950, %v2354
        %v2983 = vsel %vm1652, %v2951, %v2356
        %v2984 = vsel %vm1652, %v2952, %v2358
        %v2985 = vsel %vm1652, %v2953, %v2360
        %v2986 = vsel %vm1652, %v2954, %v2362
        %v2987 = vsel %vm1652, %v2955, %v2364
        %v2988 = vsel %vm1652, %v2956, %v2366
        %v2989 = vsel %vm1652, %v2957, %v2368
        %v2990 = vsel %vm1652, %v2958, %v2370
        %v2991 = vsel %vm1652, %v2959, %v2372
        %v2992 = vsel %vm1652, %v2960, %v2374
        %v2993 = vsel %vm1652, %v2961, %v2376
        %v2994 = vsel %vm1652, %v2962, %v2378
        %v2995 = vsel %vm1652, %v2963, %v2380
        %v2996 = vsel %vm1652, %v2964, %v2382
        %v2997 = vsel %vm1652, %v2965, %v2384
        %v2998 = vsel %vm1652, %v2966, %v2386
        %v2999 = vsel %vm1652, %v2967, %v2388
        %v3000 = vsel %vm1652, %v2968, %v2390
        %v3001 = vsel %vm1652, %v2969, %v2392
        %v3002 = vsel %vm1652, %v2970, %v2394
        %v3003 = vsel %vm1685, %v2971, %v2428
        %v3004 = vsel %vm1685, %v2972, %v2430
        %v3005 = vsel %vm1685, %v2973, %v2432
        %v3006 = vsel %vm1685, %v2974, %v2434
        %v3007 = vsel %vm1685, %v2975, %v2436
        %v3008 = vsel %vm1685, %v2976, %v2438
        %v3009 = vsel %vm1685, %v2977, %v2440
        %v3010 = vsel %vm1685, %v2978, %v2442
        %v3011 = vsel %vm1685, %v2979, %v2444
        %v3012 = vsel %vm1685, %v2980, %v2446
        %v3013 = vsel %vm1685, %v2981, %v2448
        %v3014 = vsel %vm1685, %v2982, %v2450
        %v3015 = vsel %vm1685, %v2983, %v2452
        %v3016 = vsel %vm1685, %v2984, %v2454
        %v3017 = vsel %vm1685, %v2985, %v2456
        %v3018 = vsel %vm1685, %v2986, %v2458
        %v3019 = vsel %vm1685, %v2987, %v2460
        %v3020 = vsel %vm1685, %v2988, %v2462
        %v3021 = vsel %vm1685, %v2989, %v2464
        %v3022 = vsel %vm1685, %v2990, %v2466
        %v3023 = vsel %vm1685, %v2991, %v2468
        %v3024 = vsel %vm1685, %v2992, %v2470
        %v3025 = vsel %vm1685, %v2993, %v2472
        %v3026 = vsel %vm1685, %v2994, %v2474
        %v3027 = vsel %vm1685, %v2995, %v2476
        %v3028 = vsel %vm1685, %v2996, %v2478
        %v3029 = vsel %vm1685, %v2997, %v2480
        %v3030 = vsel %vm1685, %v2998, %v2482
        %v3031 = vsel %vm1685, %v2999, %v2484
        %v3032 = vsel %vm1685, %v3000, %v2486
        %v3033 = vsel %vm1685, %v3001, %v2488
        %v3034 = vsel %vm1685, %v3002, %v2490
        %v3035 = vsel %vm1718, %v3003, %v2524
        %v3036 = vsel %vm1718, %v3004, %v2526
        %v3037 = vsel %vm1718, %v3005, %v2528
        %v3038 = vsel %vm1718, %v3006, %v2530
        %v3039 = vsel %vm1718, %v3007, %v2532
        %v3040 = vsel %vm1718, %v3008, %v2534
        %v3041 = vsel %vm1718, %v3009, %v2536
        %v3042 = vsel %vm1718, %v3010, %v2538
        %v3043 = vsel %vm1718, %v3011, %v2540
        %v3044 = vsel %vm1718, %v3012, %v2542
        %v3045 = vsel %vm1718, %v3013, %v2544
        %v3046 = vsel %vm1718, %v3014, %v2546
        %v3047 = vsel %vm1718, %v3015, %v2548
        %v3048 = vsel %vm1718, %v3016, %v2550
        %v3049 = vsel %vm1718, %v3017, %v2552
        %v3050 = vsel %vm1718, %v3018, %v2554
        %v3051 = vsel %vm1718, %v3019, %v2556
        %v3052 = vsel %vm1718, %v3020, %v2558
        %v3053 = vsel %vm1718, %v3021, %v2560
        %v3054 = vsel %vm1718, %v3022, %v2562
        %v3055 = vsel %vm1718, %v3023, %v2564
        %v3056 = vsel %vm1718, %v3024, %v2566
        %v3057 = vsel %vm1718, %v3025, %v2568
        %v3058 = vsel %vm1718, %v3026, %v2570
        %v3059 = vsel %vm1718, %v3027, %v2572
        %v3060 = vsel %vm1718, %v3028, %v2574
        %v3061 = vsel %vm1718, %v3029, %v2576
        %v3062 = vsel %vm1718, %v3030, %v2578
        %v3063 = vsel %vm1718, %v3031, %v2580
        %v3064 = vsel %vm1718, %v3032, %v2582
        %v3065 = vsel %vm1718, %v3033, %v2584
        %v3066 = vsel %vm1718, %v3034, %v2586
        %v3067 = vsel %vm1751, %v3035, %v2620
        %v3068 = vsel %vm1751, %v3036, %v2622
        %v3069 = vsel %vm1751, %v3037, %v2624
        %v3070 = vsel %vm1751, %v3038, %v2626
        %v3071 = vsel %vm1751, %v3039, %v2628
        %v3072 = vsel %vm1751, %v3040, %v2630
        %v3073 = vsel %vm1751, %v3041, %v2632
        %v3074 = vsel %vm1751, %v3042, %v2634
        %v3075 = vsel %vm1751, %v3043, %v2636
        %v3076 = vsel %vm1751, %v3044, %v2638
        %v3077 = vsel %vm1751, %v3045, %v2640
        %v3078 = vsel %vm1751, %v3046, %v2642
        %v3079 = vsel %vm1751, %v3047, %v2644
        %v3080 = vsel %vm1751, %v3048, %v2646
        %v3081 = vsel %vm1751, %v3049, %v2648
        %v3082 = vsel %vm1751, %v3050, %v2650
        %v3083 = vsel %vm1751, %v3051, %v2652
        %v3084 = vsel %vm1751, %v3052, %v2654
        %v3085 = vsel %vm1751, %v3053, %v2656
        %v3086 = vsel %vm1751, %v3054, %v2658
        %v3087 = vsel %vm1751, %v3055, %v2660
        %v3088 = vsel %vm1751, %v3056, %v2662
        %v3089 = vsel %vm1751, %v3057, %v2664
        %v3090 = vsel %vm1751, %v3058, %v2666
        %v3091 = vsel %vm1751, %v3059, %v2668
        %v3092 = vsel %vm1751, %v3060, %v2670
        %v3093 = vsel %vm1751, %v3061, %v2672
        %v3094 = vsel %vm1751, %v3062, %v2674
        %v3095 = vsel %vm1751, %v3063, %v2676
        %v3096 = vsel %vm1751, %v3064, %v2678
        %v3097 = vsel %vm1751, %v3065, %v2680
        %v3098 = vsel %vm1751, %v3066, %v2682
        %v3099 = vsel %vm1784, %v3067, %v2716
        %v3100 = vsel %vm1784, %v3068, %v2718
        %v3101 = vsel %vm1784, %v3069, %v2720
        %v3102 = vsel %vm1784, %v3070, %v2722
        %v3103 = vsel %vm1784, %v3071, %v2724
        %v3104 = vsel %vm1784, %v3072, %v2726
        %v3105 = vsel %vm1784, %v3073, %v2728
        %v3106 = vsel %vm1784, %v3074, %v2730
        %v3107 = vsel %vm1784, %v3075, %v2732
        %v3108 = vsel %vm1784, %v3076, %v2734
        %v3109 = vsel %vm1784, %v3077, %v2736
        %v3110 = vsel %vm1784, %v3078, %v2738
        %v3111 = vsel %vm1784, %v3079, %v2740
        %v3112 = vsel %vm1784, %v3080, %v2742
        %v3113 = vsel %vm1784, %v3081, %v2744
        %v3114 = vsel %vm1784, %v3082, %v2746
        %v3115 = vsel %vm1784, %v3083, %v2748
        %v3116 = vsel %vm1784, %v3084, %v2750
        %v3117 = vsel %vm1784, %v3085, %v2752
        %v3118 = vsel %vm1784, %v3086, %v2754
        %v3119 = vsel %vm1784, %v3087, %v2756
        %v3120 = vsel %vm1784, %v3088, %v2758
        %v3121 = vsel %vm1784, %v3089, %v2760
        %v3122 = vsel %vm1784, %v3090, %v2762
        %v3123 = vsel %vm1784, %v3091, %v2764
        %v3124 = vsel %vm1784, %v3092, %v2766
        %v3125 = vsel %vm1784, %v3093, %v2768
        %v3126 = vsel %vm1784, %v3094, %v2770
        %v3127 = vsel %vm1784, %v3095, %v2772
        %v3128 = vsel %vm1784, %v3096, %v2774
        %v3129 = vsel %vm1784, %v3097, %v2776
        %v3130 = vsel %vm1784, %v3098, %v2778
        %v3131 = vsel %vm1817, %v3099, %v2812
        %v3132 = vsel %vm1817, %v3100, %v2814
        %v3133 = vsel %vm1817, %v3101, %v2816
        %v3134 = vsel %vm1817, %v3102, %v2818
        %v3135 = vsel %vm1817, %v3103, %v2820
        %v3136 = vsel %vm1817, %v3104, %v2822
        %v3137 = vsel %vm1817, %v3105, %v2824
        %v3138 = vsel %vm1817, %v3106, %v2826
        %v3139 = vsel %vm1817, %v3107, %v2828
        %v3140 = vsel %vm1817, %v3108, %v2830
        %v3141 = vsel %vm1817, %v3109, %v2832
        %v3142 = vsel %vm1817, %v3110, %v2834
        %v3143 = vsel %vm1817, %v3111, %v2836
        %v3144 = vsel %vm1817, %v3112, %v2838
        %v3145 = vsel %vm1817, %v3113, %v2840
        %v3146 = vsel %vm1817, %v3114, %v2842
        %v3147 = vsel %vm1817, %v3115, %v2844
        %v3148 = vsel %vm1817, %v3116, %v2846
        %v3149 = vsel %vm1817, %v3117, %v2848
        %v3150 = vsel %vm1817, %v3118, %v2850
        %v3151 = vsel %vm1817, %v3119, %v2852
        %v3152 = vsel %vm1817, %v3120, %v2854
        %v3153 = vsel %vm1817, %v3121, %v2856
        %v3154 = vsel %vm1817, %v3122, %v2858
        %v3155 = vsel %vm1817, %v3123, %v2860
        %v3156 = vsel %vm1817, %v3124, %v2862
        %v3157 = vsel %vm1817, %v3125, %v2864
        %v3158 = vsel %vm1817, %v3126, %v2866
        %v3159 = vsel %vm1817, %v3127, %v2868
        %v3160 = vsel %vm1817, %v3128, %v2870
        %v3161 = vsel %vm1817, %v3129, %v2872
        %v3162 = vsel %vm1817, %v3130, %v2874
        %v3163 = vld [vmem:[#allocation11] sm:$0xff]
        %v3164 = vld [vmem:[#allocation11 + $0x8] sm:$0xff]
        %v3165 = vld [vmem:[#allocation11 + $0x10] sm:$0xff]
        %v3166 = vld [vmem:[#allocation11 + $0x18] sm:$0xff]
        %v3167 = vld [vmem:[#allocation11 + $0x20] sm:$0xff]
        %v3168 = vld [vmem:[#allocation11 + $0x28] sm:$0xff]
        %v3169 = vld [vmem:[#allocation11 + $0x30] sm:$0xff]
        %v3170 = vld [vmem:[#allocation11 + $0x38] sm:$0xff]
        %v3171 = vld [vmem:[#allocation11 + $0x40] sm:$0xff]
        %vm3172 = vcmask 588800
        %v3174 = vsel %vm3172, %v3131, 0
        %v3177 = vsel %vm3172, %v3132, 0
        %v3180 = vsel %vm3172, %v3133, 0
        %v3183 = vsel %vm3172, %v3134, 0
        %v3186 = vsel %vm3172, %v3135, 0
        %v3189 = vsel %vm3172, %v3136, 0
        %v3192 = vsel %vm3172, %v3137, 0
        %v3195 = vsel %vm3172, %v3138, 0
        %v3198 = vsel %vm3172, %v3139, 0
        %v3201 = vsel %vm3172, %v3140, 0
        %v3204 = vsel %vm3172, %v3141, 0
        %v3207 = vsel %vm3172, %v3142, 0
        %v3210 = vsel %vm3172, %v3143, 0
        %v3213 = vsel %vm3172, %v3144, 0
        %v3216 = vsel %vm3172, %v3145, 0
        %v3219 = vsel %vm3172, %v3146, 0
        %v3222 = vsel %vm3172, %v3147, 0
        %v3225 = vsel %vm3172, %v3148, 0
        %v3228 = vsel %vm3172, %v3149, 0
        %v3231 = vsel %vm3172, %v3150, 0
        %v3234 = vsel %vm3172, %v3151, 0
        %v3237 = vsel %vm3172, %v3152, 0
        %v3240 = vsel %vm3172, %v3153, 0
        %v3243 = vsel %vm3172, %v3154, 0
        %v3246 = vsel %vm3172, %v3155, 0
        %v3249 = vsel %vm3172, %v3156, 0
        %v3252 = vsel %vm3172, %v3157, 0
        %v3255 = vsel %vm3172, %v3158, 0
        %v3258 = vsel %vm3172, %v3159, 0
        %v3261 = vsel %vm3172, %v3160, 0
        %v3264 = vsel %vm3172, %v3161, 0
        %v3267 = vsel %vm3172, %v3162, 0
        %3269 = vmatprep.subr.mxu0 0.0
        %3270 = vmatpush1.msra.mxu0 %v3163
        %3271 = vmatprep.subr.mxu0 0.0
        %3272 = vmatpush1.msra.mxu0 %v3164
        %3273 = vmatprep.subr.mxu0 0.0
        %3274 = vmatpush1.msra.mxu0 %v3165
        %3275 = vmatprep.subr.mxu0 0.0
        %3276 = vmatpush1.msra.mxu0 %v3166
        %3277 = vmatprep.subr.mxu0 0.0
        %3278 = vmatpush1.msra.mxu0 %v3167
        %3279 = vmatprep.subr.mxu0 0.0
        %3280 = vmatpush1.msra.mxu0 %v3168
        %3281 = vmatprep.subr.mxu0 0.0
        %3282 = vmatpush1.msra.mxu0 %v3169
        %3283 = vmatprep.subr.mxu0 0.0
        %3284 = vmatpush1.msra.mxu0 %v3170
        %3285 = vmatprep.subr.mxu0 0.0
        %3286 = vmatpush1.msra.mxu0 %v3171
        %3287 = vmatprep.subr.mxu0 0.0
        %3288 = vmatpush1.msra.mxu0 0.0
        %3289 = vmatprep.subr.mxu0 0.0
        %3290 = vmatpush1.msra.mxu0 0.0
        %3291 = vmatprep.subr.mxu0 0.0
        %3292 = vmatpush1.msra.mxu0 0.0
        %3293 = vmatprep.subr.mxu0 0.0
        %3294 = vmatpush1.msra.mxu0 0.0
        %3295 = vmatprep.subr.mxu0 0.0
        %3296 = vmatpush1.msra.mxu0 0.0
        %3297 = vmatprep.subr.mxu0 0.0
        %3298 = vmatpush1.msra.mxu0 0.0
        %3299 = vmatprep.subr.mxu0 0.0
        %3300 = vmatpush1.msra.mxu0 0.0
        %3301 = vmatprep.subr.mxu0 0.0
        %3302 = vmatpush1.msra.mxu0 0.0
        %3303 = vmatprep.subr.mxu0 0.0
        %3304 = vmatpush1.msra.mxu0 0.0
        %3305 = vmatprep.subr.mxu0 0.0
        %3306 = vmatpush1.msra.mxu0 0.0
        %3307 = vmatprep.subr.mxu0 0.0
        %3308 = vmatpush1.msra.mxu0 0.0
        %3309 = vmatprep.subr.mxu0 0.0
        %3310 = vmatpush1.msra.mxu0 0.0
        %3311 = vmatprep.subr.mxu0 0.0
        %3312 = vmatpush1.msra.mxu0 0.0
        %3313 = vmatprep.subr.mxu0 0.0
        %3314 = vmatpush1.msra.mxu0 0.0
        %3315 = vmatprep.subr.mxu0 0.0
        %3316 = vmatpush1.msra.mxu0 0.0
        %3317 = vmatprep.subr.mxu0 0.0
        %3318 = vmatpush1.msra.mxu0 0.0
        %3319 = vmatprep.subr.mxu0 0.0
        %3320 = vmatpush1.msra.mxu0 0.0
        %3321 = vmatprep.subr.mxu0 0.0
        %3322 = vmatpush1.msra.mxu0 0.0
        %3323 = vmatprep.subr.mxu0 0.0
        %3324 = vmatpush1.msra.mxu0 0.0
        %3325 = vmatprep.subr.mxu0 0.0
        %3326 = vmatpush1.msra.mxu0 0.0
        %3327 = vmatprep.subr.mxu0 0.0
        %3328 = vmatpush1.msra.mxu0 0.0
        %3329 = vmatprep.subr.mxu0 0.0
        %3330 = vmatpush1.msra.mxu0 0.0
        %3331 = vmatprep.subr.mxu0 0.0
        %3332 = vmatpush1.msra.mxu0 0.0
        %3333 = vmatprep.mubr.f32.mxu0 0.0
        %3334 = vmatmul.mubr.f32.gmra.mrb[0].mxu0 %v3174
        %v3335 = vpop.f32.mrb[0].mxu0
        %v3336 = vadd.f32 0.0, %v3335
        %v3337 = vpop.f32.mrb[0].mxu0
        %3338 = vmatprep.mubr.f32.mxu0 0.0
        %3339 = vmatmul.mubr.f32.gmra.mrb[0].mxu0 %v3177
        %v3340 = vpop.f32.mrb[0].mxu0
        %v3341 = vadd.f32 0.0, %v3340
        %v3342 = vpop.f32.mrb[0].mxu0
        %3343 = vmatprep.mubr.f32.mxu0 0.0
        %3344 = vmatmul.mubr.f32.gmra.mrb[0].mxu0 %v3180
        %v3345 = vpop.f32.mrb[0].mxu0
        %v3346 = vadd.f32 0.0, %v3345
        %v3347 = vpop.f32.mrb[0].mxu0
        %3348 = vmatprep.mubr.f32.mxu0 0.0
        %3349 = vmatmul.mubr.f32.gmra.mrb[0].mxu0 %v3183
        %v3350 = vpop.f32.mrb[0].mxu0
        %v3351 = vadd.f32 0.0, %v3350
        %v3352 = vpop.f32.mrb[0].mxu0
        %3353 = vmatprep.mubr.f32.mxu0 0.0
        %3354 = vmatmul.mubr.f32.gmra.mrb[0].mxu0 %v3186
        %v3355 = vpop.f32.mrb[0].mxu0
        %v3356 = vadd.f32 0.0, %v3355
        %v3357 = vpop.f32.mrb[0].mxu0
        %3358 = vmatprep.mubr.f32.mxu0 0.0
        %3359 = vmatmul.mubr.f32.gmra.mrb[0].mxu0 %v3189
        %v3360 = vpop.f32.mrb[0].mxu0
        %v3361 = vadd.f32 0.0, %v3360
        %v3362 = vpop.f32.mrb[0].mxu0
        %3363 = vmatprep.mubr.f32.mxu0 0.0
        %3364 = vmatmul.mubr.f32.gmra.mrb[0].mxu0 %v3192
        %v3365 = vpop.f32.mrb[0].mxu0
        %v3366 = vadd.f32 0.0, %v3365
        %v3367 = vpop.f32.mrb[0].mxu0
        %3368 = vmatprep.mubr.f32.mxu0 0.0
        %3369 = vmatmul.mubr.f32.gmra.mrb[0].mxu0 %v3195
        %v3370 = vpop.f32.mrb[0].mxu0
        %v3371 = vadd.f32 0.0, %v3370
        %v3372 = vpop.f32.mrb[0].mxu0
        %3373 = vmatprep.mubr.f32.mxu0 0.0
        %3374 = vmatmul.mubr.f32.gmra.mrb[0].mxu0 %v3198
        %v3375 = vpop.f32.mrb[0].mxu0
        %v3376 = vadd.f32 0.0, %v3375
        %v3377 = vpop.f32.mrb[0].mxu0
        %3378 = vmatprep.mubr.f32.mxu0 0.0
        %3379 = vmatmul.mubr.f32.gmra.mrb[0].mxu0 %v3201
        %v3380 = vpop.f32.mrb[0].mxu0
        %v3381 = vadd.f32 0.0, %v3380
        %v3382 = vpop.f32.mrb[0].mxu0
        %3383 = vmatprep.mubr.f32.mxu0 0.0
        %3384 = vmatmul.mubr.f32.gmra.mrb[0].mxu0 %v3204
        %v3385 = vpop.f32.mrb[0].mxu0
        %v3386 = vadd.f32 0.0, %v3385
        %v3387 = vpop.f32.mrb[0].mxu0
        %3388 = vmatprep.mubr.f32.mxu0 0.0
        %3389 = vmatmul.mubr.f32.gmra.mrb[0].mxu0 %v3207
        %v3390 = vpop.f32.mrb[0].mxu0
        %v3391 = vadd.f32 0.0, %v3390
        %v3392 = vpop.f32.mrb[0].mxu0
        %3393 = vmatprep.mubr.f32.mxu0 0.0
        %3394 = vmatmul.mubr.f32.gmra.mrb[0].mxu0 %v3210
        %v3395 = vpop.f32.mrb[0].mxu0
        %v3396 = vadd.f32 0.0, %v3395
        %v3397 = vpop.f32.mrb[0].mxu0
        %3398 = vmatprep.mubr.f32.mxu0 0.0
        %3399 = vmatmul.mubr.f32.gmra.mrb[0].mxu0 %v3213
        %v3400 = vpop.f32.mrb[0].mxu0
        %v3401 = vadd.f32 0.0, %v3400
        %v3402 = vpop.f32.mrb[0].mxu0
        %3403 = vmatprep.mubr.f32.mxu0 0.0
        %3404 = vmatmul.mubr.f32.gmra.mrb[0].mxu0 %v3216
        %v3405 = vpop.f32.mrb[0].mxu0
        %v3406 = vadd.f32 0.0, %v3405
        %v3407 = vpop.f32.mrb[0].mxu0
        %3408 = vmatprep.mubr.f32.mxu0 0.0
        %3409 = vmatmul.mubr.f32.gmra.mrb[0].mxu0 %v3219
        %v3410 = vpop.f32.mrb[0].mxu0
        %v3411 = vadd.f32 0.0, %v3410
        %v3412 = vpop.f32.mrb[0].mxu0
        %3413 = vmatprep.mubr.f32.mxu0 0.0
        %3414 = vmatmul.mubr.f32.gmra.mrb[0].mxu0 %v3222
        %v3415 = vpop.f32.mrb[0].mxu0
        %v3416 = vadd.f32 0.0, %v3415
        %v3417 = vpop.f32.mrb[0].mxu0
        %3418 = vmatprep.mubr.f32.mxu0 0.0
        %3419 = vmatmul.mubr.f32.gmra.mrb[0].mxu0 %v3225
        %v3420 = vpop.f32.mrb[0].mxu0
        %v3421 = vadd.f32 0.0, %v3420
        %v3422 = vpop.f32.mrb[0].mxu0
        %3423 = vmatprep.mubr.f32.mxu0 0.0
        %3424 = vmatmul.mubr.f32.gmra.mrb[0].mxu0 %v3228
        %v3425 = vpop.f32.mrb[0].mxu0
        %v3426 = vadd.f32 0.0, %v3425
        %v3427 = vpop.f32.mrb[0].mxu0
        %3428 = vmatprep.mubr.f32.mxu0 0.0
        %3429 = vmatmul.mubr.f32.gmra.mrb[0].mxu0 %v3231
        %v3430 = vpop.f32.mrb[0].mxu0
        %v3431 = vadd.f32 0.0, %v3430
        %v3432 = vpop.f32.mrb[0].mxu0
        %3433 = vmatprep.mubr.f32.mxu0 0.0
        %3434 = vmatmul.mubr.f32.gmra.mrb[0].mxu0 %v3234
        %v3435 = vpop.f32.mrb[0].mxu0
        %v3436 = vadd.f32 0.0, %v3435
        %v3437 = vpop.f32.mrb[0].mxu0
        %3438 = vmatprep.mubr.f32.mxu0 0.0
        %3439 = vmatmul.mubr.f32.gmra.mrb[0].mxu0 %v3237
        %v3440 = vpop.f32.mrb[0].mxu0
        %v3441 = vadd.f32 0.0, %v3440
        %v3442 = vpop.f32.mrb[0].mxu0
        %3443 = vmatprep.mubr.f32.mxu0 0.0
        %3444 = vmatmul.mubr.f32.gmra.mrb[0].mxu0 %v3240
        %v3445 = vpop.f32.mrb[0].mxu0
        %v3446 = vadd.f32 0.0, %v3445
        %v3447 = vpop.f32.mrb[0].mxu0
        %3448 = vmatprep.mubr.f32.mxu0 0.0
        %3449 = vmatmul.mubr.f32.gmra.mrb[0].mxu0 %v3243
        %v3450 = vpop.f32.mrb[0].mxu0
        %v3451 = vadd.f32 0.0, %v3450
        %v3452 = vpop.f32.mrb[0].mxu0
        %3453 = vmatprep.mubr.f32.mxu0 0.0
        %3454 = vmatmul.mubr.f32.gmra.mrb[0].mxu0 %v3246
        %v3455 = vpop.f32.mrb[0].mxu0
        %v3456 = vadd.f32 0.0, %v3455
        %v3457 = vpop.f32.mrb[0].mxu0
        %3458 = vmatprep.mubr.f32.mxu0 0.0
        %3459 = vmatmul.mubr.f32.gmra.mrb[0].mxu0 %v3249
        %v3460 = vpop.f32.mrb[0].mxu0
        %v3461 = vadd.f32 0.0, %v3460
        %v3462 = vpop.f32.mrb[0].mxu0
        %3463 = vmatprep.mubr.f32.mxu0 0.0
        %3464 = vmatmul.mubr.f32.gmra.mrb[0].mxu0 %v3252
        %v3465 = vpop.f32.mrb[0].mxu0
        %v3466 = vadd.f32 0.0, %v3465
        %v3467 = vpop.f32.mrb[0].mxu0
        %3468 = vmatprep.mubr.f32.mxu0 0.0
        %3469 = vmatmul.mubr.f32.gmra.mrb[0].mxu0 %v3255
        %v3470 = vpop.f32.mrb[0].mxu0
        %v3471 = vadd.f32 0.0, %v3470
        %v3472 = vpop.f32.mrb[0].mxu0
        %3473 = vmatprep.mubr.f32.mxu0 0.0
        %3474 = vmatmul.mubr.f32.gmra.mrb[0].mxu0 %v3258
        %v3475 = vpop.f32.mrb[0].mxu0
        %v3476 = vadd.f32 0.0, %v3475
        %v3477 = vpop.f32.mrb[0].mxu0
        %3478 = vmatprep.mubr.f32.mxu0 0.0
        %3479 = vmatmul.mubr.f32.gmra.mrb[0].mxu0 %v3261
        %v3480 = vpop.f32.mrb[0].mxu0
        %v3481 = vadd.f32 0.0, %v3480
        %v3482 = vpop.f32.mrb[0].mxu0
        %3483 = vmatprep.mubr.f32.mxu0 0.0
        %3484 = vmatmul.mubr.f32.gmra.mrb[0].mxu0 %v3264
        %v3485 = vpop.f32.mrb[0].mxu0
        %v3486 = vadd.f32 0.0, %v3485
        %v3487 = vpop.f32.mrb[0].mxu0
        %3488 = vmatprep.mubr.f32.mxu0 0.0
        %3489 = vmatmul.mubr.f32.gmra.mrb[0].mxu0 %v3267
        %v3490 = vpop.f32.mrb[0].mxu0
        %v3491 = vadd.f32 0.0, %v3490
        %v3492 = vpop.f32.mrb[0].mxu0
        %3493 = vdwg.mxu0
        %v3495 = vsel %vm3172, %v1818, 0
        %v3498 = vsel %vm3172, %v1819, 0
        %v3501 = vsel %vm3172, %v1820, 0
        %v3504 = vsel %vm3172, %v1821, 0
        %v3507 = vsel %vm3172, %v1822, 0
        %v3510 = vsel %vm3172, %v1823, 0
        %v3513 = vsel %vm3172, %v1824, 0
        %v3516 = vsel %vm3172, %v1825, 0
        %v3519 = vsel %vm3172, %v1826, 0
        %v3522 = vsel %vm3172, %v1827, 0
        %v3525 = vsel %vm3172, %v1828, 0
        %v3528 = vsel %vm3172, %v1829, 0
        %v3531 = vsel %vm3172, %v1830, 0
        %v3534 = vsel %vm3172, %v1831, 0
        %v3537 = vsel %vm3172, %v1832, 0
        %v3540 = vsel %vm3172, %v1833, 0
        %v3543 = vsel %vm3172, %v1834, 0
        %v3546 = vsel %vm3172, %v1835, 0
        %v3549 = vsel %vm3172, %v1836, 0
        %v3552 = vsel %vm3172, %v1837, 0
        %v3555 = vsel %vm3172, %v1838, 0
        %v3558 = vsel %vm3172, %v1839, 0
        %v3561 = vsel %vm3172, %v1840, 0
        %v3564 = vsel %vm3172, %v1841, 0
        %v3567 = vsel %vm3172, %v1842, 0
        %v3570 = vsel %vm3172, %v1843, 0
        %v3573 = vsel %vm3172, %v1844, 0
        %v3576 = vsel %vm3172, %v1845, 0
        %v3579 = vsel %vm3172, %v1846, 0
        %v3582 = vsel %vm3172, %v1847, 0
        %v3585 = vsel %vm3172, %v1848, 0
        %v3588 = vsel %vm3172, %v1849, 0
        %3590 = vmatprep.subr.mxu0 0.0
        %3591 = vmatpush1.msra.mxu0 %v1850
        %3592 = vmatprep.subr.mxu0 0.0
        %3593 = vmatpush1.msra.mxu0 %v1851
        %3594 = vmatprep.subr.mxu0 0.0
        %3595 = vmatpush1.msra.mxu0 %v1852
        %3596 = vmatprep.subr.mxu0 0.0
        %3597 = vmatpush1.msra.mxu0 %v1853
        %3598 = vmatprep.subr.mxu0 0.0
        %3599 = vmatpush1.msra.mxu0 %v1854
        %3600 = vmatprep.subr.mxu0 0.0
        %3601 = vmatpush1.msra.mxu0 %v1855
        %3602 = vmatprep.subr.mxu0 0.0
        %3603 = vmatpush1.msra.mxu0 %v1856
        %3604 = vmatprep.subr.mxu0 0.0
        %3605 = vmatpush1.msra.mxu0 %v1857
        %3606 = vmatprep.subr.mxu0 0.0
        %3607 = vmatpush1.msra.mxu0 %v1858
        %3608 = vmatprep.subr.mxu0 0.0
        %3609 = vmatpush1.msra.mxu0 0.0
        %3610 = vmatprep.subr.mxu0 0.0
        %3611 = vmatpush1.msra.mxu0 0.0
        %3612 = vmatprep.subr.mxu0 0.0
        %3613 = vmatpush1.msra.mxu0 0.0
        %3614 = vmatprep.subr.mxu0 0.0
        %3615 = vmatpush1.msra.mxu0 0.0
        %3616 = vmatprep.subr.mxu0 0.0
        %3617 = vmatpush1.msra.mxu0 0.0
        %3618 = vmatprep.subr.mxu0 0.0
        %3619 = vmatpush1.msra.mxu0 0.0
        %3620 = vmatprep.subr.mxu0 0.0
        %3621 = vmatpush1.msra.mxu0 0.0
        %3622 = vmatprep.subr.mxu0 0.0
        %3623 = vmatpush1.msra.mxu0 0.0
        %3624 = vmatprep.subr.mxu0 0.0
        %3625 = vmatpush1.msra.mxu0 0.0
        %3626 = vmatprep.subr.mxu0 0.0
        %3627 = vmatpush1.msra.mxu0 0.0
        %3628 = vmatprep.subr.mxu0 0.0
        %3629 = vmatpush1.msra.mxu0 0.0
        %3630 = vmatprep.subr.mxu0 0.0
        %3631 = vmatpush1.msra.mxu0 0.0
        %3632 = vmatprep.subr.mxu0 0.0
        %3633 = vmatpush1.msra.mxu0 0.0
        %3634 = vmatprep.subr.mxu0 0.0
        %3635 = vmatpush1.msra.mxu0 0.0
        %3636 = vmatprep.subr.mxu0 0.0
        %3637 = vmatpush1.msra.mxu0 0.0
        %3638 = vmatprep.subr.mxu0 0.0
        %3639 = vmatpush1.msra.mxu0 0.0
        %3640 = vmatprep.subr.mxu0 0.0
        %3641 = vmatpush1.msra.mxu0 0.0
        %3642 = vmatprep.subr.mxu0 0.0
        %3643 = vmatpush1.msra.mxu0 0.0
        %3644 = vmatprep.subr.mxu0 0.0
        %3645 = vmatpush1.msra.mxu0 0.0
        %3646 = vmatprep.subr.mxu0 0.0
        %3647 = vmatpush1.msra.mxu0 0.0
        %3648 = vmatprep.subr.mxu0 0.0
        %3649 = vmatpush1.msra.mxu0 0.0
        %3650 = vmatprep.subr.mxu0 0.0
        %3651 = vmatpush1.msra.mxu0 0.0
        %3652 = vmatprep.subr.mxu0 0.0
        %3653 = vmatpush1.msra.mxu0 0.0
        %3654 = vmatprep.mubr.f32.mxu0 0.0
        %3655 = vmatmul.mubr.f32.gmra.mrb[0].mxu0 %v3495
        %v3656 = vpop.f32.mrb[0].mxu0
        %v3657 = vadd.f32 %v3336, %v3656
        %v3658 = vpop.f32.mrb[0].mxu0
        %3659 = vmatprep.mubr.f32.mxu0 0.0
        %3660 = vmatmul.mubr.f32.gmra.mrb[0].mxu0 %v3498
        %v3661 = vpop.f32.mrb[0].mxu0
        %v3662 = vadd.f32 %v3341, %v3661
        %v3663 = vpop.f32.mrb[0].mxu0
        %3664 = vmatprep.mubr.f32.mxu0 0.0
        %3665 = vmatmul.mubr.f32.gmra.mrb[0].mxu0 %v3501
        %v3666 = vpop.f32.mrb[0].mxu0
        %v3667 = vadd.f32 %v3346, %v3666
        %v3668 = vpop.f32.mrb[0].mxu0
        %3669 = vmatprep.mubr.f32.mxu0 0.0
        %3670 = vmatmul.mubr.f32.gmra.mrb[0].mxu0 %v3504
        %v3671 = vpop.f32.mrb[0].mxu0
        %v3672 = vadd.f32 %v3351, %v3671
        %v3673 = vpop.f32.mrb[0].mxu0
        %3674 = vmatprep.mubr.f32.mxu0 0.0
        %3675 = vmatmul.mubr.f32.gmra.mrb[0].mxu0 %v3507
        %v3676 = vpop.f32.mrb[0].mxu0
        %v3677 = vadd.f32 %v3356, %v3676
        %v3678 = vpop.f32.mrb[0].mxu0
        %3679 = vmatprep.mubr.f32.mxu0 0.0
        %3680 = vmatmul.mubr.f32.gmra.mrb[0].mxu0 %v3510
        %v3681 = vpop.f32.mrb[0].mxu0
        %v3682 = vadd.f32 %v3361, %v3681
        %v3683 = vpop.f32.mrb[0].mxu0
        %3684 = vmatprep.mubr.f32.mxu0 0.0
        %3685 = vmatmul.mubr.f32.gmra.mrb[0].mxu0 %v3513
        %v3686 = vpop.f32.mrb[0].mxu0
        %v3687 = vadd.f32 %v3366, %v3686
        %v3688 = vpop.f32.mrb[0].mxu0
        %3689 = vmatprep.mubr.f32.mxu0 0.0
        %3690 = vmatmul.mubr.f32.gmra.mrb[0].mxu0 %v3516
        %v3691 = vpop.f32.mrb[0].mxu0
        %v3692 = vadd.f32 %v3371, %v3691
        %v3693 = vpop.f32.mrb[0].mxu0
        %3694 = vmatprep.mubr.f32.mxu0 0.0
        %3695 = vmatmul.mubr.f32.gmra.mrb[0].mxu0 %v3519
        %v3696 = vpop.f32.mrb[0].mxu0
        %v3697 = vadd.f32 %v3376, %v3696
        %v3698 = vpop.f32.mrb[0].mxu0
        %3699 = vmatprep.mubr.f32.mxu0 0.0
        %3700 = vmatmul.mubr.f32.gmra.mrb[0].mxu0 %v3522
        %v3701 = vpop.f32.mrb[0].mxu0
        %v3702 = vadd.f32 %v3381, %v3701
        %v3703 = vpop.f32.mrb[0].mxu0
        %3704 = vmatprep.mubr.f32.mxu0 0.0
        %3705 = vmatmul.mubr.f32.gmra.mrb[0].mxu0 %v3525
        %v3706 = vpop.f32.mrb[0].mxu0
        %v3707 = vadd.f32 %v3386, %v3706
        %v3708 = vpop.f32.mrb[0].mxu0
        %3709 = vmatprep.mubr.f32.mxu0 0.0
        %3710 = vmatmul.mubr.f32.gmra.mrb[0].mxu0 %v3528
        %v3711 = vpop.f32.mrb[0].mxu0
        %v3712 = vadd.f32 %v3391, %v3711
        %v3713 = vpop.f32.mrb[0].mxu0
        %3714 = vmatprep.mubr.f32.mxu0 0.0
        %3715 = vmatmul.mubr.f32.gmra.mrb[0].mxu0 %v3531
        %v3716 = vpop.f32.mrb[0].mxu0
        %v3717 = vadd.f32 %v3396, %v3716
        %v3718 = vpop.f32.mrb[0].mxu0
        %3719 = vmatprep.mubr.f32.mxu0 0.0
        %3720 = vmatmul.mubr.f32.gmra.mrb[0].mxu0 %v3534
        %v3721 = vpop.f32.mrb[0].mxu0
        %v3722 = vadd.f32 %v3401, %v3721
        %v3723 = vpop.f32.mrb[0].mxu0
        %3724 = vmatprep.mubr.f32.mxu0 0.0
        %3725 = vmatmul.mubr.f32.gmra.mrb[0].mxu0 %v3537
        %v3726 = vpop.f32.mrb[0].mxu0
        %v3727 = vadd.f32 %v3406, %v3726
        %v3728 = vpop.f32.mrb[0].mxu0
        %3729 = vmatprep.mubr.f32.mxu0 0.0
        %3730 = vmatmul.mubr.f32.gmra.mrb[0].mxu0 %v3540
        %v3731 = vpop.f32.mrb[0].mxu0
        %v3732 = vadd.f32 %v3411, %v3731
        %v3733 = vpop.f32.mrb[0].mxu0
        %3734 = vmatprep.mubr.f32.mxu0 0.0
        %3735 = vmatmul.mubr.f32.gmra.mrb[0].mxu0 %v3543
        %v3736 = vpop.f32.mrb[0].mxu0
        %v3737 = vadd.f32 %v3416, %v3736
        %v3738 = vpop.f32.mrb[0].mxu0
        %3739 = vmatprep.mubr.f32.mxu0 0.0
        %3740 = vmatmul.mubr.f32.gmra.mrb[0].mxu0 %v3546
        %v3741 = vpop.f32.mrb[0].mxu0
        %v3742 = vadd.f32 %v3421, %v3741
        %v3743 = vpop.f32.mrb[0].mxu0
        %3744 = vmatprep.mubr.f32.mxu0 0.0
        %3745 = vmatmul.mubr.f32.gmra.mrb[0].mxu0 %v3549
        %v3746 = vpop.f32.mrb[0].mxu0
        %v3747 = vadd.f32 %v3426, %v3746
        %v3748 = vpop.f32.mrb[0].mxu0
        %3749 = vmatprep.mubr.f32.mxu0 0.0
        %3750 = vmatmul.mubr.f32.gmra.mrb[0].mxu0 %v3552
        %v3751 = vpop.f32.mrb[0].mxu0
        %v3752 = vadd.f32 %v3431, %v3751
        %v3753 = vpop.f32.mrb[0].mxu0
        %3754 = vmatprep.mubr.f32.mxu0 0.0
        %3755 = vmatmul.mubr.f32.gmra.mrb[0].mxu0 %v3555
        %v3756 = vpop.f32.mrb[0].mxu0
        %v3757 = vadd.f32 %v3436, %v3756
        %v3758 = vpop.f32.mrb[0].mxu0
        %3759 = vmatprep.mubr.f32.mxu0 0.0
        %3760 = vmatmul.mubr.f32.gmra.mrb[0].mxu0 %v3558
        %v3761 = vpop.f32.mrb[0].mxu0
        %v3762 = vadd.f32 %v3441, %v3761
        %v3763 = vpop.f32.mrb[0].mxu0
        %3764 = vmatprep.mubr.f32.mxu0 0.0
        %3765 = vmatmul.mubr.f32.gmra.mrb[0].mxu0 %v3561
        %v3766 = vpop.f32.mrb[0].mxu0
        %v3767 = vadd.f32 %v3446, %v3766
        %v3768 = vpop.f32.mrb[0].mxu0
        %3769 = vmatprep.mubr.f32.mxu0 0.0
        %3770 = vmatmul.mubr.f32.gmra.mrb[0].mxu0 %v3564
        %v3771 = vpop.f32.mrb[0].mxu0
        %v3772 = vadd.f32 %v3451, %v3771
        %v3773 = vpop.f32.mrb[0].mxu0
        %3774 = vmatprep.mubr.f32.mxu0 0.0
        %3775 = vmatmul.mubr.f32.gmra.mrb[0].mxu0 %v3567
        %v3776 = vpop.f32.mrb[0].mxu0
        %v3777 = vadd.f32 %v3456, %v3776
        %v3778 = vpop.f32.mrb[0].mxu0
        %3779 = vmatprep.mubr.f32.mxu0 0.0
        %3780 = vmatmul.mubr.f32.gmra.mrb[0].mxu0 %v3570
        %v3781 = vpop.f32.mrb[0].mxu0
        %v3782 = vadd.f32 %v3461, %v3781
        %v3783 = vpop.f32.mrb[0].mxu0
        %3784 = vmatprep.mubr.f32.mxu0 0.0
        %3785 = vmatmul.mubr.f32.gmra.mrb[0].mxu0 %v3573
        %v3786 = vpop.f32.mrb[0].mxu0
        %v3787 = vadd.f32 %v3466, %v3786
        %v3788 = vpop.f32.mrb[0].mxu0
        %3789 = vmatprep.mubr.f32.mxu0 0.0
        %3790 = vmatmul.mubr.f32.gmra.mrb[0].mxu0 %v3576
        %v3791 = vpop.f32.mrb[0].mxu0
        %v3792 = vadd.f32 %v3471, %v3791
        %v3793 = vpop.f32.mrb[0].mxu0
        %3794 = vmatprep.mubr.f32.mxu0 0.0
        %3795 = vmatmul.mubr.f32.gmra.mrb[0].mxu0 %v3579
        %v3796 = vpop.f32.mrb[0].mxu0
        %v3797 = vadd.f32 %v3476, %v3796
        %v3798 = vpop.f32.mrb[0].mxu0
        %3799 = vmatprep.mubr.f32.mxu0 0.0
        %3800 = vmatmul.mubr.f32.gmra.mrb[0].mxu0 %v3582
        %v3801 = vpop.f32.mrb[0].mxu0
        %v3802 = vadd.f32 %v3481, %v3801
        %v3803 = vpop.f32.mrb[0].mxu0
        %3804 = vmatprep.mubr.f32.mxu0 0.0
        %3805 = vmatmul.mubr.f32.gmra.mrb[0].mxu0 %v3585
        %v3806 = vpop.f32.mrb[0].mxu0
        %v3807 = vadd.f32 %v3486, %v3806
        %v3808 = vpop.f32.mrb[0].mxu0
        %3809 = vmatprep.mubr.f32.mxu0 0.0
        %3810 = vmatmul.mubr.f32.gmra.mrb[0].mxu0 %v3588
        %v3811 = vpop.f32.mrb[0].mxu0
        %v3812 = vadd.f32 %v3491, %v3811
        %v3813 = vpop.f32.mrb[0].mxu0
        %3814 = vdwg.mxu0
        %v3815 = vld [vmem:[#allocation13] sm:$0x1]
        %v3817 = vlaneseq
        %v3818 = vshrl.u32 %v3817, 7
        %v3819 = vsub.s32 0, %v3818
        %v3820 = vrot.slane %v3815, %v3819
        %v3822 = vadd.f32 %v3657, %v3820
        %v3823 = vadd.f32 %v3662, %v3820
        %v3824 = vadd.f32 %v3667, %v3820
        %v3825 = vadd.f32 %v3672, %v3820
        %v3826 = vadd.f32 %v3677, %v3820
        %v3827 = vadd.f32 %v3682, %v3820
        %v3828 = vadd.f32 %v3687, %v3820
        %v3829 = vadd.f32 %v3692, %v3820
        %v3830 = vadd.f32 %v3697, %v3820
        %v3831 = vadd.f32 %v3702, %v3820
        %v3832 = vadd.f32 %v3707, %v3820
        %v3833 = vadd.f32 %v3712, %v3820
        %v3834 = vadd.f32 %v3717, %v3820
        %v3835 = vadd.f32 %v3722, %v3820
        %v3836 = vadd.f32 %v3727, %v3820
        %v3837 = vadd.f32 %v3732, %v3820
        %v3838 = vadd.f32 %v3737, %v3820
        %v3839 = vadd.f32 %v3742, %v3820
        %v3840 = vadd.f32 %v3747, %v3820
        %v3841 = vadd.f32 %v3752, %v3820
        %v3842 = vadd.f32 %v3757, %v3820
        %v3843 = vadd.f32 %v3762, %v3820
        %v3844 = vadd.f32 %v3767, %v3820
        %v3845 = vadd.f32 %v3772, %v3820
        %v3846 = vadd.f32 %v3777, %v3820
        %v3847 = vadd.f32 %v3782, %v3820
        %v3848 = vadd.f32 %v3787, %v3820
        %v3849 = vadd.f32 %v3792, %v3820
        %v3850 = vadd.f32 %v3797, %v3820
        %v3851 = vadd.f32 %v3802, %v3820
        %v3852 = vadd.f32 %v3807, %v3820
        %v3853 = vadd.f32 %v3812, %v3820
        %v3854 = vmax.f32 %v3822, 0.0
        %v3855 = vmax.f32 %v3823, 0.0
        %v3856 = vmax.f32 %v3824, 0.0
        %v3857 = vmax.f32 %v3825, 0.0
        %v3858 = vmax.f32 %v3826, 0.0
        %v3859 = vmax.f32 %v3827, 0.0
        %v3860 = vmax.f32 %v3828, 0.0
        %v3861 = vmax.f32 %v3829, 0.0
        %v3862 = vmax.f32 %v3830, 0.0
        %v3863 = vmax.f32 %v3831, 0.0
        %v3864 = vmax.f32 %v3832, 0.0
        %v3865 = vmax.f32 %v3833, 0.0
        %v3866 = vmax.f32 %v3834, 0.0
        %v3867 = vmax.f32 %v3835, 0.0
        %v3868 = vmax.f32 %v3836, 0.0
        %v3869 = vmax.f32 %v3837, 0.0
        %v3870 = vmax.f32 %v3838, 0.0
        %v3871 = vmax.f32 %v3839, 0.0
        %v3872 = vmax.f32 %v3840, 0.0
        %v3873 = vmax.f32 %v3841, 0.0
        %v3874 = vmax.f32 %v3842, 0.0
        %v3875 = vmax.f32 %v3843, 0.0
        %v3876 = vmax.f32 %v3844, 0.0
        %v3877 = vmax.f32 %v3845, 0.0
        %v3878 = vmax.f32 %v3846, 0.0
        %v3879 = vmax.f32 %v3847, 0.0
        %v3880 = vmax.f32 %v3848, 0.0
        %v3881 = vmax.f32 %v3849, 0.0
        %v3882 = vmax.f32 %v3850, 0.0
        %v3883 = vmax.f32 %v3851, 0.0
        %v3884 = vmax.f32 %v3852, 0.0
        %v3885 = vmax.f32 %v3853, 0.0
        %3886 = vst.msk [vmem:[%s516] sm:$0xff] %vm1586, %v3854
        %3887 = vst.msk [vmem:[%s516 + $0x8] sm:$0xff] %vm1586, %v3855
        %3888 = vst.msk [vmem:[%s516 + $0x10] sm:$0xff] %vm1586, %v3856
        %3889 = vst.msk [vmem:[%s516 + $0x18] sm:$0xff] %vm1586, %v3857
        %3890 = vst.msk [vmem:[%s516 + $0x20] sm:$0xff] %vm1586, %v3858
        %3891 = vst.msk [vmem:[%s516 + $0x28] sm:$0xff] %vm1586, %v3859
        %3892 = vst.msk [vmem:[%s516 + $0x30] sm:$0xff] %vm1586, %v3860
        %3893 = vst.msk [vmem:[%s516 + $0x38] sm:$0xff] %vm1586, %v3861
        %3894 = vst.msk [vmem:[%s516 + $0x40] sm:$0xff] %vm1586, %v3862
        %3895 = vst.msk [vmem:[%s516 + $0x48] sm:$0xff] %vm1586, %v3863
        %3896 = vst.msk [vmem:[%s516 + $0x50] sm:$0xff] %vm1586, %v3864
        %3897 = vst.msk [vmem:[%s516 + $0x58] sm:$0xff] %vm1586, %v3865
        %3898 = vst.msk [vmem:[%s516 + $0x60] sm:$0xff] %vm1586, %v3866
        %3899 = vst.msk [vmem:[%s516 + $0x68] sm:$0xff] %vm1586, %v3867
        %3900 = vst.msk [vmem:[%s516 + $0x70] sm:$0xff] %vm1586, %v3868
        %3901 = vst.msk [vmem:[%s516 + $0x78] sm:$0xff] %vm1586, %v3869
        %3902 = vst.msk [vmem:[%s516 + $0x80] sm:$0xff] %vm1586, %v3870
        %3903 = vst.msk [vmem:[%s516 + $0x88] sm:$0xff] %vm1586, %v3871
        %3904 = vst.msk [vmem:[%s516 + $0x90] sm:$0xff] %vm1586, %v3872
        %3905 = vst.msk [vmem:[%s516 + $0x98] sm:$0xff] %vm1586, %v3873
        %3906 = vst.msk [vmem:[%s516 + $0xa0] sm:$0xff] %vm1586, %v3874
        %3907 = vst.msk [vmem:[%s516 + $0xa8] sm:$0xff] %vm1586, %v3875
        %3908 = vst.msk [vmem:[%s516 + $0xb0] sm:$0xff] %vm1586, %v3876
        %3909 = vst.msk [vmem:[%s516 + $0xb8] sm:$0xff] %vm1586, %v3877
        %3910 = vst.msk [vmem:[%s516 + $0xc0] sm:$0xff] %vm1586, %v3878
        %3911 = vst.msk [vmem:[%s516 + $0xc8] sm:$0xff] %vm1586, %v3879
        %3912 = vst.msk [vmem:[%s516 + $0xd0] sm:$0xff] %vm1586, %v3880
        %3913 = vst.msk [vmem:[%s516 + $0xd8] sm:$0xff] %vm1586, %v3881
        %3914 = vst.msk [vmem:[%s516 + $0xe0] sm:$0xff] %vm1586, %v3882
        %3915 = vst.msk [vmem:[%s516 + $0xe8] sm:$0xff] %vm1586, %v3883
        %3916 = vst.msk [vmem:[%s516 + $0xf0] sm:$0xff] %vm1586, %v3884
        %3917 = vst.msk [vmem:[%s516 + $0xf8] sm:$0xff] %vm1586, %v3885
        %s3918 = sand.u32 %s236, 1
        %s3919 = scalar_lea.sflag [#allocation4], %s3918
        %s3920 = sand.u32 %s236, 1
        %s3921 = smul.addr %s3920, 256
        %s3922 = scalar_lea.vmem [#allocation14], %s3921
        // Predicated region
        $region77: #{up_forward.3} parent=47 // pred_check
          %p3923 = pneg %p246
        $region78: #{up_forward.3} parent=47 // pred_check_branch
          %3925 = sbr.rel (%p3923) target = $region80
        $region79: #{up_forward.3} parent=47 // pred_region
          %s3926 = smul.u32 32, %s36
          %s3928 = ssub.s32 4096, 4096
          %3929 = vsyncadd %s3919, %s3928
          %s3930 = smul.addr %s35, 128
          %s3931 = sadd.s32 %s3926, %s3930
          %s3932 = smul.addr %s3931, 128
          %s3933 = scalar_lea.hbm %s7, %s3932
          %s3934 = sshll.u32 %s3922, 4
          %s3935 = int_to_ptr.vmem [resolvable:$true] %s3934
          %3940 = dma.vmem_to_hbm [thread:$0]  %s3935, 4096, %s3933, %s3919, 128, 128, 8
        $region80: #{up_forward.3} parent=47 // pred_fallthru
          _
      $region48: #{up_forward.3} parent=5 // pred_fallthru
        _
      %p3941 = scmp.le.s32.totalorder 2, %s26
      // Predicated region
      $region81: #{up_forward.3} parent=5 // pred_check
        %p3942 = pneg %p3941
      $region82: #{up_forward.3} parent=5 // pred_check_branch
        %3944 = sbr.rel (%p3942) target = $region84
      $region83: #{up_forward.3} parent=5 // pred_region
        %s3945 = ssub.s32 %s26, 2
        // Predicated region
        $region85: #{up_forward.3} parent=83 // pred_check
          %p3946 = pneg %p252
        $region86: #{up_forward.3} parent=83 // pred_check_branch
          %3948 = sbr.rel (%p3946) target = $region88
        $region87: #{up_forward.3} parent=83 // pred_region
          %s3949 = sand.u32 %s237, 1
          %s3950 = scalar_lea.sflag [#allocation4], %s3949
          %s3951 = sand.u32 %s237, 1
          %s3952 = smul.addr %s3951, 256
          %s3953 = scalar_lea.vmem [#allocation14], %s3952
          %3954 = dma.done %s3950, 4096
        $region88: #{up_forward.3} parent=83 // pred_fallthru
          _
      $region84: #{up_forward.3} parent=5 // pred_fallthru
        _
    $region6: #{up_forward.3} parent=1 // loop_footer
      %s30 = sadd.s32 1, %s26
    $region7: #{up_forward.3} parent=1 // loop_footer_branch
      %25 = sbr.rel target = $region3
    $region8: #{up_forward.3} parent=1 // loop_exit
      _
    %3955 = vsyncpa [#allocation3], 1
    %s3956 = scalar_lea.sflag [#allocation3], 1
    %3957 = vsyncpa %s3956, 1
    %3958 = vsyncpa [#allocation6], 1
    %s3959 = scalar_lea.sflag [#allocation6], 1
    %3960 = vsyncpa %s3959, 1
    %3961 = vsyncpa [#allocation9], 1
    %s3962 = scalar_lea.sflag [#allocation9], 1
    %3963 = vsyncpa %s3962, 1
    %3964 = vsyncpa [#allocation12], 1
    %3965 = vsyncpa [#allocation4], 1
    %s3966 = scalar_lea.sflag [#allocation4], 1
    %3967 = vsyncpa %s3966, 1

</llo_original>
